<compile_context>
chip_gen: v6e
topology: v6e:2x2x1
jax: 0.10.0
libtpu: 0.0.40
codegen_flags: <defaults>
</compile_context>

<pallas_src>
import jax
import jax.numpy as jnp
from jax.experimental import pallas as pl
from jax.experimental.pallas import tpu as pltpu

MASK_ID = 50264          # from the PyTorch forward: input_x == 50264
PAD_ID = 1               # from the PyTorch forward: input_x != 1

VOCAB = 50265            # RoBERTa vocab size (so MASK_ID is a valid id)
HIDDEN = 32
NUM_HEADS = 4
HEAD_DIM = HIDDEN // NUM_HEADS
FFN = 64
NUM_LAYERS = 2
SEQ = 8
BATCH = 2
LN_EPS = 1e-5

MAX_MASKS = 8                          # static upper bound on #<mask> tokens
TV = 2048                              # vocab tile width (multiple of 128)
V_PAD = -(-VOCAB // TV) * TV           # 51200: padded, lane-dense vocab


def _layer_norm(x, gamma, beta):
  mu = jnp.mean(x, axis=-1, keepdims=True)
  var = jnp.mean((x - mu) ** 2, axis=-1, keepdims=True)
  return (x - mu) * jax.lax.rsqrt(var + LN_EPS) * gamma + beta


# ---------------------------------------------------------------------------
# Pallas kernel 1: fused 2-layer encoder + MLM dense/gelu/LayerNorm.
# Hidden state never leaves the chip between layers.
# ---------------------------------------------------------------------------
def fused_encoder_kernel(h_ref, bias_ref, wqkv_ref, bqkv_ref, wo_ref,
                         vech_ref, vecf_ref, w1_ref, w2_ref,
                         wd_ref, headvec_ref, out_ref):
  x = h_ref[...]                       # (B*S, H) f32
  bias = bias_ref[...]                 # (B*S, B*S) f32 block-diag + pad mask
  scale = 1.0 / (HEAD_DIM ** 0.5)

  for l in range(NUM_LAYERS):          # static unroll over layers
    # Fused QKV projection: bf16 MXU operands, f32 accumulation.
    qkv = jnp.dot(x.astype(jnp.bfloat16), wqkv_ref[l],
                  preferred_element_type=jnp.float32) + bqkv_ref[l]
    q = qkv[:, 0 * HIDDEN:1 * HIDDEN]
    k = qkv[:, 1 * HIDDEN:2 * HIDDEN]
    v = qkv[:, 2 * HIDDEN:3 * HIDDEN]

    wo_l = wo_ref[l]                   # (H, H) f32
    vech = vech_ref[l]                 # (6, H) f32: bo, g1, b1, bf2, g2, b2
    attn = jnp.zeros_like(x)
    for hh in range(NUM_HEADS):        # static unroll over heads
      sl = slice(hh * HEAD_DIM, (hh + 1) * HEAD_DIM)
      qs, ks, vs = q[:, sl], k[:, sl], v[:, sl]
      sc = jnp.einsum('qd,kd->qk', qs, ks,
                      preferred_element_type=jnp.float32) * scale + bias
      sc = sc - jnp.max(sc, axis=-1, keepdims=True)
      p = jnp.exp(sc)
      p = p * pl.reciprocal(jnp.sum(p, axis=-1, keepdims=True), approx=True)
      ho = jnp.dot(p, vs, preferred_element_type=jnp.float32)     # (B*S, HD)
      # Fold output projection per head (ctx @ Wo == sum_h ho_h @ Wo[h]);
      # avoids the lane-axis concatenate over heads.
      attn = attn + jnp.dot(ho, wo_l[sl, :],
                            preferred_element_type=jnp.float32)
    attn = attn + vech[0:1, :]                                     # bo
    y = _layer_norm(x + attn, vech[1:2, :], vech[2:3, :])          # LN1

    ff = jnp.dot(y.astype(jnp.bfloat16), w1_ref[l],
                 preferred_element_type=jnp.float32) + vecf_ref[l]
    ff = jax.nn.gelu(ff, approximate=True)
    ff = jnp.dot(ff.astype(jnp.bfloat16), w2_ref[l],
                 preferred_element_type=jnp.float32) + vech[3:4, :]
    x = _layer_norm(y + ff, vech[4:5, :], vech[5:6, :])            # LN2

  # MLM head: dense -> gelu -> LayerNorm.  The vocab projection runs in a
  # separate vocab-tiled kernel on the gathered <mask> rows only.
  hv = headvec_ref[...]                # (3, H): dense bias, LN gamma, LN beta
  hd = jnp.dot(x.astype(jnp.bfloat16), wd_ref[...],
               preferred_element_type=jnp.float32) + hv[0:1, :]
  hd = jax.nn.gelu(hd, approximate=True)
  out_ref[...] = _layer_norm(hd, hv[1:2, :], hv[2:3, :]).astype(out_ref.dtype)


def _full_spec(arr):
  # Whole-array block, same block every grid step.
  return pl.BlockSpec(arr.shape, lambda b, _n=arr.ndim: (0,) * _n)


def fused_encoder(h, attn_bias, params):
  n_tok = h.shape[0]
  ops = [h, attn_bias,
         params['wqkv'], params['bqkv'], params['wo'],
         params['vech'], params['vecf'], params['w1'], params['w2'],
         params['wd'], params['headvec']]
  return pl.pallas_call(
      fused_encoder_kernel,
      out_shape=jax.ShapeDtypeStruct((n_tok, HIDDEN), jnp.float32),
      grid_spec=pltpu.PrefetchScalarGridSpec(
          num_scalar_prefetch=0,
          grid=(1,),
          in_specs=[_full_spec(o) for o in ops],
          out_specs=pl.BlockSpec((n_tok, HIDDEN), lambda b: (0, 0)),
      ),
      compiler_params=pltpu.CompilerParams(
          dimension_semantics=("arbitrary",)),
  )(*ops)


# ---------------------------------------------------------------------------
# Pallas kernel 2: vocab projection, tiled over the padded vocab axis.
# Only the gathered <mask> rows are projected (MAX_MASKS x H input).
# ---------------------------------------------------------------------------
def vocab_proj_kernel(hm_ref, wdec_ref, bdec_ref, out_ref):
  x = hm_ref[...].astype(jnp.bfloat16)           # (MAX_MASKS, H)
  out_ref[...] = (jnp.dot(x, wdec_ref[...],
                          preferred_element_type=jnp.float32)
                  + bdec_ref[...]).astype(out_ref.dtype)


def vocab_projection(hm, wdec, bdec):
  m, h = hm.shape
  v_pad = wdec.shape[1]
  n_tiles = v_pad // TV
  return pl.pallas_call(
      vocab_proj_kernel,
      out_shape=jax.ShapeDtypeStruct((m, v_pad), jnp.float32),
      grid_spec=pltpu.PrefetchScalarGridSpec(
          num_scalar_prefetch=0,
          grid=(n_tiles,),
          in_specs=[pl.BlockSpec((m, h), lambda j: (0, 0)),      # resident
                    pl.BlockSpec((h, TV), lambda j: (0, j)),     # bf16 weight
                    pl.BlockSpec((1, TV), lambda j: (0, j))],
          out_specs=pl.BlockSpec((m, TV), lambda j: (0, j)),     # lane-dense
      ),
      compiler_params=pltpu.CompilerParams(
          dimension_semantics=("parallel",)),   # shards across v7x's 2 TCs
  )(hm, wdec, bdec)


# ---------------------------------------------------------------------------
# Deterministic synthetic parameters (stands in for the pretrained checkpoint).
# ---------------------------------------------------------------------------
def init_params(key):
  keys = iter(jax.random.split(key, 64))

  def nrm(shape):
    return 0.02 * jax.random.normal(next(keys), shape, dtype=jnp.float32)

  tok_emb = nrm((VOCAB, HIDDEN))
  pos_emb = nrm((SEQ, HIDDEN))
  emb_ln_g = jnp.ones((HIDDEN,), jnp.float32)
  emb_ln_b = jnp.zeros((HIDDEN,), jnp.float32)

  wqkv, bqkv, wo, w1, w2, vech, vecf = [], [], [], [], [], [], []
  for _ in range(NUM_LAYERS):
    wqkv.append(jnp.concatenate(
        [nrm((HIDDEN, HIDDEN)) for _ in range(3)], axis=1))        # (H, 3H)
    bqkv.append(jnp.zeros((1, 3 * HIDDEN), jnp.float32))
    wo.append(nrm((HIDDEN, HIDDEN)))
    w1.append(nrm((HIDDEN, FFN)))
    w2.append(nrm((FFN, HIDDEN)))
    vech.append(jnp.stack([                                        # (6, H)
        jnp.zeros((HIDDEN,), jnp.float32),   # attn output bias
        jnp.ones((HIDDEN,), jnp.float32),    # LN1 gamma
        jnp.zeros((HIDDEN,), jnp.float32),   # LN1 beta
        jnp.zeros((HIDDEN,), jnp.float32),   # FFN output bias
        jnp.ones((HIDDEN,), jnp.float32),    # LN2 gamma
        jnp.zeros((HIDDEN,), jnp.float32),   # LN2 beta
    ]))
    vecf.append(jnp.zeros((1, FFN), jnp.float32))                  # FFN bias1

  wd = nrm((HIDDEN, HIDDEN))                                       # MLM dense
  headvec = jnp.stack([                                            # (3, H)
      jnp.zeros((HIDDEN,), jnp.float32),     # dense bias
      jnp.ones((HIDDEN,), jnp.float32),      # head LN gamma
      jnp.zeros((HIDDEN,), jnp.float32),     # head LN beta
  ])

  # Tied decoder weight, padded to a lane-dense multiple of TV, stored bf16.
  wdec = jnp.zeros((HIDDEN, V_PAD), jnp.float32).at[:, :VOCAB].set(tok_emb.T)
  bdec = jnp.zeros((1, V_PAD), jnp.float32)

  return dict(
      tok_emb=tok_emb, pos_emb=pos_emb,
      emb_ln_g=emb_ln_g, emb_ln_b=emb_ln_b,
      wqkv=jnp.stack(wqkv).astype(jnp.bfloat16),   # (L, H, 3H)
      bqkv=jnp.stack(bqkv),                        # (L, 1, 3H) f32
      wo=jnp.stack(wo),                            # (L, H, H)  f32 (sliced/head)
      vech=jnp.stack(vech),                        # (L, 6, H)  f32
      vecf=jnp.stack(vecf),                        # (L, 1, FFN) f32
      w1=jnp.stack(w1).astype(jnp.bfloat16),       # (L, H, FFN)
      w2=jnp.stack(w2).astype(jnp.bfloat16),       # (L, FFN, H)
      wd=wd.astype(jnp.bfloat16),                  # (H, H)
      headvec=headvec,                             # (3, H) f32
      wdec=wdec.astype(jnp.bfloat16),              # (H, V_PAD) bf16
      bdec=bdec,                                   # (1, V_PAD) f32
  )


# ---------------------------------------------------------------------------
# Forward matching PromptMask.forward semantics.
# ---------------------------------------------------------------------------
def prompt_mask_forward(input_x, params):
  B, S = input_x.shape
  mask0 = input_x == MASK_ID                            # [B, S] bool

  # Embedding lookup (plain-JAX glue) + embedding LayerNorm.
  tok = jnp.take(params['tok_emb'], input_x, axis=0)    # [B, S, H]
  pos = params['pos_emb'][None, :S, :]
  h = _layer_norm(tok + pos, params['emb_ln_g'], params['emb_ln_b'])
  h = h.reshape(B * S, HIDDEN).astype(jnp.float32)

  # Per-batch attention over the flattened (B*S) token axis, expressed as a
  # block-diagonal additive bias combined with the key-padding mask
  # (mask1 = input_x != 1 in the PyTorch module).
  tokens = input_x.reshape(-1)
  batch_ids = jnp.repeat(jnp.arange(B), S)
  same_batch = batch_ids[:, None] == batch_ids[None, :]
  key_ok = (tokens != PAD_ID)[None, :]
  attn_bias = jnp.where(same_batch & key_ok, 0.0, -1e9).astype(jnp.float32)

  # Fused encoder (2 layers) + MLM dense/gelu/LN: a single Pallas launch.
  hd = fused_encoder(h, attn_bias, params)              # [B*S, H]

  # Dynamic-shape boolean index (x = x[mask0]): done eagerly like PyTorch,
  # then padded to a static MAX_MASKS so only <mask> rows hit the vocab
  # projection (avoids computing/writing the full [B, S, V] logits).
  flat_idx = jnp.nonzero(mask0.reshape(-1))[0]
  n_masks = int(flat_idx.shape[0])
  assert n_masks <= MAX_MASKS, n_masks
  idx_pad = jnp.zeros((MAX_MASKS,), jnp.int32).at[:n_masks].set(
      flat_idx.astype(jnp.int32))
  hm = hd[idx_pad]                                      # [MAX_MASKS, H]

  logits = vocab_projection(hm, params['wdec'], params['bdec'])
  return logits[:n_masks, :VOCAB]                       # [n_masks, V]


if __name__ == "__main__":
  params = init_params(jax.random.PRNGKey(0))

  # Deterministic example input (ids [B, S]), with <mask> and pad tokens.
  input_x = jax.random.randint(jax.random.PRNGKey(0), (BATCH, SEQ), 0, 1000,
                               dtype=jnp.int32)
  input_x = input_x.at[0, 3].set(MASK_ID)
  input_x = input_x.at[1, 5].set(MASK_ID)
  input_x = input_x.at[1, 6].set(PAD_ID)
  input_x = input_x.at[1, 7].set(PAD_ID)

  x = prompt_mask_forward(input_x, params)
  jax.block_until_ready(x)

  assert x.shape == (2, VOCAB), x.shape
  assert bool(jnp.all(jnp.isfinite(x)))
  print("KERNEL_OK")
</pallas_src>

<mosaic_0001>
module attributes {stable_mosaic.version = 11 : i64} {
  func.func @fused_encoder_kernel(%arg0: i32, %arg1: memref<16x32xf32, #tpu.memory_space<vmem>>, %arg2: memref<16x16xf32, #tpu.memory_space<vmem>>, %arg3: memref<2x32x96xbf16, #tpu.memory_space<vmem>>, %arg4: memref<2x1x96xf32, #tpu.memory_space<vmem>>, %arg5: memref<2x32x32xf32, #tpu.memory_space<vmem>>, %arg6: memref<2x6x32xf32, #tpu.memory_space<vmem>>, %arg7: memref<2x1x64xf32, #tpu.memory_space<vmem>>, %arg8: memref<2x32x64xbf16, #tpu.memory_space<vmem>>, %arg9: memref<2x64x32xbf16, #tpu.memory_space<vmem>>, %arg10: memref<32x32xbf16, #tpu.memory_space<vmem>>, %arg11: memref<3x32xf32, #tpu.memory_space<vmem>>, %arg12: memref<16x32xf32, #tpu.memory_space<vmem>>) attributes {dimension_semantics = [#tpu.dimension_semantics<arbitrary>], iteration_bounds = array<i64: 1>, scalar_prefetch = 0 : i64, scratch_operands = 0 : i64, tpu.core_type = #tpu.core_type<tc>, window_params = [{pipeline_mode = #tpu.pipeline_mode<synchronous>, transform_indices = @transform_0, window_bounds = array<i64: 16, 32>}, {pipeline_mode = #tpu.pipeline_mode<synchronous>, transform_indices = @transform_1, window_bounds = array<i64: 16, 16>}, {pipeline_mode = #tpu.pipeline_mode<synchronous>, transform_indices = @transform_2, window_bounds = array<i64: 2, 32, 96>}, {pipeline_mode = #tpu.pipeline_mode<synchronous>, transform_indices = @transform_3, window_bounds = array<i64: 2, 1, 96>}, {pipeline_mode = #tpu.pipeline_mode<synchronous>, transform_indices = @transform_4, window_bounds = array<i64: 2, 32, 32>}, {pipeline_mode = #tpu.pipeline_mode<synchronous>, transform_indices = @transform_5, window_bounds = array<i64: 2, 6, 32>}, {pipeline_mode = #tpu.pipeline_mode<synchronous>, transform_indices = @transform_6, window_bounds = array<i64: 2, 1, 64>}, {pipeline_mode = #tpu.pipeline_mode<synchronous>, transform_indices = @transform_7, window_bounds = array<i64: 2, 32, 64>}, {pipeline_mode = #tpu.pipeline_mode<synchronous>, transform_indices = @transform_8, window_bounds = array<i64: 2, 64, 32>}, {pipeline_mode = #tpu.pipeline_mode<synchronous>, transform_indices = @transform_9, window_bounds = array<i64: 32, 32>}, {pipeline_mode = #tpu.pipeline_mode<synchronous>, transform_indices = @transform_10, window_bounds = array<i64: 3, 32>}, {pipeline_mode = #tpu.pipeline_mode<synchronous>, transform_indices = @transform_11, window_bounds = array<i64: 16, 32>}]} {
    %c0 = arith.constant 0 : index
    %c0_0 = arith.constant 0 : index
    %0 = vector.load %arg1[%c0, %c0_0] : memref<16x32xf32, #tpu.memory_space<vmem>>, vector<16x32xf32>
    %c0_1 = arith.constant 0 : index
    %c0_2 = arith.constant 0 : index
    %1 = vector.load %arg2[%c0_1, %c0_2] : memref<16x16xf32, #tpu.memory_space<vmem>>, vector<16x16xf32>
    %2 = arith.truncf %0 : vector<16x32xf32> to vector<16x32xbf16>
    %c0_3 = arith.constant 0 : index
    %c0_4 = arith.constant 0 : index
    %c0_5 = arith.constant 0 : index
    %3 = vector.load %arg3[%c0_3, %c0_4, %c0_5] : memref<2x32x96xbf16, #tpu.memory_space<vmem>>, vector<1x32x96xbf16>
    %4 = vector.shape_cast %3 : vector<1x32x96xbf16> to vector<32x96xbf16>
    %cst = arith.constant dense<0.000000e+00> : vector<16x96xf32>
    %5 = tpu.matmul %2, %4, %cst {dimension_numbers = #tpu.dot_dimension_numbers<[1], [0], [0], [1], [0, 0, 1, 1], [], []>} : vector<16x32xbf16>, vector<32x96xbf16>, vector<16x96xf32> -> vector<16x96xf32>
    %c0_6 = arith.constant 0 : index
    %c0_7 = arith.constant 0 : index
    %c0_8 = arith.constant 0 : index
    %6 = vector.load %arg4[%c0_6, %c0_7, %c0_8] : memref<2x1x96xf32, #tpu.memory_space<vmem>>, vector<1x1x96xf32>
    %7 = vector.shape_cast %6 : vector<1x1x96xf32> to vector<1x96xf32>
    %8 = vector.broadcast %7 : vector<1x96xf32> to vector<16x96xf32>
    %9 = arith.addf %5, %8 : vector<16x96xf32>
    %10 = vector.extract_strided_slice %9 {offsets = [0, 0], sizes = [16, 32], strides = [1, 1]} : vector<16x96xf32> to vector<16x32xf32>
    %11 = vector.extract_strided_slice %9 {offsets = [0, 32], sizes = [16, 32], strides = [1, 1]} : vector<16x96xf32> to vector<16x32xf32>
    %12 = vector.extract_strided_slice %9 {offsets = [0, 64], sizes = [16, 32], strides = [1, 1]} : vector<16x96xf32> to vector<16x32xf32>
    %c0_9 = arith.constant 0 : index
    %c0_10 = arith.constant 0 : index
    %c0_11 = arith.constant 0 : index
    %13 = vector.load %arg5[%c0_9, %c0_10, %c0_11] : memref<2x32x32xf32, #tpu.memory_space<vmem>>, vector<1x32x32xf32>
    %14 = vector.shape_cast %13 : vector<1x32x32xf32> to vector<32x32xf32>
    %c0_12 = arith.constant 0 : index
    %c0_13 = arith.constant 0 : index
    %c0_14 = arith.constant 0 : index
    %15 = vector.load %arg6[%c0_12, %c0_13, %c0_14] : memref<2x6x32xf32, #tpu.memory_space<vmem>>, vector<1x6x32xf32>
    %16 = vector.shape_cast %15 : vector<1x6x32xf32> to vector<6x32xf32>
    %cst_15 = arith.constant 0.000000e+00 : f32
    %17 = vector.broadcast %cst_15 : f32 to vector<16x32xf32>
    %18 = vector.extract_strided_slice %10 {offsets = [0, 0], sizes = [16, 8], strides = [1, 1]} : vector<16x32xf32> to vector<16x8xf32>
    %19 = vector.extract_strided_slice %11 {offsets = [0, 0], sizes = [16, 8], strides = [1, 1]} : vector<16x32xf32> to vector<16x8xf32>
    %20 = vector.extract_strided_slice %12 {offsets = [0, 0], sizes = [16, 8], strides = [1, 1]} : vector<16x32xf32> to vector<16x8xf32>
    "tpu.trace_start"() <{level = 10 : i32, message = "qd,kd->qk"}> : () -> ()
    %cst_16 = arith.constant dense<0.000000e+00> : vector<16x16xf32>
    %21 = tpu.matmul %18, %19, %cst_16 {dimension_numbers = #tpu.dot_dimension_numbers<[1], [1], [0], [0], [0, 0, 1, 0], [], []>} : vector<16x8xf32>, vector<16x8xf32>, vector<16x16xf32> -> vector<16x16xf32>
    "tpu.trace_stop"() : () -> ()
    %cst_17 = arith.constant 0.353553385 : f32
    %22 = vector.broadcast %cst_17 : f32 to vector<16x16xf32>
    %23 = arith.mulf %21, %22 : vector<16x16xf32>
    %24 = arith.addf %23, %1 : vector<16x16xf32>
    %cst_18 = arith.constant dense<0xFF800000> : vector<16xf32>
    %25 = vector.multi_reduction <maximumf>, %24, %cst_18 [1] : vector<16x16xf32> to vector<16xf32>
    %26 = vector.shape_cast %25 : vector<16xf32> to vector<16x1xf32>
    %27 = vector.broadcast %26 : vector<16x1xf32> to vector<16x16xf32>
    %28 = arith.subf %24, %27 : vector<16x16xf32>
    %29 = math.exp %28 : vector<16x16xf32>
    %cst_19 = arith.constant dense<0.000000e+00> : vector<16xf32>
    %30 = vector.multi_reduction <add>, %29, %cst_19 [1] : vector<16x16xf32> to vector<16xf32>
    %31 = vector.shape_cast %30 : vector<16xf32> to vector<16x1xf32>
    %32 = tpu.reciprocal %31 {approx = true} : vector<16x1xf32> -> vector<16x1xf32>
    %33 = vector.broadcast %32 : vector<16x1xf32> to vector<16x16xf32>
    %34 = arith.mulf %29, %33 : vector<16x16xf32>
    %cst_20 = arith.constant dense<0.000000e+00> : vector<16x8xf32>
    %35 = tpu.matmul %34, %20, %cst_20 {dimension_numbers = #tpu.dot_dimension_numbers<[1], [0], [0], [1], [0, 0, 1, 1], [], []>} : vector<16x16xf32>, vector<16x8xf32>, vector<16x8xf32> -> vector<16x8xf32>
    %36 = vector.extract_strided_slice %14 {offsets = [0, 0], sizes = [8, 32], strides = [1, 1]} : vector<32x32xf32> to vector<8x32xf32>
    %cst_21 = arith.constant dense<0.000000e+00> : vector<16x32xf32>
    %37 = tpu.matmul %35, %36, %cst_21 {dimension_numbers = #tpu.dot_dimension_numbers<[1], [0], [0], [1], [0, 0, 1, 1], [], []>} : vector<16x8xf32>, vector<8x32xf32>, vector<16x32xf32> -> vector<16x32xf32>
    %38 = arith.addf %17, %37 : vector<16x32xf32>
    %39 = vector.extract_strided_slice %10 {offsets = [0, 8], sizes = [16, 8], strides = [1, 1]} : vector<16x32xf32> to vector<16x8xf32>
    %40 = vector.extract_strided_slice %11 {offsets = [0, 8], sizes = [16, 8], strides = [1, 1]} : vector<16x32xf32> to vector<16x8xf32>
    %41 = vector.extract_strided_slice %12 {offsets = [0, 8], sizes = [16, 8], strides = [1, 1]} : vector<16x32xf32> to vector<16x8xf32>
    "tpu.trace_start"() <{level = 10 : i32, message = "qd,kd->qk"}> : () -> ()
    %cst_22 = arith.constant dense<0.000000e+00> : vector<16x16xf32>
    %42 = tpu.matmul %39, %40, %cst_22 {dimension_numbers = #tpu.dot_dimension_numbers<[1], [1], [0], [0], [0, 0, 1, 0], [], []>} : vector<16x8xf32>, vector<16x8xf32>, vector<16x16xf32> -> vector<16x16xf32>
    "tpu.trace_stop"() : () -> ()
    %cst_23 = arith.constant 0.353553385 : f32
    %43 = vector.broadcast %cst_23 : f32 to vector<16x16xf32>
    %44 = arith.mulf %42, %43 : vector<16x16xf32>
    %45 = arith.addf %44, %1 : vector<16x16xf32>
    %cst_24 = arith.constant dense<0xFF800000> : vector<16xf32>
    %46 = vector.multi_reduction <maximumf>, %45, %cst_24 [1] : vector<16x16xf32> to vector<16xf32>
    %47 = vector.shape_cast %46 : vector<16xf32> to vector<16x1xf32>
    %48 = vector.broadcast %47 : vector<16x1xf32> to vector<16x16xf32>
    %49 = arith.subf %45, %48 : vector<16x16xf32>
    %50 = math.exp %49 : vector<16x16xf32>
    %cst_25 = arith.constant dense<0.000000e+00> : vector<16xf32>
    %51 = vector.multi_reduction <add>, %50, %cst_25 [1] : vector<16x16xf32> to vector<16xf32>
    %52 = vector.shape_cast %51 : vector<16xf32> to vector<16x1xf32>
    %53 = tpu.reciprocal %52 {approx = true} : vector<16x1xf32> -> vector<16x1xf32>
    %54 = vector.broadcast %53 : vector<16x1xf32> to vector<16x16xf32>
    %55 = arith.mulf %50, %54 : vector<16x16xf32>
    %cst_26 = arith.constant dense<0.000000e+00> : vector<16x8xf32>
    %56 = tpu.matmul %55, %41, %cst_26 {dimension_numbers = #tpu.dot_dimension_numbers<[1], [0], [0], [1], [0, 0, 1, 1], [], []>} : vector<16x16xf32>, vector<16x8xf32>, vector<16x8xf32> -> vector<16x8xf32>
    %57 = vector.extract_strided_slice %14 {offsets = [8, 0], sizes = [8, 32], strides = [1, 1]} : vector<32x32xf32> to vector<8x32xf32>
    %cst_27 = arith.constant dense<0.000000e+00> : vector<16x32xf32>
    %58 = tpu.matmul %56, %57, %cst_27 {dimension_numbers = #tpu.dot_dimension_numbers<[1], [0], [0], [1], [0, 0, 1, 1], [], []>} : vector<16x8xf32>, vector<8x32xf32>, vector<16x32xf32> -> vector<16x32xf32>
    %59 = arith.addf %38, %58 : vector<16x32xf32>
    %60 = vector.extract_strided_slice %10 {offsets = [0, 16], sizes = [16, 8], strides = [1, 1]} : vector<16x32xf32> to vector<16x8xf32>
    %61 = vector.extract_strided_slice %11 {offsets = [0, 16], sizes = [16, 8], strides = [1, 1]} : vector<16x32xf32> to vector<16x8xf32>
    %62 = vector.extract_strided_slice %12 {offsets = [0, 16], sizes = [16, 8], strides = [1, 1]} : vector<16x32xf32> to vector<16x8xf32>
    "tpu.trace_start"() <{level = 10 : i32, message = "qd,kd->qk"}> : () -> ()
    %cst_28 = arith.constant dense<0.000000e+00> : vector<16x16xf32>
    %63 = tpu.matmul %60, %61, %cst_28 {dimension_numbers = #tpu.dot_dimension_numbers<[1], [1], [0], [0], [0, 0, 1, 0], [], []>} : vector<16x8xf32>, vector<16x8xf32>, vector<16x16xf32> -> vector<16x16xf32>
    "tpu.trace_stop"() : () -> ()
    %cst_29 = arith.constant 0.353553385 : f32
    %64 = vector.broadcast %cst_29 : f32 to vector<16x16xf32>
    %65 = arith.mulf %63, %64 : vector<16x16xf32>
    %66 = arith.addf %65, %1 : vector<16x16xf32>
    %cst_30 = arith.constant dense<0xFF800000> : vector<16xf32>
    %67 = vector.multi_reduction <maximumf>, %66, %cst_30 [1] : vector<16x16xf32> to vector<16xf32>
    %68 = vector.shape_cast %67 : vector<16xf32> to vector<16x1xf32>
    %69 = vector.broadcast %68 : vector<16x1xf32> to vector<16x16xf32>
    %70 = arith.subf %66, %69 : vector<16x16xf32>
    %71 = math.exp %70 : vector<16x16xf32>
    %cst_31 = arith.constant dense<0.000000e+00> : vector<16xf32>
    %72 = vector.multi_reduction <add>, %71, %cst_31 [1] : vector<16x16xf32> to vector<16xf32>
    %73 = vector.shape_cast %72 : vector<16xf32> to vector<16x1xf32>
    %74 = tpu.reciprocal %73 {approx = true} : vector<16x1xf32> -> vector<16x1xf32>
    %75 = vector.broadcast %74 : vector<16x1xf32> to vector<16x16xf32>
    %76 = arith.mulf %71, %75 : vector<16x16xf32>
    %cst_32 = arith.constant dense<0.000000e+00> : vector<16x8xf32>
    %77 = tpu.matmul %76, %62, %cst_32 {dimension_numbers = #tpu.dot_dimension_numbers<[1], [0], [0], [1], [0, 0, 1, 1], [], []>} : vector<16x16xf32>, vector<16x8xf32>, vector<16x8xf32> -> vector<16x8xf32>
    %78 = vector.extract_strided_slice %14 {offsets = [16, 0], sizes = [8, 32], strides = [1, 1]} : vector<32x32xf32> to vector<8x32xf32>
    %cst_33 = arith.constant dense<0.000000e+00> : vector<16x32xf32>
    %79 = tpu.matmul %77, %78, %cst_33 {dimension_numbers = #tpu.dot_dimension_numbers<[1], [0], [0], [1], [0, 0, 1, 1], [], []>} : vector<16x8xf32>, vector<8x32xf32>, vector<16x32xf32> -> vector<16x32xf32>
    %80 = arith.addf %59, %79 : vector<16x32xf32>
    %81 = vector.extract_strided_slice %10 {offsets = [0, 24], sizes = [16, 8], strides = [1, 1]} : vector<16x32xf32> to vector<16x8xf32>
    %82 = vector.extract_strided_slice %11 {offsets = [0, 24], sizes = [16, 8], strides = [1, 1]} : vector<16x32xf32> to vector<16x8xf32>
    %83 = vector.extract_strided_slice %12 {offsets = [0, 24], sizes = [16, 8], strides = [1, 1]} : vector<16x32xf32> to vector<16x8xf32>
    "tpu.trace_start"() <{level = 10 : i32, message = "qd,kd->qk"}> : () -> ()
    %cst_34 = arith.constant dense<0.000000e+00> : vector<16x16xf32>
    %84 = tpu.matmul %81, %82, %cst_34 {dimension_numbers = #tpu.dot_dimension_numbers<[1], [1], [0], [0], [0, 0, 1, 0], [], []>} : vector<16x8xf32>, vector<16x8xf32>, vector<16x16xf32> -> vector<16x16xf32>
    "tpu.trace_stop"() : () -> ()
    %cst_35 = arith.constant 0.353553385 : f32
    %85 = vector.broadcast %cst_35 : f32 to vector<16x16xf32>
    %86 = arith.mulf %84, %85 : vector<16x16xf32>
    %87 = arith.addf %86, %1 : vector<16x16xf32>
    %cst_36 = arith.constant dense<0xFF800000> : vector<16xf32>
    %88 = vector.multi_reduction <maximumf>, %87, %cst_36 [1] : vector<16x16xf32> to vector<16xf32>
    %89 = vector.shape_cast %88 : vector<16xf32> to vector<16x1xf32>
    %90 = vector.broadcast %89 : vector<16x1xf32> to vector<16x16xf32>
    %91 = arith.subf %87, %90 : vector<16x16xf32>
    %92 = math.exp %91 : vector<16x16xf32>
    %cst_37 = arith.constant dense<0.000000e+00> : vector<16xf32>
    %93 = vector.multi_reduction <add>, %92, %cst_37 [1] : vector<16x16xf32> to vector<16xf32>
    %94 = vector.shape_cast %93 : vector<16xf32> to vector<16x1xf32>
    %95 = tpu.reciprocal %94 {approx = true} : vector<16x1xf32> -> vector<16x1xf32>
    %96 = vector.broadcast %95 : vector<16x1xf32> to vector<16x16xf32>
    %97 = arith.mulf %92, %96 : vector<16x16xf32>
    %cst_38 = arith.constant dense<0.000000e+00> : vector<16x8xf32>
    %98 = tpu.matmul %97, %83, %cst_38 {dimension_numbers = #tpu.dot_dimension_numbers<[1], [0], [0], [1], [0, 0, 1, 1], [], []>} : vector<16x16xf32>, vector<16x8xf32>, vector<16x8xf32> -> vector<16x8xf32>
    %99 = vector.extract_strided_slice %14 {offsets = [24, 0], sizes = [8, 32], strides = [1, 1]} : vector<32x32xf32> to vector<8x32xf32>
    %cst_39 = arith.constant dense<0.000000e+00> : vector<16x32xf32>
    %100 = tpu.matmul %98, %99, %cst_39 {dimension_numbers = #tpu.dot_dimension_numbers<[1], [0], [0], [1], [0, 0, 1, 1], [], []>} : vector<16x8xf32>, vector<8x32xf32>, vector<16x32xf32> -> vector<16x32xf32>
    %101 = arith.addf %80, %100 : vector<16x32xf32>
    %102 = vector.extract_strided_slice %16 {offsets = [0, 0], sizes = [1, 32], strides = [1, 1]} : vector<6x32xf32> to vector<1x32xf32>
    %103 = vector.broadcast %102 : vector<1x32xf32> to vector<16x32xf32>
    %104 = arith.addf %101, %103 : vector<16x32xf32>
    %105 = arith.addf %0, %104 : vector<16x32xf32>
    %106 = vector.extract_strided_slice %16 {offsets = [1, 0], sizes = [1, 32], strides = [1, 1]} : vector<6x32xf32> to vector<1x32xf32>
    %107 = vector.extract_strided_slice %16 {offsets = [2, 0], sizes = [1, 32], strides = [1, 1]} : vector<6x32xf32> to vector<1x32xf32>
    %cst_40 = arith.constant dense<0.000000e+00> : vector<16xf32>
    %108 = vector.multi_reduction <add>, %105, %cst_40 [1] : vector<16x32xf32> to vector<16xf32>
    %109 = vector.shape_cast %108 : vector<16xf32> to vector<16x1xf32>
    %cst_41 = arith.constant 3.200000e+01 : f32
    %110 = vector.broadcast %cst_41 : f32 to vector<16x1xf32>
    %111 = arith.divf %109, %110 : vector<16x1xf32>
    %112 = vector.broadcast %111 : vector<16x1xf32> to vector<16x32xf32>
    %113 = arith.subf %105, %112 : vector<16x32xf32>
    %114 = arith.mulf %113, %113 : vector<16x32xf32>
    %cst_42 = arith.constant dense<0.000000e+00> : vector<16xf32>
    %115 = vector.multi_reduction <add>, %114, %cst_42 [1] : vector<16x32xf32> to vector<16xf32>
    %116 = vector.shape_cast %115 : vector<16xf32> to vector<16x1xf32>
    %cst_43 = arith.constant 3.200000e+01 : f32
    %117 = vector.broadcast %cst_43 : f32 to vector<16x1xf32>
    %118 = arith.divf %116, %117 : vector<16x1xf32>
    %119 = vector.broadcast %111 : vector<16x1xf32> to vector<16x32xf32>
    %120 = arith.subf %105, %119 : vector<16x32xf32>
    %cst_44 = arith.constant 9.99999974E-6 : f32
    %121 = vector.broadcast %cst_44 : f32 to vector<16x1xf32>
    %122 = arith.addf %118, %121 : vector<16x1xf32>
    %123 = math.rsqrt %122 : vector<16x1xf32>
    %124 = vector.broadcast %123 : vector<16x1xf32> to vector<16x32xf32>
    %125 = arith.mulf %120, %124 : vector<16x32xf32>
    %126 = vector.broadcast %106 : vector<1x32xf32> to vector<16x32xf32>
    %127 = arith.mulf %125, %126 : vector<16x32xf32>
    %128 = vector.broadcast %107 : vector<1x32xf32> to vector<16x32xf32>
    %129 = arith.addf %127, %128 : vector<16x32xf32>
    %130 = arith.truncf %129 : vector<16x32xf32> to vector<16x32xbf16>
    %c0_45 = arith.constant 0 : index
    %c0_46 = arith.constant 0 : index
    %c0_47 = arith.constant 0 : index
    %131 = vector.load %arg8[%c0_45, %c0_46, %c0_47] : memref<2x32x64xbf16, #tpu.memory_space<vmem>>, vector<1x32x64xbf16>
    %132 = vector.shape_cast %131 : vector<1x32x64xbf16> to vector<32x64xbf16>
    %cst_48 = arith.constant dense<0.000000e+00> : vector<16x64xf32>
    %133 = tpu.matmul %130, %132, %cst_48 {dimension_numbers = #tpu.dot_dimension_numbers<[1], [0], [0], [1], [0, 0, 1, 1], [], []>} : vector<16x32xbf16>, vector<32x64xbf16>, vector<16x64xf32> -> vector<16x64xf32>
    %c0_49 = arith.constant 0 : index
    %c0_50 = arith.constant 0 : index
    %c0_51 = arith.constant 0 : index
    %134 = vector.load %arg7[%c0_49, %c0_50, %c0_51] : memref<2x1x64xf32, #tpu.memory_space<vmem>>, vector<1x1x64xf32>
    %135 = vector.shape_cast %134 : vector<1x1x64xf32> to vector<1x64xf32>
    %136 = vector.broadcast %135 : vector<1x64xf32> to vector<16x64xf32>
    %137 = arith.addf %133, %136 : vector<16x64xf32>
    %138 = arith.mulf %137, %137 : vector<16x64xf32>
    %139 = arith.mulf %137, %138 : vector<16x64xf32>
    %cst_52 = arith.constant 4.471500e-02 : f32
    %140 = vector.broadcast %cst_52 : f32 to vector<16x64xf32>
    %141 = arith.mulf %140, %139 : vector<16x64xf32>
    %142 = arith.addf %137, %141 : vector<16x64xf32>
    %cst_53 = arith.constant 0.797884583 : f32
    %143 = vector.broadcast %cst_53 : f32 to vector<16x64xf32>
    %144 = arith.mulf %143, %142 : vector<16x64xf32>
    %145 = math.tanh %144 : vector<16x64xf32>
    %cst_54 = arith.constant 1.000000e+00 : f32
    %146 = vector.broadcast %cst_54 : f32 to vector<16x64xf32>
    %147 = arith.addf %146, %145 : vector<16x64xf32>
    %cst_55 = arith.constant 5.000000e-01 : f32
    %148 = vector.broadcast %cst_55 : f32 to vector<16x64xf32>
    %149 = arith.mulf %148, %147 : vector<16x64xf32>
    %150 = arith.mulf %137, %149 : vector<16x64xf32>
    %151 = arith.truncf %150 : vector<16x64xf32> to vector<16x64xbf16>
    %c0_56 = arith.constant 0 : index
    %c0_57 = arith.constant 0 : index
    %c0_58 = arith.constant 0 : index
    %152 = vector.load %arg9[%c0_56, %c0_57, %c0_58] : memref<2x64x32xbf16, #tpu.memory_space<vmem>>, vector<1x64x32xbf16>
    %153 = vector.shape_cast %152 : vector<1x64x32xbf16> to vector<64x32xbf16>
    %cst_59 = arith.constant dense<0.000000e+00> : vector<16x32xf32>
    %154 = tpu.matmul %151, %153, %cst_59 {dimension_numbers = #tpu.dot_dimension_numbers<[1], [0], [0], [1], [0, 0, 1, 1], [], []>} : vector<16x64xbf16>, vector<64x32xbf16>, vector<16x32xf32> -> vector<16x32xf32>
    %155 = vector.extract_strided_slice %16 {offsets = [3, 0], sizes = [1, 32], strides = [1, 1]} : vector<6x32xf32> to vector<1x32xf32>
    %156 = vector.broadcast %155 : vector<1x32xf32> to vector<16x32xf32>
    %157 = arith.addf %154, %156 : vector<16x32xf32>
    %158 = arith.addf %129, %157 : vector<16x32xf32>
    %159 = vector.extract_strided_slice %16 {offsets = [4, 0], sizes = [1, 32], strides = [1, 1]} : vector<6x32xf32> to vector<1x32xf32>
    %160 = vector.extract_strided_slice %16 {offsets = [5, 0], sizes = [1, 32], strides = [1, 1]} : vector<6x32xf32> to vector<1x32xf32>
    %cst_60 = arith.constant dense<0.000000e+00> : vector<16xf32>
    %161 = vector.multi_reduction <add>, %158, %cst_60 [1] : vector<16x32xf32> to vector<16xf32>
    %162 = vector.shape_cast %161 : vector<16xf32> to vector<16x1xf32>
    %cst_61 = arith.constant 3.200000e+01 : f32
    %163 = vector.broadcast %cst_61 : f32 to vector<16x1xf32>
    %164 = arith.divf %162, %163 : vector<16x1xf32>
    %165 = vector.broadcast %164 : vector<16x1xf32> to vector<16x32xf32>
    %166 = arith.subf %158, %165 : vector<16x32xf32>
    %167 = arith.mulf %166, %166 : vector<16x32xf32>
    %cst_62 = arith.constant dense<0.000000e+00> : vector<16xf32>
    %168 = vector.multi_reduction <add>, %167, %cst_62 [1] : vector<16x32xf32> to vector<16xf32>
    %169 = vector.shape_cast %168 : vector<16xf32> to vector<16x1xf32>
    %cst_63 = arith.constant 3.200000e+01 : f32
    %170 = vector.broadcast %cst_63 : f32 to vector<16x1xf32>
    %171 = arith.divf %169, %170 : vector<16x1xf32>
    %172 = vector.broadcast %164 : vector<16x1xf32> to vector<16x32xf32>
    %173 = arith.subf %158, %172 : vector<16x32xf32>
    %cst_64 = arith.constant 9.99999974E-6 : f32
    %174 = vector.broadcast %cst_64 : f32 to vector<16x1xf32>
    %175 = arith.addf %171, %174 : vector<16x1xf32>
    %176 = math.rsqrt %175 : vector<16x1xf32>
    %177 = vector.broadcast %176 : vector<16x1xf32> to vector<16x32xf32>
    %178 = arith.mulf %173, %177 : vector<16x32xf32>
    %179 = vector.broadcast %159 : vector<1x32xf32> to vector<16x32xf32>
    %180 = arith.mulf %178, %179 : vector<16x32xf32>
    %181 = vector.broadcast %160 : vector<1x32xf32> to vector<16x32xf32>
    %182 = arith.addf %180, %181 : vector<16x32xf32>
    %183 = arith.truncf %182 : vector<16x32xf32> to vector<16x32xbf16>
    %c1 = arith.constant 1 : index
    %c0_65 = arith.constant 0 : index
    %c0_66 = arith.constant 0 : index
    %184 = vector.load %arg3[%c1, %c0_65, %c0_66] : memref<2x32x96xbf16, #tpu.memory_space<vmem>>, vector<1x32x96xbf16>
    %185 = vector.shape_cast %184 : vector<1x32x96xbf16> to vector<32x96xbf16>
    %cst_67 = arith.constant dense<0.000000e+00> : vector<16x96xf32>
    %186 = tpu.matmul %183, %185, %cst_67 {dimension_numbers = #tpu.dot_dimension_numbers<[1], [0], [0], [1], [0, 0, 1, 1], [], []>} : vector<16x32xbf16>, vector<32x96xbf16>, vector<16x96xf32> -> vector<16x96xf32>
    %c1_68 = arith.constant 1 : index
    %c0_69 = arith.constant 0 : index
    %c0_70 = arith.constant 0 : index
    %187 = vector.load %arg4[%c1_68, %c0_69, %c0_70] : memref<2x1x96xf32, #tpu.memory_space<vmem>>, vector<1x1x96xf32>
    %188 = vector.shape_cast %187 : vector<1x1x96xf32> to vector<1x96xf32>
    %189 = vector.broadcast %188 : vector<1x96xf32> to vector<16x96xf32>
    %190 = arith.addf %186, %189 : vector<16x96xf32>
    %191 = vector.extract_strided_slice %190 {offsets = [0, 0], sizes = [16, 32], strides = [1, 1]} : vector<16x96xf32> to vector<16x32xf32>
    %192 = vector.extract_strided_slice %190 {offsets = [0, 32], sizes = [16, 32], strides = [1, 1]} : vector<16x96xf32> to vector<16x32xf32>
    %193 = vector.extract_strided_slice %190 {offsets = [0, 64], sizes = [16, 32], strides = [1, 1]} : vector<16x96xf32> to vector<16x32xf32>
    %c1_71 = arith.constant 1 : index
    %c0_72 = arith.constant 0 : index
    %c0_73 = arith.constant 0 : index
    %194 = vector.load %arg5[%c1_71, %c0_72, %c0_73] : memref<2x32x32xf32, #tpu.memory_space<vmem>>, vector<1x32x32xf32>
    %195 = vector.shape_cast %194 : vector<1x32x32xf32> to vector<32x32xf32>
    %c1_74 = arith.constant 1 : index
    %c0_75 = arith.constant 0 : index
    %c0_76 = arith.constant 0 : index
    %196 = vector.load %arg6[%c1_74, %c0_75, %c0_76] : memref<2x6x32xf32, #tpu.memory_space<vmem>>, vector<1x6x32xf32>
    %197 = vector.shape_cast %196 : vector<1x6x32xf32> to vector<6x32xf32>
    %cst_77 = arith.constant 0.000000e+00 : f32
    %198 = vector.broadcast %cst_77 : f32 to vector<16x32xf32>
    %199 = vector.extract_strided_slice %191 {offsets = [0, 0], sizes = [16, 8], strides = [1, 1]} : vector<16x32xf32> to vector<16x8xf32>
    %200 = vector.extract_strided_slice %192 {offsets = [0, 0], sizes = [16, 8], strides = [1, 1]} : vector<16x32xf32> to vector<16x8xf32>
    %201 = vector.extract_strided_slice %193 {offsets = [0, 0], sizes = [16, 8], strides = [1, 1]} : vector<16x32xf32> to vector<16x8xf32>
    "tpu.trace_start"() <{level = 10 : i32, message = "qd,kd->qk"}> : () -> ()
    %cst_78 = arith.constant dense<0.000000e+00> : vector<16x16xf32>
    %202 = tpu.matmul %199, %200, %cst_78 {dimension_numbers = #tpu.dot_dimension_numbers<[1], [1], [0], [0], [0, 0, 1, 0], [], []>} : vector<16x8xf32>, vector<16x8xf32>, vector<16x16xf32> -> vector<16x16xf32>
    "tpu.trace_stop"() : () -> ()
    %cst_79 = arith.constant 0.353553385 : f32
    %203 = vector.broadcast %cst_79 : f32 to vector<16x16xf32>
    %204 = arith.mulf %202, %203 : vector<16x16xf32>
    %205 = arith.addf %204, %1 : vector<16x16xf32>
    %cst_80 = arith.constant dense<0xFF800000> : vector<16xf32>
    %206 = vector.multi_reduction <maximumf>, %205, %cst_80 [1] : vector<16x16xf32> to vector<16xf32>
    %207 = vector.shape_cast %206 : vector<16xf32> to vector<16x1xf32>
    %208 = vector.broadcast %207 : vector<16x1xf32> to vector<16x16xf32>
    %209 = arith.subf %205, %208 : vector<16x16xf32>
    %210 = math.exp %209 : vector<16x16xf32>
    %cst_81 = arith.constant dense<0.000000e+00> : vector<16xf32>
    %211 = vector.multi_reduction <add>, %210, %cst_81 [1] : vector<16x16xf32> to vector<16xf32>
    %212 = vector.shape_cast %211 : vector<16xf32> to vector<16x1xf32>
    %213 = tpu.reciprocal %212 {approx = true} : vector<16x1xf32> -> vector<16x1xf32>
    %214 = vector.broadcast %213 : vector<16x1xf32> to vector<16x16xf32>
    %215 = arith.mulf %210, %214 : vector<16x16xf32>
    %cst_82 = arith.constant dense<0.000000e+00> : vector<16x8xf32>
    %216 = tpu.matmul %215, %201, %cst_82 {dimension_numbers = #tpu.dot_dimension_numbers<[1], [0], [0], [1], [0, 0, 1, 1], [], []>} : vector<16x16xf32>, vector<16x8xf32>, vector<16x8xf32> -> vector<16x8xf32>
    %217 = vector.extract_strided_slice %195 {offsets = [0, 0], sizes = [8, 32], strides = [1, 1]} : vector<32x32xf32> to vector<8x32xf32>
    %cst_83 = arith.constant dense<0.000000e+00> : vector<16x32xf32>
    %218 = tpu.matmul %216, %217, %cst_83 {dimension_numbers = #tpu.dot_dimension_numbers<[1], [0], [0], [1], [0, 0, 1, 1], [], []>} : vector<16x8xf32>, vector<8x32xf32>, vector<16x32xf32> -> vector<16x32xf32>
    %219 = arith.addf %198, %218 : vector<16x32xf32>
    %220 = vector.extract_strided_slice %191 {offsets = [0, 8], sizes = [16, 8], strides = [1, 1]} : vector<16x32xf32> to vector<16x8xf32>
    %221 = vector.extract_strided_slice %192 {offsets = [0, 8], sizes = [16, 8], strides = [1, 1]} : vector<16x32xf32> to vector<16x8xf32>
    %222 = vector.extract_strided_slice %193 {offsets = [0, 8], sizes = [16, 8], strides = [1, 1]} : vector<16x32xf32> to vector<16x8xf32>
    "tpu.trace_start"() <{level = 10 : i32, message = "qd,kd->qk"}> : () -> ()
    %cst_84 = arith.constant dense<0.000000e+00> : vector<16x16xf32>
    %223 = tpu.matmul %220, %221, %cst_84 {dimension_numbers = #tpu.dot_dimension_numbers<[1], [1], [0], [0], [0, 0, 1, 0], [], []>} : vector<16x8xf32>, vector<16x8xf32>, vector<16x16xf32> -> vector<16x16xf32>
    "tpu.trace_stop"() : () -> ()
    %cst_85 = arith.constant 0.353553385 : f32
    %224 = vector.broadcast %cst_85 : f32 to vector<16x16xf32>
    %225 = arith.mulf %223, %224 : vector<16x16xf32>
    %226 = arith.addf %225, %1 : vector<16x16xf32>
    %cst_86 = arith.constant dense<0xFF800000> : vector<16xf32>
    %227 = vector.multi_reduction <maximumf>, %226, %cst_86 [1] : vector<16x16xf32> to vector<16xf32>
    %228 = vector.shape_cast %227 : vector<16xf32> to vector<16x1xf32>
    %229 = vector.broadcast %228 : vector<16x1xf32> to vector<16x16xf32>
    %230 = arith.subf %226, %229 : vector<16x16xf32>
    %231 = math.exp %230 : vector<16x16xf32>
    %cst_87 = arith.constant dense<0.000000e+00> : vector<16xf32>
    %232 = vector.multi_reduction <add>, %231, %cst_87 [1] : vector<16x16xf32> to vector<16xf32>
    %233 = vector.shape_cast %232 : vector<16xf32> to vector<16x1xf32>
    %234 = tpu.reciprocal %233 {approx = true} : vector<16x1xf32> -> vector<16x1xf32>
    %235 = vector.broadcast %234 : vector<16x1xf32> to vector<16x16xf32>
    %236 = arith.mulf %231, %235 : vector<16x16xf32>
    %cst_88 = arith.constant dense<0.000000e+00> : vector<16x8xf32>
    %237 = tpu.matmul %236, %222, %cst_88 {dimension_numbers = #tpu.dot_dimension_numbers<[1], [0], [0], [1], [0, 0, 1, 1], [], []>} : vector<16x16xf32>, vector<16x8xf32>, vector<16x8xf32> -> vector<16x8xf32>
    %238 = vector.extract_strided_slice %195 {offsets = [8, 0], sizes = [8, 32], strides = [1, 1]} : vector<32x32xf32> to vector<8x32xf32>
    %cst_89 = arith.constant dense<0.000000e+00> : vector<16x32xf32>
    %239 = tpu.matmul %237, %238, %cst_89 {dimension_numbers = #tpu.dot_dimension_numbers<[1], [0], [0], [1], [0, 0, 1, 1], [], []>} : vector<16x8xf32>, vector<8x32xf32>, vector<16x32xf32> -> vector<16x32xf32>
    %240 = arith.addf %219, %239 : vector<16x32xf32>
    %241 = vector.extract_strided_slice %191 {offsets = [0, 16], sizes = [16, 8], strides = [1, 1]} : vector<16x32xf32> to vector<16x8xf32>
    %242 = vector.extract_strided_slice %192 {offsets = [0, 16], sizes = [16, 8], strides = [1, 1]} : vector<16x32xf32> to vector<16x8xf32>
    %243 = vector.extract_strided_slice %193 {offsets = [0, 16], sizes = [16, 8], strides = [1, 1]} : vector<16x32xf32> to vector<16x8xf32>
    "tpu.trace_start"() <{level = 10 : i32, message = "qd,kd->qk"}> : () -> ()
    %cst_90 = arith.constant dense<0.000000e+00> : vector<16x16xf32>
    %244 = tpu.matmul %241, %242, %cst_90 {dimension_numbers = #tpu.dot_dimension_numbers<[1], [1], [0], [0], [0, 0, 1, 0], [], []>} : vector<16x8xf32>, vector<16x8xf32>, vector<16x16xf32> -> vector<16x16xf32>
    "tpu.trace_stop"() : () -> ()
    %cst_91 = arith.constant 0.353553385 : f32
    %245 = vector.broadcast %cst_91 : f32 to vector<16x16xf32>
    %246 = arith.mulf %244, %245 : vector<16x16xf32>
    %247 = arith.addf %246, %1 : vector<16x16xf32>
    %cst_92 = arith.constant dense<0xFF800000> : vector<16xf32>
    %248 = vector.multi_reduction <maximumf>, %247, %cst_92 [1] : vector<16x16xf32> to vector<16xf32>
    %249 = vector.shape_cast %248 : vector<16xf32> to vector<16x1xf32>
    %250 = vector.broadcast %249 : vector<16x1xf32> to vector<16x16xf32>
    %251 = arith.subf %247, %250 : vector<16x16xf32>
    %252 = math.exp %251 : vector<16x16xf32>
    %cst_93 = arith.constant dense<0.000000e+00> : vector<16xf32>
    %253 = vector.multi_reduction <add>, %252, %cst_93 [1] : vector<16x16xf32> to vector<16xf32>
    %254 = vector.shape_cast %253 : vector<16xf32> to vector<16x1xf32>
    %255 = tpu.reciprocal %254 {approx = true} : vector<16x1xf32> -> vector<16x1xf32>
    %256 = vector.broadcast %255 : vector<16x1xf32> to vector<16x16xf32>
    %257 = arith.mulf %252, %256 : vector<16x16xf32>
    %cst_94 = arith.constant dense<0.000000e+00> : vector<16x8xf32>
    %258 = tpu.matmul %257, %243, %cst_94 {dimension_numbers = #tpu.dot_dimension_numbers<[1], [0], [0], [1], [0, 0, 1, 1], [], []>} : vector<16x16xf32>, vector<16x8xf32>, vector<16x8xf32> -> vector<16x8xf32>
    %259 = vector.extract_strided_slice %195 {offsets = [16, 0], sizes = [8, 32], strides = [1, 1]} : vector<32x32xf32> to vector<8x32xf32>
    %cst_95 = arith.constant dense<0.000000e+00> : vector<16x32xf32>
    %260 = tpu.matmul %258, %259, %cst_95 {dimension_numbers = #tpu.dot_dimension_numbers<[1], [0], [0], [1], [0, 0, 1, 1], [], []>} : vector<16x8xf32>, vector<8x32xf32>, vector<16x32xf32> -> vector<16x32xf32>
    %261 = arith.addf %240, %260 : vector<16x32xf32>
    %262 = vector.extract_strided_slice %191 {offsets = [0, 24], sizes = [16, 8], strides = [1, 1]} : vector<16x32xf32> to vector<16x8xf32>
    %263 = vector.extract_strided_slice %192 {offsets = [0, 24], sizes = [16, 8], strides = [1, 1]} : vector<16x32xf32> to vector<16x8xf32>
    %264 = vector.extract_strided_slice %193 {offsets = [0, 24], sizes = [16, 8], strides = [1, 1]} : vector<16x32xf32> to vector<16x8xf32>
    "tpu.trace_start"() <{level = 10 : i32, message = "qd,kd->qk"}> : () -> ()
    %cst_96 = arith.constant dense<0.000000e+00> : vector<16x16xf32>
    %265 = tpu.matmul %262, %263, %cst_96 {dimension_numbers = #tpu.dot_dimension_numbers<[1], [1], [0], [0], [0, 0, 1, 0], [], []>} : vector<16x8xf32>, vector<16x8xf32>, vector<16x16xf32> -> vector<16x16xf32>
    "tpu.trace_stop"() : () -> ()
    %cst_97 = arith.constant 0.353553385 : f32
    %266 = vector.broadcast %cst_97 : f32 to vector<16x16xf32>
    %267 = arith.mulf %265, %266 : vector<16x16xf32>
    %268 = arith.addf %267, %1 : vector<16x16xf32>
    %cst_98 = arith.constant dense<0xFF800000> : vector<16xf32>
    %269 = vector.multi_reduction <maximumf>, %268, %cst_98 [1] : vector<16x16xf32> to vector<16xf32>
    %270 = vector.shape_cast %269 : vector<16xf32> to vector<16x1xf32>
    %271 = vector.broadcast %270 : vector<16x1xf32> to vector<16x16xf32>
    %272 = arith.subf %268, %271 : vector<16x16xf32>
    %273 = math.exp %272 : vector<16x16xf32>
    %cst_99 = arith.constant dense<0.000000e+00> : vector<16xf32>
    %274 = vector.multi_reduction <add>, %273, %cst_99 [1] : vector<16x16xf32> to vector<16xf32>
    %275 = vector.shape_cast %274 : vector<16xf32> to vector<16x1xf32>
    %276 = tpu.reciprocal %275 {approx = true} : vector<16x1xf32> -> vector<16x1xf32>
    %277 = vector.broadcast %276 : vector<16x1xf32> to vector<16x16xf32>
    %278 = arith.mulf %273, %277 : vector<16x16xf32>
    %cst_100 = arith.constant dense<0.000000e+00> : vector<16x8xf32>
    %279 = tpu.matmul %278, %264, %cst_100 {dimension_numbers = #tpu.dot_dimension_numbers<[1], [0], [0], [1], [0, 0, 1, 1], [], []>} : vector<16x16xf32>, vector<16x8xf32>, vector<16x8xf32> -> vector<16x8xf32>
    %280 = vector.extract_strided_slice %195 {offsets = [24, 0], sizes = [8, 32], strides = [1, 1]} : vector<32x32xf32> to vector<8x32xf32>
    %cst_101 = arith.constant dense<0.000000e+00> : vector<16x32xf32>
    %281 = tpu.matmul %279, %280, %cst_101 {dimension_numbers = #tpu.dot_dimension_numbers<[1], [0], [0], [1], [0, 0, 1, 1], [], []>} : vector<16x8xf32>, vector<8x32xf32>, vector<16x32xf32> -> vector<16x32xf32>
    %282 = arith.addf %261, %281 : vector<16x32xf32>
    %283 = vector.extract_strided_slice %197 {offsets = [0, 0], sizes = [1, 32], strides = [1, 1]} : vector<6x32xf32> to vector<1x32xf32>
    %284 = vector.broadcast %283 : vector<1x32xf32> to vector<16x32xf32>
    %285 = arith.addf %282, %284 : vector<16x32xf32>
    %286 = arith.addf %182, %285 : vector<16x32xf32>
    %287 = vector.extract_strided_slice %197 {offsets = [1, 0], sizes = [1, 32], strides = [1, 1]} : vector<6x32xf32> to vector<1x32xf32>
    %288 = vector.extract_strided_slice %197 {offsets = [2, 0], sizes = [1, 32], strides = [1, 1]} : vector<6x32xf32> to vector<1x32xf32>
    %cst_102 = arith.constant dense<0.000000e+00> : vector<16xf32>
    %289 = vector.multi_reduction <add>, %286, %cst_102 [1] : vector<16x32xf32> to vector<16xf32>
    %290 = vector.shape_cast %289 : vector<16xf32> to vector<16x1xf32>
    %cst_103 = arith.constant 3.200000e+01 : f32
    %291 = vector.broadcast %cst_103 : f32 to vector<16x1xf32>
    %292 = arith.divf %290, %291 : vector<16x1xf32>
    %293 = vector.broadcast %292 : vector<16x1xf32> to vector<16x32xf32>
    %294 = arith.subf %286, %293 : vector<16x32xf32>
    %295 = arith.mulf %294, %294 : vector<16x32xf32>
    %cst_104 = arith.constant dense<0.000000e+00> : vector<16xf32>
    %296 = vector.multi_reduction <add>, %295, %cst_104 [1] : vector<16x32xf32> to vector<16xf32>
    %297 = vector.shape_cast %296 : vector<16xf32> to vector<16x1xf32>
    %cst_105 = arith.constant 3.200000e+01 : f32
    %298 = vector.broadcast %cst_105 : f32 to vector<16x1xf32>
    %299 = arith.divf %297, %298 : vector<16x1xf32>
    %300 = vector.broadcast %292 : vector<16x1xf32> to vector<16x32xf32>
    %301 = arith.subf %286, %300 : vector<16x32xf32>
    %cst_106 = arith.constant 9.99999974E-6 : f32
    %302 = vector.broadcast %cst_106 : f32 to vector<16x1xf32>
    %303 = arith.addf %299, %302 : vector<16x1xf32>
    %304 = math.rsqrt %303 : vector<16x1xf32>
    %305 = vector.broadcast %304 : vector<16x1xf32> to vector<16x32xf32>
    %306 = arith.mulf %301, %305 : vector<16x32xf32>
    %307 = vector.broadcast %287 : vector<1x32xf32> to vector<16x32xf32>
    %308 = arith.mulf %306, %307 : vector<16x32xf32>
    %309 = vector.broadcast %288 : vector<1x32xf32> to vector<16x32xf32>
    %310 = arith.addf %308, %309 : vector<16x32xf32>
    %311 = arith.truncf %310 : vector<16x32xf32> to vector<16x32xbf16>
    %c1_107 = arith.constant 1 : index
    %c0_108 = arith.constant 0 : index
    %c0_109 = arith.constant 0 : index
    %312 = vector.load %arg8[%c1_107, %c0_108, %c0_109] : memref<2x32x64xbf16, #tpu.memory_space<vmem>>, vector<1x32x64xbf16>
    %313 = vector.shape_cast %312 : vector<1x32x64xbf16> to vector<32x64xbf16>
    %cst_110 = arith.constant dense<0.000000e+00> : vector<16x64xf32>
    %314 = tpu.matmul %311, %313, %cst_110 {dimension_numbers = #tpu.dot_dimension_numbers<[1], [0], [0], [1], [0, 0, 1, 1], [], []>} : vector<16x32xbf16>, vector<32x64xbf16>, vector<16x64xf32> -> vector<16x64xf32>
    %c1_111 = arith.constant 1 : index
    %c0_112 = arith.constant 0 : index
    %c0_113 = arith.constant 0 : index
    %315 = vector.load %arg7[%c1_111, %c0_112, %c0_113] : memref<2x1x64xf32, #tpu.memory_space<vmem>>, vector<1x1x64xf32>
    %316 = vector.shape_cast %315 : vector<1x1x64xf32> to vector<1x64xf32>
    %317 = vector.broadcast %316 : vector<1x64xf32> to vector<16x64xf32>
    %318 = arith.addf %314, %317 : vector<16x64xf32>
    %319 = arith.mulf %318, %318 : vector<16x64xf32>
    %320 = arith.mulf %318, %319 : vector<16x64xf32>
    %cst_114 = arith.constant 4.471500e-02 : f32
    %321 = vector.broadcast %cst_114 : f32 to vector<16x64xf32>
    %322 = arith.mulf %321, %320 : vector<16x64xf32>
    %323 = arith.addf %318, %322 : vector<16x64xf32>
    %cst_115 = arith.constant 0.797884583 : f32
    %324 = vector.broadcast %cst_115 : f32 to vector<16x64xf32>
    %325 = arith.mulf %324, %323 : vector<16x64xf32>
    %326 = math.tanh %325 : vector<16x64xf32>
    %cst_116 = arith.constant 1.000000e+00 : f32
    %327 = vector.broadcast %cst_116 : f32 to vector<16x64xf32>
    %328 = arith.addf %327, %326 : vector<16x64xf32>
    %cst_117 = arith.constant 5.000000e-01 : f32
    %329 = vector.broadcast %cst_117 : f32 to vector<16x64xf32>
    %330 = arith.mulf %329, %328 : vector<16x64xf32>
    %331 = arith.mulf %318, %330 : vector<16x64xf32>
    %332 = arith.truncf %331 : vector<16x64xf32> to vector<16x64xbf16>
    %c1_118 = arith.constant 1 : index
    %c0_119 = arith.constant 0 : index
    %c0_120 = arith.constant 0 : index
    %333 = vector.load %arg9[%c1_118, %c0_119, %c0_120] : memref<2x64x32xbf16, #tpu.memory_space<vmem>>, vector<1x64x32xbf16>
    %334 = vector.shape_cast %333 : vector<1x64x32xbf16> to vector<64x32xbf16>
    %cst_121 = arith.constant dense<0.000000e+00> : vector<16x32xf32>
    %335 = tpu.matmul %332, %334, %cst_121 {dimension_numbers = #tpu.dot_dimension_numbers<[1], [0], [0], [1], [0, 0, 1, 1], [], []>} : vector<16x64xbf16>, vector<64x32xbf16>, vector<16x32xf32> -> vector<16x32xf32>
    %336 = vector.extract_strided_slice %197 {offsets = [3, 0], sizes = [1, 32], strides = [1, 1]} : vector<6x32xf32> to vector<1x32xf32>
    %337 = vector.broadcast %336 : vector<1x32xf32> to vector<16x32xf32>
    %338 = arith.addf %335, %337 : vector<16x32xf32>
    %339 = arith.addf %310, %338 : vector<16x32xf32>
    %340 = vector.extract_strided_slice %197 {offsets = [4, 0], sizes = [1, 32], strides = [1, 1]} : vector<6x32xf32> to vector<1x32xf32>
    %341 = vector.extract_strided_slice %197 {offsets = [5, 0], sizes = [1, 32], strides = [1, 1]} : vector<6x32xf32> to vector<1x32xf32>
    %cst_122 = arith.constant dense<0.000000e+00> : vector<16xf32>
    %342 = vector.multi_reduction <add>, %339, %cst_122 [1] : vector<16x32xf32> to vector<16xf32>
    %343 = vector.shape_cast %342 : vector<16xf32> to vector<16x1xf32>
    %cst_123 = arith.constant 3.200000e+01 : f32
    %344 = vector.broadcast %cst_123 : f32 to vector<16x1xf32>
    %345 = arith.divf %343, %344 : vector<16x1xf32>
    %346 = vector.broadcast %345 : vector<16x1xf32> to vector<16x32xf32>
    %347 = arith.subf %339, %346 : vector<16x32xf32>
    %348 = arith.mulf %347, %347 : vector<16x32xf32>
    %cst_124 = arith.constant dense<0.000000e+00> : vector<16xf32>
    %349 = vector.multi_reduction <add>, %348, %cst_124 [1] : vector<16x32xf32> to vector<16xf32>
    %350 = vector.shape_cast %349 : vector<16xf32> to vector<16x1xf32>
    %cst_125 = arith.constant 3.200000e+01 : f32
    %351 = vector.broadcast %cst_125 : f32 to vector<16x1xf32>
    %352 = arith.divf %350, %351 : vector<16x1xf32>
    %353 = vector.broadcast %345 : vector<16x1xf32> to vector<16x32xf32>
    %354 = arith.subf %339, %353 : vector<16x32xf32>
    %cst_126 = arith.constant 9.99999974E-6 : f32
    %355 = vector.broadcast %cst_126 : f32 to vector<16x1xf32>
    %356 = arith.addf %352, %355 : vector<16x1xf32>
    %357 = math.rsqrt %356 : vector<16x1xf32>
    %358 = vector.broadcast %357 : vector<16x1xf32> to vector<16x32xf32>
    %359 = arith.mulf %354, %358 : vector<16x32xf32>
    %360 = vector.broadcast %340 : vector<1x32xf32> to vector<16x32xf32>
    %361 = arith.mulf %359, %360 : vector<16x32xf32>
    %362 = vector.broadcast %341 : vector<1x32xf32> to vector<16x32xf32>
    %363 = arith.addf %361, %362 : vector<16x32xf32>
    %c0_127 = arith.constant 0 : index
    %c0_128 = arith.constant 0 : index
    %364 = vector.load %arg11[%c0_127, %c0_128] : memref<3x32xf32, #tpu.memory_space<vmem>>, vector<3x32xf32>
    %365 = arith.truncf %363 : vector<16x32xf32> to vector<16x32xbf16>
    %c0_129 = arith.constant 0 : index
    %c0_130 = arith.constant 0 : index
    %366 = vector.load %arg10[%c0_129, %c0_130] : memref<32x32xbf16, #tpu.memory_space<vmem>>, vector<32x32xbf16>
    %cst_131 = arith.constant dense<0.000000e+00> : vector<16x32xf32>
    %367 = tpu.matmul %365, %366, %cst_131 {dimension_numbers = #tpu.dot_dimension_numbers<[1], [0], [0], [1], [0, 0, 1, 1], [], []>} : vector<16x32xbf16>, vector<32x32xbf16>, vector<16x32xf32> -> vector<16x32xf32>
    %368 = vector.extract_strided_slice %364 {offsets = [0, 0], sizes = [1, 32], strides = [1, 1]} : vector<3x32xf32> to vector<1x32xf32>
    %369 = vector.broadcast %368 : vector<1x32xf32> to vector<16x32xf32>
    %370 = arith.addf %367, %369 : vector<16x32xf32>
    %371 = arith.mulf %370, %370 : vector<16x32xf32>
    %372 = arith.mulf %370, %371 : vector<16x32xf32>
    %cst_132 = arith.constant 4.471500e-02 : f32
    %373 = vector.broadcast %cst_132 : f32 to vector<16x32xf32>
    %374 = arith.mulf %373, %372 : vector<16x32xf32>
    %375 = arith.addf %370, %374 : vector<16x32xf32>
    %cst_133 = arith.constant 0.797884583 : f32
    %376 = vector.broadcast %cst_133 : f32 to vector<16x32xf32>
    %377 = arith.mulf %376, %375 : vector<16x32xf32>
    %378 = math.tanh %377 : vector<16x32xf32>
    %cst_134 = arith.constant 1.000000e+00 : f32
    %379 = vector.broadcast %cst_134 : f32 to vector<16x32xf32>
    %380 = arith.addf %379, %378 : vector<16x32xf32>
    %cst_135 = arith.constant 5.000000e-01 : f32
    %381 = vector.broadcast %cst_135 : f32 to vector<16x32xf32>
    %382 = arith.mulf %381, %380 : vector<16x32xf32>
    %383 = arith.mulf %370, %382 : vector<16x32xf32>
    %384 = vector.extract_strided_slice %364 {offsets = [1, 0], sizes = [1, 32], strides = [1, 1]} : vector<3x32xf32> to vector<1x32xf32>
    %385 = vector.extract_strided_slice %364 {offsets = [2, 0], sizes = [1, 32], strides = [1, 1]} : vector<3x32xf32> to vector<1x32xf32>
    %cst_136 = arith.constant dense<0.000000e+00> : vector<16xf32>
    %386 = vector.multi_reduction <add>, %383, %cst_136 [1] : vector<16x32xf32> to vector<16xf32>
    %387 = vector.shape_cast %386 : vector<16xf32> to vector<16x1xf32>
    %cst_137 = arith.constant 3.200000e+01 : f32
    %388 = vector.broadcast %cst_137 : f32 to vector<16x1xf32>
    %389 = arith.divf %387, %388 : vector<16x1xf32>
    %390 = vector.broadcast %389 : vector<16x1xf32> to vector<16x32xf32>
    %391 = arith.subf %383, %390 : vector<16x32xf32>
    %392 = arith.mulf %391, %391 : vector<16x32xf32>
    %cst_138 = arith.constant dense<0.000000e+00> : vector<16xf32>
    %393 = vector.multi_reduction <add>, %392, %cst_138 [1] : vector<16x32xf32> to vector<16xf32>
    %394 = vector.shape_cast %393 : vector<16xf32> to vector<16x1xf32>
    %cst_139 = arith.constant 3.200000e+01 : f32
    %395 = vector.broadcast %cst_139 : f32 to vector<16x1xf32>
    %396 = arith.divf %394, %395 : vector<16x1xf32>
    %397 = vector.broadcast %389 : vector<16x1xf32> to vector<16x32xf32>
    %398 = arith.subf %383, %397 : vector<16x32xf32>
    %cst_140 = arith.constant 9.99999974E-6 : f32
    %399 = vector.broadcast %cst_140 : f32 to vector<16x1xf32>
    %400 = arith.addf %396, %399 : vector<16x1xf32>
    %401 = math.rsqrt %400 : vector<16x1xf32>
    %402 = vector.broadcast %401 : vector<16x1xf32> to vector<16x32xf32>
    %403 = arith.mulf %398, %402 : vector<16x32xf32>
    %404 = vector.broadcast %384 : vector<1x32xf32> to vector<16x32xf32>
    %405 = arith.mulf %403, %404 : vector<16x32xf32>
    %406 = vector.broadcast %385 : vector<1x32xf32> to vector<16x32xf32>
    %407 = arith.addf %405, %406 : vector<16x32xf32>
    %c0_141 = arith.constant 0 : index
    %c0_142 = arith.constant 0 : index
    %408 = vector.load %arg12[%c0_141, %c0_142] : memref<16x32xf32, #tpu.memory_space<vmem>>, vector<16x32xf32>
    tpu.vector_store %arg12[%c0_141, %c0_142], %407 {strides = array<i32>} : memref<16x32xf32, #tpu.memory_space<vmem>>, vector<16x32xf32>,
    return
  }
  func.func @transform_0(%arg0: i32) -> (i32, i32) {
    %c0_i32 = arith.constant 0 : i32
    %c0_i32_0 = arith.constant 0 : i32
    %c0_i32_1 = arith.constant 0 : i32
    return %c0_i32, %c0_i32_0 : i32, i32
  }
  func.func @transform_1(%arg0: i32) -> (i32, i32) {
    %c0_i32 = arith.constant 0 : i32
    %c0_i32_0 = arith.constant 0 : i32
    %c0_i32_1 = arith.constant 0 : i32
    return %c0_i32, %c0_i32_0 : i32, i32
  }
  func.func @transform_2(%arg0: i32) -> (i32, i32, i32) {
    %c0_i32 = arith.constant 0 : i32
    %c0_i32_0 = arith.constant 0 : i32
    %c0_i32_1 = arith.constant 0 : i32
    %c0_i32_2 = arith.constant 0 : i32
    return %c0_i32, %c0_i32_0, %c0_i32_1 : i32, i32, i32
  }
  func.func @transform_3(%arg0: i32) -> (i32, i32, i32) {
    %c0_i32 = arith.constant 0 : i32
    %c0_i32_0 = arith.constant 0 : i32
    %c0_i32_1 = arith.constant 0 : i32
    %c0_i32_2 = arith.constant 0 : i32
    return %c0_i32, %c0_i32_0, %c0_i32_1 : i32, i32, i32
  }
  func.func @transform_4(%arg0: i32) -> (i32, i32, i32) {
    %c0_i32 = arith.constant 0 : i32
    %c0_i32_0 = arith.constant 0 : i32
    %c0_i32_1 = arith.constant 0 : i32
    %c0_i32_2 = arith.constant 0 : i32
    return %c0_i32, %c0_i32_0, %c0_i32_1 : i32, i32, i32
  }
  func.func @transform_5(%arg0: i32) -> (i32, i32, i32) {
    %c0_i32 = arith.constant 0 : i32
    %c0_i32_0 = arith.constant 0 : i32
    %c0_i32_1 = arith.constant 0 : i32
    %c0_i32_2 = arith.constant 0 : i32
    return %c0_i32, %c0_i32_0, %c0_i32_1 : i32, i32, i32
  }
  func.func @transform_6(%arg0: i32) -> (i32, i32, i32) {
    %c0_i32 = arith.constant 0 : i32
    %c0_i32_0 = arith.constant 0 : i32
    %c0_i32_1 = arith.constant 0 : i32
    %c0_i32_2 = arith.constant 0 : i32
    return %c0_i32, %c0_i32_0, %c0_i32_1 : i32, i32, i32
  }
  func.func @transform_7(%arg0: i32) -> (i32, i32, i32) {
    %c0_i32 = arith.constant 0 : i32
    %c0_i32_0 = arith.constant 0 : i32
    %c0_i32_1 = arith.constant 0 : i32
    %c0_i32_2 = arith.constant 0 : i32
    return %c0_i32, %c0_i32_0, %c0_i32_1 : i32, i32, i32
  }
  func.func @transform_8(%arg0: i32) -> (i32, i32, i32) {
    %c0_i32 = arith.constant 0 : i32
    %c0_i32_0 = arith.constant 0 : i32
    %c0_i32_1 = arith.constant 0 : i32
    %c0_i32_2 = arith.constant 0 : i32
    return %c0_i32, %c0_i32_0, %c0_i32_1 : i32, i32, i32
  }
  func.func @transform_9(%arg0: i32) -> (i32, i32) {
    %c0_i32 = arith.constant 0 : i32
    %c0_i32_0 = arith.constant 0 : i32
    %c0_i32_1 = arith.constant 0 : i32
    return %c0_i32, %c0_i32_0 : i32, i32
  }
  func.func @transform_10(%arg0: i32) -> (i32, i32) {
    %c0_i32 = arith.constant 0 : i32
    %c0_i32_0 = arith.constant 0 : i32
    %c0_i32_1 = arith.constant 0 : i32
    return %c0_i32, %c0_i32_0 : i32, i32
  }
  func.func @transform_11(%arg0: i32) -> (i32, i32) {
    %c0_i32 = arith.constant 0 : i32
    %c0_i32_0 = arith.constant 0 : i32
    %c0_i32_1 = arith.constant 0 : i32
    return %c0_i32, %c0_i32_0 : i32, i32
  }
}

</mosaic_0001>

<llo_original>
// kernel: tpu_custom_call.1
$region0: #{tpu_custom_call.1}
  #allocation0 [shape = 'u32[]', space=smem, size = 0x4, offset = 0x4, fixed_abs, tag = 'smem constant byte address 0x4 - core index']
  #allocation1 [shape = 'u32[144,128]{1,0:T(1,128)}', space=vmem, size = 0x12000, scoped, tag = 'internal scratch']
  %s0 = inlined_call_operand.hbm [shape: f32[16,32], index: 0, kind: input, shape index: {}]
  %s1 = inlined_call_operand.hbm [shape: f32[16,16], index: 1, kind: input, shape index: {}]
  %s2 = inlined_call_operand.vmem [shape: bf16[2,32,96], index: 2, kind: input, shape index: {}]
  %s3 = inlined_call_operand.vmem [shape: f32[2,1,96], index: 3, kind: input, shape index: {}]
  %s4 = inlined_call_operand.vmem [shape: f32[2,32,32], index: 4, kind: input, shape index: {}]
  %s5 = inlined_call_operand.vmem [shape: f32[2,6,32], index: 5, kind: input, shape index: {}]
  %s6 = inlined_call_operand.vmem [shape: f32[2,1,64], index: 6, kind: input, shape index: {}]
  %s7 = inlined_call_operand.hbm [shape: bf16[2,32,64], index: 7, kind: input, shape index: {}]
  %s8 = inlined_call_operand.vmem [shape: bf16[2,64,32], index: 8, kind: input, shape index: {}]
  %s9 = inlined_call_operand.hbm [shape: bf16[32,32], index: 9, kind: input, shape index: {}]
  %s10 = inlined_call_operand.vmem [shape: f32[3,32], index: 10, kind: input, shape index: {}]
  %s11 = inlined_call_operand.hbm [shape: f32[16,32], index: 11, kind: output, shape index: {}]
  %s12 = sld [smem:[#allocation0]]
  $region70: #{tpu_custom_call.1} parent=0
    _
  %s14 = ssub.s32 1, %s12
  %s15 = scalar_select 0, %s14, %s12
  $region1: #{tpu_custom_call.1} parent=0
    #allocation2 [shape = 'u8[8192]{0}', space=vmem, size = 0x2000, scoped, tag = 'input window, operand 0, single buffered']
    #allocation3 [shape = 's32[1]{0}', space=sflag, size = 0x4, scoped, tag = 'scoped memory for tpu_custom_call.1']
    #allocation4 [shape = 's32[1]{0}', space=sflag, size = 0x4, scoped, tag = 'scoped memory for tpu_custom_call.1']
    #allocation5 [shape = 'u8[8192]{0}', space=vmem, size = 0x2000, scoped, tag = 'input window, operand 1, single buffered']
    #allocation6 [shape = 's32[1]{0}', space=sflag, size = 0x4, scoped, tag = 'scoped memory for tpu_custom_call.1']
    #allocation7 [shape = 'u8[16384]{0}', space=vmem, size = 0x4000, scoped, tag = 'input window, operand 7, single buffered']
    #allocation8 [shape = 'u8[8192]{0}', space=vmem, size = 0x2000, scoped, tag = 'input window, operand 9, single buffered']
    #allocation9 [shape = 's32[1]{0}', space=sflag, size = 0x4, scoped, tag = 'scoped memory for tpu_custom_call.1']
    #allocation10 [shape = 'u8[8192]{0}', space=vmem, size = 0x2000, scoped, tag = 'output window, operand 0, single buffered']
    %16 = vsyncpa [#allocation3], 0
    %17 = vsyncpa [#allocation6], 0
    %18 = vsyncpa [#allocation9], 0
    %19 = vsyncpa [#allocation4], 0
    // Predicated region
    $region2: #{tpu_custom_call.1} parent=1 // pred_check
      _
    $region3: #{tpu_custom_call.1} parent=1 // pred_check_branch
      %21 = sbr.rel (0) target = $region5
    $region4: #{tpu_custom_call.1} parent=1 // pred_region
      %s23 = ssub.s32 256, 256
      %24 = vsyncadd [#allocation3], %s23
      %s25 = sshll.u32 [#allocation2], 4
      %s26 = int_to_ptr.vmem [resolvable:$true] %s25
      %31 = dma.hbm_to_vmem [thread:$0]  %s0, 256, %s26, [#allocation3], 128, 128, 8
    $region5: #{tpu_custom_call.1} parent=1 // pred_fallthru
      _
    // Predicated region
    $region6: #{tpu_custom_call.1} parent=1 // pred_check
      _
    $region7: #{tpu_custom_call.1} parent=1 // pred_check_branch
      %33 = sbr.rel (0) target = $region9
    $region8: #{tpu_custom_call.1} parent=1 // pred_region
      %s35 = ssub.s32 256, 256
      %36 = vsyncadd [#allocation6], %s35
      %s37 = sshll.u32 [#allocation5], 4
      %s38 = int_to_ptr.vmem [resolvable:$true] %s37
      %43 = dma.hbm_to_vmem [thread:$0]  %s1, 256, %s38, [#allocation6], 128, 128, 8
    $region9: #{tpu_custom_call.1} parent=1 // pred_fallthru
      _
    // Predicated region
    $region10: #{tpu_custom_call.1} parent=1 // pred_check
      _
    $region11: #{tpu_custom_call.1} parent=1 // pred_check_branch
      %45 = sbr.rel (0) target = $region13
    $region12: #{tpu_custom_call.1} parent=1 // pred_region
      _
    $region13: #{tpu_custom_call.1} parent=1 // pred_fallthru
      _
    // Predicated region
    $region14: #{tpu_custom_call.1} parent=1 // pred_check
      _
    $region15: #{tpu_custom_call.1} parent=1 // pred_check_branch
      %47 = sbr.rel (0) target = $region17
    $region16: #{tpu_custom_call.1} parent=1 // pred_region
      _
    $region17: #{tpu_custom_call.1} parent=1 // pred_fallthru
      _
    // Predicated region
    $region18: #{tpu_custom_call.1} parent=1 // pred_check
      _
    $region19: #{tpu_custom_call.1} parent=1 // pred_check_branch
      %49 = sbr.rel (0) target = $region21
    $region20: #{tpu_custom_call.1} parent=1 // pred_region
      _
    $region21: #{tpu_custom_call.1} parent=1 // pred_fallthru
      _
    // Predicated region
    $region22: #{tpu_custom_call.1} parent=1 // pred_check
      _
    $region23: #{tpu_custom_call.1} parent=1 // pred_check_branch
      %51 = sbr.rel (0) target = $region25
    $region24: #{tpu_custom_call.1} parent=1 // pred_region
      _
    $region25: #{tpu_custom_call.1} parent=1 // pred_fallthru
      _
    // Predicated region
    $region26: #{tpu_custom_call.1} parent=1 // pred_check
      _
    $region27: #{tpu_custom_call.1} parent=1 // pred_check_branch
      %53 = sbr.rel (0) target = $region29
    $region28: #{tpu_custom_call.1} parent=1 // pred_region
      _
    $region29: #{tpu_custom_call.1} parent=1 // pred_fallthru
      _
    // Predicated region
    $region30: #{tpu_custom_call.1} parent=1 // pred_check
      _
    $region31: #{tpu_custom_call.1} parent=1 // pred_check_branch
      %55 = sbr.rel (0) target = $region33
    $region32: #{tpu_custom_call.1} parent=1 // pred_region
      %s57 = ssub.s32 512, 512
      %58 = vsyncadd [#allocation6], %s57
      %s59 = sshll.u32 [#allocation7], 4
      %s60 = int_to_ptr.vmem [resolvable:$true] %s59
      %65 = dma.hbm_to_vmem [thread:$0]  %s7, 512, %s60, [#allocation6], 64, 64, 4
    $region33: #{tpu_custom_call.1} parent=1 // pred_fallthru
      _
    // Predicated region
    $region34: #{tpu_custom_call.1} parent=1 // pred_check
      _
    $region35: #{tpu_custom_call.1} parent=1 // pred_check_branch
      %67 = sbr.rel (0) target = $region37
    $region36: #{tpu_custom_call.1} parent=1 // pred_region
      _
    $region37: #{tpu_custom_call.1} parent=1 // pred_fallthru
      _
    // Predicated region
    $region38: #{tpu_custom_call.1} parent=1 // pred_check
      _
    $region39: #{tpu_custom_call.1} parent=1 // pred_check_branch
      %69 = sbr.rel (0) target = $region41
    $region40: #{tpu_custom_call.1} parent=1 // pred_region
      %s71 = ssub.s32 256, 256
      %72 = vsyncadd [#allocation9], %s71
      %s73 = sshll.u32 [#allocation8], 4
      %s74 = int_to_ptr.vmem [resolvable:$true] %s73
      %79 = dma.hbm_to_vmem [thread:$0]  %s9, 256, %s74, [#allocation9], 64, 64, 4
    $region41: #{tpu_custom_call.1} parent=1 // pred_fallthru
      _
    // Predicated region
    $region42: #{tpu_custom_call.1} parent=1 // pred_check
      _
    $region43: #{tpu_custom_call.1} parent=1 // pred_check_branch
      %81 = sbr.rel (0) target = $region45
    $region44: #{tpu_custom_call.1} parent=1 // pred_region
      _
    $region45: #{tpu_custom_call.1} parent=1 // pred_fallthru
      _
    // Predicated region
    $region46: #{tpu_custom_call.1} parent=1 // pred_check
      _
    $region47: #{tpu_custom_call.1} parent=1 // pred_check_branch
      %83 = sbr.rel (0) target = $region49
    $region48: #{tpu_custom_call.1} parent=1 // pred_region
      %84 = dma.done [#allocation3], 256
    $region49: #{tpu_custom_call.1} parent=1 // pred_fallthru
      _
    // Predicated region
    $region50: #{tpu_custom_call.1} parent=1 // pred_check
      _
    $region51: #{tpu_custom_call.1} parent=1 // pred_check_branch
      %86 = sbr.rel (0) target = $region53
    $region52: #{tpu_custom_call.1} parent=1 // pred_region
      %87 = dma.done [#allocation6], 256
    $region53: #{tpu_custom_call.1} parent=1 // pred_fallthru
      _
    // Predicated region
    $region54: #{tpu_custom_call.1} parent=1 // pred_check
      _
    $region55: #{tpu_custom_call.1} parent=1 // pred_check_branch
      %89 = sbr.rel (0) target = $region57
    $region56: #{tpu_custom_call.1} parent=1 // pred_region
      %90 = dma.done [#allocation6], 512
    $region57: #{tpu_custom_call.1} parent=1 // pred_fallthru
      _
    // Predicated region
    $region58: #{tpu_custom_call.1} parent=1 // pred_check
      _
    $region59: #{tpu_custom_call.1} parent=1 // pred_check_branch
      %92 = sbr.rel (0) target = $region61
    $region60: #{tpu_custom_call.1} parent=1 // pred_region
      %93 = dma.done [#allocation9], 256
    $region61: #{tpu_custom_call.1} parent=1 // pred_fallthru
      _
    %v95 = vld [vmem:[#allocation2] sm:$0xff]
    %v96 = vld [vmem:[#allocation2 + $0x8] sm:$0xff]
    %v97 = vld [vmem:[#allocation5] sm:$0xff]
    %v98 = vld [vmem:[#allocation5 + $0x8] sm:$0xff]
    %v99 = vpack.c.bf16 %v96, %v95
    %v100 = vld [vmem:[%s2] sm:$0xf]
    %v101 = vld [vmem:[%s2 + $0x4] sm:$0xf]
    %v102 = vld [vmem:[%s2 + $0x8] sm:$0xf]
    %v103 = vld [vmem:[%s2 + $0xc] sm:$0xf]
    %v104 = vld [vmem:[%s3] sm:$0x1]
    %v106 = vlaneseq
    %v107 = vshrl.u32 %v106, 7
    %v108 = vsub.s32 0, %v107
    %v109 = vrot.slane %v104, %v108
    %v115 = vunpack.c.l.b16 %v100
    %v116 = vunpack.c.l.b16 %v101
    %v117 = vunpack.c.l.b16 %v102
    %v118 = vunpack.c.l.b16 %v103
    %v119 = vpack.c.b16 %v116, %v115
    %v120 = vpack.c.b16 %v118, %v117
    %vm123 = vcmask 261120
    %v125 = vsel %vm123, %v99, 0
    %127 = vmatprep.subr.bf16.mxu0 0
    %128 = vmatpush1.bf16.msra.mxu0 0
    %129 = vmatprep.subr.bf16.mxu0 0
    %130 = vmatpush1.bf16.msra.mxu0 0
    %131 = vmatprep.subr.bf16.mxu0 0
    %132 = vmatpush1.bf16.msra.mxu0 0
    %133 = vmatprep.subr.bf16.mxu0 0
    %134 = vmatpush1.bf16.msra.mxu0 0
    %135 = vmatprep.subr.bf16.mxu0 0
    %136 = vmatpush1.bf16.msra.mxu0 0
    %137 = vmatprep.subr.bf16.mxu0 0
    %138 = vmatpush1.bf16.msra.mxu0 0
    %139 = vmatprep.subr.bf16.mxu0 0
    %140 = vmatpush1.bf16.msra.mxu0 %v120
    %141 = vmatprep.subr.bf16.mxu0 0
    %142 = vmatpush1.bf16.msra.mxu0 %v119
    %143 = vmatprep.subr.bf16.mxu0 0
    %144 = vmatpush2.bf16.msra.mxu0 0
    %145 = vmatprep.subr.bf16.mxu0 0
    %146 = vmatpush2.bf16.msra.mxu0 0
    %147 = vmatprep.subr.bf16.mxu0 0
    %148 = vmatpush2.bf16.msra.mxu0 0
    %149 = vmatprep.subr.bf16.mxu0 0
    %150 = vmatpush2.bf16.msra.mxu0 0
    %151 = vmatprep.subr.bf16.mxu0 0
    %152 = vmatpush2.bf16.msra.mxu0 0
    %153 = vmatprep.subr.bf16.mxu0 0
    %154 = vmatpush2.bf16.msra.mxu0 0
    %155 = vmatprep.subr.bf16.mxu0 0
    %156 = vmatpush2.bf16.msra.mxu0 0
    %157 = vmatprep.subr.bf16.mxu0 0
    %158 = vmatpush2.bf16.msra.mxu0 0
    %159 = vmatprep.mubr.bf16.mxu0 0
    %160 = vmatmul.mubr.bf16.gmra.mxu0 %v125
    %v161 = vpop.f32.mrf.mxu0
    %v162 = vadd.f32 %v109, %v161
    %v163 = vpop.f32.mrf.mxu0
    %v164 = vpop.f32.mrf.mxu0
    %v165 = vadd.f32 %v109, %v164
    %v166 = vpop.f32.mrf.mxu0
    %167 = vdwg.mxu0
    %v168 = vld [vmem:[%s4] sm:$0xff]
    %v169 = vld [vmem:[%s4 + $0x8] sm:$0xff]
    %v170 = vld [vmem:[%s4 + $0x10] sm:$0xff]
    %v171 = vld [vmem:[%s4 + $0x18] sm:$0xff]
    %v172 = vld [vmem:[%s5] sm:$0x3f]
    %175 = vrot.lane.b32.xlu0 %v162, 96
    %v176 = vpop.permute.xlu0 %175
    %177 = vrot.lane.b32.xlu0 %v165, 96
    %v178 = vpop.permute.xlu0 %177
    %vm179 = vcmask 64512
    %v180 = vsel %vm179, %v162, 0
    %v182 = vsel %vm179, %v165, 0
    %v184 = vsel %vm179, %v176, 0
    %v186 = vsel %vm179, %v178, 0
    %188 = vmatprep.subr.mxu0 0.0
    %189 = vmatpush1.xpose.msra.mxu0 0.0
    %190 = vmatprep.subr.mxu0 0.0
    %191 = vmatpush1.xpose.msra.mxu0 0.0
    %192 = vmatprep.subr.mxu0 0.0
    %193 = vmatpush1.xpose.msra.mxu0 0.0
    %194 = vmatprep.subr.mxu0 0.0
    %195 = vmatpush1.xpose.msra.mxu0 0.0
    %196 = vmatprep.subr.mxu0 0.0
    %197 = vmatpush1.xpose.msra.mxu0 0.0
    %198 = vmatprep.subr.mxu0 0.0
    %199 = vmatpush1.xpose.msra.mxu0 0.0
    %200 = vmatprep.subr.mxu0 0.0
    %201 = vmatpush1.xpose.msra.mxu0 0.0
    %202 = vmatprep.subr.mxu0 0.0
    %203 = vmatpush1.xpose.msra.mxu0 0.0
    %204 = vmatprep.subr.mxu0 0.0
    %205 = vmatpush1.xpose.msra.mxu0 0.0
    %206 = vmatprep.subr.mxu0 0.0
    %207 = vmatpush1.xpose.msra.mxu0 0.0
    %208 = vmatprep.subr.mxu0 0.0
    %209 = vmatpush1.xpose.msra.mxu0 0.0
    %210 = vmatprep.subr.mxu0 0.0
    %211 = vmatpush1.xpose.msra.mxu0 0.0
    %212 = vmatprep.subr.mxu0 0.0
    %213 = vmatpush1.xpose.msra.mxu0 0.0
    %214 = vmatprep.subr.mxu0 0.0
    %215 = vmatpush1.xpose.msra.mxu0 0.0
    %216 = vmatprep.subr.mxu0 0.0
    %217 = vmatpush1.xpose.msra.mxu0 %v186
    %218 = vmatprep.subr.mxu0 0.0
    %219 = vmatpush1.xpose.msra.mxu0 %v184
    %220 = vmatprep.subr.mxu0 0.0
    %221 = vmatpush2.xpose.msra.mxu0 0.0
    %222 = vmatprep.subr.mxu0 0.0
    %223 = vmatpush2.xpose.msra.mxu0 0.0
    %224 = vmatprep.subr.mxu0 0.0
    %225 = vmatpush2.xpose.msra.mxu0 0.0
    %226 = vmatprep.subr.mxu0 0.0
    %227 = vmatpush2.xpose.msra.mxu0 0.0
    %228 = vmatprep.subr.mxu0 0.0
    %229 = vmatpush2.xpose.msra.mxu0 0.0
    %230 = vmatprep.subr.mxu0 0.0
    %231 = vmatpush2.xpose.msra.mxu0 0.0
    %232 = vmatprep.subr.mxu0 0.0
    %233 = vmatpush2.xpose.msra.mxu0 0.0
    %234 = vmatprep.subr.mxu0 0.0
    %235 = vmatpush2.xpose.msra.mxu0 0.0
    %236 = vmatprep.subr.mxu0 0.0
    %237 = vmatpush2.xpose.msra.mxu0 0.0
    %238 = vmatprep.subr.mxu0 0.0
    %239 = vmatpush2.xpose.msra.mxu0 0.0
    %240 = vmatprep.subr.mxu0 0.0
    %241 = vmatpush2.xpose.msra.mxu0 0.0
    %242 = vmatprep.subr.mxu0 0.0
    %243 = vmatpush2.xpose.msra.mxu0 0.0
    %244 = vmatprep.subr.mxu0 0.0
    %245 = vmatpush2.xpose.msra.mxu0 0.0
    %246 = vmatprep.subr.mxu0 0.0
    %247 = vmatpush2.xpose.msra.mxu0 0.0
    %248 = vmatprep.subr.mxu0 0.0
    %249 = vmatpush2.xpose.msra.mxu0 0.0
    %250 = vmatprep.subr.mxu0 0.0
    %251 = vmatpush2.xpose.msra.mxu0 0.0
    %252 = vmatprep.mubr.f32.mxu0 0.0
    %253 = vmatmul.mubr.f32.gmra.mxu0 %v180
    %v254 = vpop.f32.mrf.mxu0
    %v255 = vadd.f32 0.0, %v254
    %v256 = vpop.f32.mrf.mxu0
    %257 = vmatprep.mubr.f32.mxu0 0.0
    %258 = vmatmul.mubr.f32.gmra.mxu0 %v182
    %v259 = vpop.f32.mrf.mxu0
    %v260 = vadd.f32 0.0, %v259
    %v261 = vpop.f32.mrf.mxu0
    %262 = vdwg.mxu0
    %v263 = vmul.f32 %v255, 0.35355338
    %v264 = vmul.f32 %v260, 0.35355338
    %v265 = vadd.f32 %v263, %v97
    %v266 = vadd.f32 %v264, %v98
    %vm267 = vcmask 130048
    %v268 = vsel %vm267, %v265, -inf
    %269 = vmax.xlane.f32.xlu0 %v268
    %v270 = vpop.xlane.xlu0 %269
    %v271 = vsel %vm267, %v266, -inf
    %272 = vmax.xlane.f32.xlu0 %v271
    %v273 = vpop.xlane.xlu0 %272
    %v274 = vsub.f32 %v265, %v270
    %v275 = vsub.f32 %v266, %v273
    %v276 = vmul.f32 %v274, 1.442695
    %v277 = vpow.pop %v276
    %v278 = vmul.f32 %v275, 1.442695
    %v279 = vpow.pop %v278
    %v280 = vsel %vm267, %v277, 0.0
    %281 = vadd.xlane.f32.xlu0 %v280
    %v282 = vpop.xlane.xlu0 %281
    %v283 = vsel %vm267, %v279, 0.0
    %284 = vadd.xlane.f32.xlu0 %v283
    %v285 = vpop.xlane.xlu0 %284
    %v286 = vrcp.pop %v282
    %v287 = vrcp.pop %v285
    %v288 = vmul.f32 %v277, %v286
    %v289 = vmul.f32 %v279, %v287
    %290 = vrot.lane.b32.xlu0 %v162, 64
    %v291 = vpop.permute.xlu0 %290
    %292 = vrot.lane.b32.xlu0 %v165, 64
    %v293 = vpop.permute.xlu0 %292
    %v297 = vsel %vm267, %v288, 0
    %v300 = vsel %vm267, %v289, 0
    %302 = vmatprep.subr.mxu0 0.0
    %303 = vmatpush1.msra.mxu0 0.0
    %304 = vmatprep.subr.mxu0 0.0
    %305 = vmatpush1.msra.mxu0 0.0
    %306 = vmatprep.subr.mxu0 0.0
    %307 = vmatpush1.msra.mxu0 0.0
    %308 = vmatprep.subr.mxu0 0.0
    %309 = vmatpush1.msra.mxu0 0.0
    %310 = vmatprep.subr.mxu0 0.0
    %311 = vmatpush1.msra.mxu0 0.0
    %312 = vmatprep.subr.mxu0 0.0
    %313 = vmatpush1.msra.mxu0 0.0
    %314 = vmatprep.subr.mxu0 0.0
    %315 = vmatpush1.msra.mxu0 0.0
    %316 = vmatprep.subr.mxu0 0.0
    %317 = vmatpush1.msra.mxu0 0.0
    %318 = vmatprep.subr.mxu0 0.0
    %319 = vmatpush1.msra.mxu0 0.0
    %320 = vmatprep.subr.mxu0 0.0
    %321 = vmatpush1.msra.mxu0 0.0
    %322 = vmatprep.subr.mxu0 0.0
    %323 = vmatpush1.msra.mxu0 0.0
    %324 = vmatprep.subr.mxu0 0.0
    %325 = vmatpush1.msra.mxu0 0.0
    %326 = vmatprep.subr.mxu0 0.0
    %327 = vmatpush1.msra.mxu0 0.0
    %328 = vmatprep.subr.mxu0 0.0
    %329 = vmatpush1.msra.mxu0 0.0
    %330 = vmatprep.subr.mxu0 0.0
    %331 = vmatpush1.msra.mxu0 %v293
    %332 = vmatprep.subr.mxu0 0.0
    %333 = vmatpush1.msra.mxu0 %v291
    %334 = vmatprep.subr.mxu0 0.0
    %335 = vmatpush2.msra.mxu0 0.0
    %336 = vmatprep.subr.mxu0 0.0
    %337 = vmatpush2.msra.mxu0 0.0
    %338 = vmatprep.subr.mxu0 0.0
    %339 = vmatpush2.msra.mxu0 0.0
    %340 = vmatprep.subr.mxu0 0.0
    %341 = vmatpush2.msra.mxu0 0.0
    %342 = vmatprep.subr.mxu0 0.0
    %343 = vmatpush2.msra.mxu0 0.0
    %344 = vmatprep.subr.mxu0 0.0
    %345 = vmatpush2.msra.mxu0 0.0
    %346 = vmatprep.subr.mxu0 0.0
    %347 = vmatpush2.msra.mxu0 0.0
    %348 = vmatprep.subr.mxu0 0.0
    %349 = vmatpush2.msra.mxu0 0.0
    %350 = vmatprep.subr.mxu0 0.0
    %351 = vmatpush2.msra.mxu0 0.0
    %352 = vmatprep.subr.mxu0 0.0
    %353 = vmatpush2.msra.mxu0 0.0
    %354 = vmatprep.subr.mxu0 0.0
    %355 = vmatpush2.msra.mxu0 0.0
    %356 = vmatprep.subr.mxu0 0.0
    %357 = vmatpush2.msra.mxu0 0.0
    %358 = vmatprep.subr.mxu0 0.0
    %359 = vmatpush2.msra.mxu0 0.0
    %360 = vmatprep.subr.mxu0 0.0
    %361 = vmatpush2.msra.mxu0 0.0
    %362 = vmatprep.subr.mxu0 0.0
    %363 = vmatpush2.msra.mxu0 0.0
    %364 = vmatprep.subr.mxu0 0.0
    %365 = vmatpush2.msra.mxu0 0.0
    %366 = vmatprep.mubr.f32.mxu0 0.0
    %367 = vmatmul.mubr.f32.gmra.mxu0 %v297
    %v368 = vpop.f32.mrf.mxu0
    %v369 = vadd.f32 0.0, %v368
    %v370 = vpop.f32.mrf.mxu0
    %371 = vmatprep.mubr.f32.mxu0 0.0
    %372 = vmatmul.mubr.f32.gmra.mxu0 %v300
    %v373 = vpop.f32.mrf.mxu0
    %v374 = vadd.f32 0.0, %v373
    %v375 = vpop.f32.mrf.mxu0
    %376 = vdwg.mxu0
    %377 = vrot.lane.b32.xlu0 %v162, 120
    %v378 = vpop.permute.xlu0 %377
    %379 = vrot.lane.b32.xlu0 %v165, 120
    %v380 = vpop.permute.xlu0 %379
    %381 = vrot.lane.b32.xlu0 %v162, 88
    %v382 = vpop.permute.xlu0 %381
    %383 = vrot.lane.b32.xlu0 %v165, 88
    %v384 = vpop.permute.xlu0 %383
    %v385 = vsel %vm179, %v378, 0
    %v387 = vsel %vm179, %v380, 0
    %v389 = vsel %vm179, %v382, 0
    %v391 = vsel %vm179, %v384, 0
    %393 = vmatprep.subr.mxu0 0.0
    %394 = vmatpush1.xpose.msra.mxu0 0.0
    %395 = vmatprep.subr.mxu0 0.0
    %396 = vmatpush1.xpose.msra.mxu0 0.0
    %397 = vmatprep.subr.mxu0 0.0
    %398 = vmatpush1.xpose.msra.mxu0 0.0
    %399 = vmatprep.subr.mxu0 0.0
    %400 = vmatpush1.xpose.msra.mxu0 0.0
    %401 = vmatprep.subr.mxu0 0.0
    %402 = vmatpush1.xpose.msra.mxu0 0.0
    %403 = vmatprep.subr.mxu0 0.0
    %404 = vmatpush1.xpose.msra.mxu0 0.0
    %405 = vmatprep.subr.mxu0 0.0
    %406 = vmatpush1.xpose.msra.mxu0 0.0
    %407 = vmatprep.subr.mxu0 0.0
    %408 = vmatpush1.xpose.msra.mxu0 0.0
    %409 = vmatprep.subr.mxu0 0.0
    %410 = vmatpush1.xpose.msra.mxu0 0.0
    %411 = vmatprep.subr.mxu0 0.0
    %412 = vmatpush1.xpose.msra.mxu0 0.0
    %413 = vmatprep.subr.mxu0 0.0
    %414 = vmatpush1.xpose.msra.mxu0 0.0
    %415 = vmatprep.subr.mxu0 0.0
    %416 = vmatpush1.xpose.msra.mxu0 0.0
    %417 = vmatprep.subr.mxu0 0.0
    %418 = vmatpush1.xpose.msra.mxu0 0.0
    %419 = vmatprep.subr.mxu0 0.0
    %420 = vmatpush1.xpose.msra.mxu0 0.0
    %421 = vmatprep.subr.mxu0 0.0
    %422 = vmatpush1.xpose.msra.mxu0 %v391
    %423 = vmatprep.subr.mxu0 0.0
    %424 = vmatpush1.xpose.msra.mxu0 %v389
    %425 = vmatprep.subr.mxu0 0.0
    %426 = vmatpush2.xpose.msra.mxu0 0.0
    %427 = vmatprep.subr.mxu0 0.0
    %428 = vmatpush2.xpose.msra.mxu0 0.0
    %429 = vmatprep.subr.mxu0 0.0
    %430 = vmatpush2.xpose.msra.mxu0 0.0
    %431 = vmatprep.subr.mxu0 0.0
    %432 = vmatpush2.xpose.msra.mxu0 0.0
    %433 = vmatprep.subr.mxu0 0.0
    %434 = vmatpush2.xpose.msra.mxu0 0.0
    %435 = vmatprep.subr.mxu0 0.0
    %436 = vmatpush2.xpose.msra.mxu0 0.0
    %437 = vmatprep.subr.mxu0 0.0
    %438 = vmatpush2.xpose.msra.mxu0 0.0
    %439 = vmatprep.subr.mxu0 0.0
    %440 = vmatpush2.xpose.msra.mxu0 0.0
    %441 = vmatprep.subr.mxu0 0.0
    %442 = vmatpush2.xpose.msra.mxu0 0.0
    %443 = vmatprep.subr.mxu0 0.0
    %444 = vmatpush2.xpose.msra.mxu0 0.0
    %445 = vmatprep.subr.mxu0 0.0
    %446 = vmatpush2.xpose.msra.mxu0 0.0
    %447 = vmatprep.subr.mxu0 0.0
    %448 = vmatpush2.xpose.msra.mxu0 0.0
    %449 = vmatprep.subr.mxu0 0.0
    %450 = vmatpush2.xpose.msra.mxu0 0.0
    %451 = vmatprep.subr.mxu0 0.0
    %452 = vmatpush2.xpose.msra.mxu0 0.0
    %453 = vmatprep.subr.mxu0 0.0
    %454 = vmatpush2.xpose.msra.mxu0 0.0
    %455 = vmatprep.subr.mxu0 0.0
    %456 = vmatpush2.xpose.msra.mxu0 0.0
    %457 = vmatprep.mubr.f32.mxu0 0.0
    %458 = vmatmul.mubr.f32.gmra.mxu0 %v385
    %v459 = vpop.f32.mrf.mxu0
    %v460 = vadd.f32 0.0, %v459
    %v461 = vpop.f32.mrf.mxu0
    %462 = vmatprep.mubr.f32.mxu0 0.0
    %463 = vmatmul.mubr.f32.gmra.mxu0 %v387
    %v464 = vpop.f32.mrf.mxu0
    %v465 = vadd.f32 0.0, %v464
    %v466 = vpop.f32.mrf.mxu0
    %467 = vdwg.mxu0
    %v468 = vmul.f32 %v460, 0.35355338
    %v469 = vmul.f32 %v465, 0.35355338
    %v470 = vadd.f32 %v468, %v97
    %v471 = vadd.f32 %v469, %v98
    %v472 = vsel %vm267, %v470, -inf
    %473 = vmax.xlane.f32.xlu0 %v472
    %v474 = vpop.xlane.xlu0 %473
    %v475 = vsel %vm267, %v471, -inf
    %476 = vmax.xlane.f32.xlu0 %v475
    %v477 = vpop.xlane.xlu0 %476
    %v478 = vsub.f32 %v470, %v474
    %v479 = vsub.f32 %v471, %v477
    %v480 = vmul.f32 %v478, 1.442695
    %v481 = vpow.pop %v480
    %v482 = vmul.f32 %v479, 1.442695
    %v483 = vpow.pop %v482
    %v484 = vsel %vm267, %v481, 0.0
    %485 = vadd.xlane.f32.xlu0 %v484
    %v486 = vpop.xlane.xlu0 %485
    %v487 = vsel %vm267, %v483, 0.0
    %488 = vadd.xlane.f32.xlu0 %v487
    %v489 = vpop.xlane.xlu0 %488
    %v490 = vrcp.pop %v486
    %v491 = vrcp.pop %v489
    %v492 = vmul.f32 %v481, %v490
    %v493 = vmul.f32 %v483, %v491
    %494 = vrot.lane.b32.xlu0 %v162, 56
    %v495 = vpop.permute.xlu0 %494
    %496 = vrot.lane.b32.xlu0 %v165, 56
    %v497 = vpop.permute.xlu0 %496
    %v501 = vsel %vm267, %v492, 0
    %v504 = vsel %vm267, %v493, 0
    %506 = vmatprep.subr.mxu0 0.0
    %507 = vmatpush1.msra.mxu0 0.0
    %508 = vmatprep.subr.mxu0 0.0
    %509 = vmatpush1.msra.mxu0 0.0
    %510 = vmatprep.subr.mxu0 0.0
    %511 = vmatpush1.msra.mxu0 0.0
    %512 = vmatprep.subr.mxu0 0.0
    %513 = vmatpush1.msra.mxu0 0.0
    %514 = vmatprep.subr.mxu0 0.0
    %515 = vmatpush1.msra.mxu0 0.0
    %516 = vmatprep.subr.mxu0 0.0
    %517 = vmatpush1.msra.mxu0 0.0
    %518 = vmatprep.subr.mxu0 0.0
    %519 = vmatpush1.msra.mxu0 0.0
    %520 = vmatprep.subr.mxu0 0.0
    %521 = vmatpush1.msra.mxu0 0.0
    %522 = vmatprep.subr.mxu0 0.0
    %523 = vmatpush1.msra.mxu0 0.0
    %524 = vmatprep.subr.mxu0 0.0
    %525 = vmatpush1.msra.mxu0 0.0
    %526 = vmatprep.subr.mxu0 0.0
    %527 = vmatpush1.msra.mxu0 0.0
    %528 = vmatprep.subr.mxu0 0.0
    %529 = vmatpush1.msra.mxu0 0.0
    %530 = vmatprep.subr.mxu0 0.0
    %531 = vmatpush1.msra.mxu0 0.0
    %532 = vmatprep.subr.mxu0 0.0
    %533 = vmatpush1.msra.mxu0 0.0
    %534 = vmatprep.subr.mxu0 0.0
    %535 = vmatpush1.msra.mxu0 %v497
    %536 = vmatprep.subr.mxu0 0.0
    %537 = vmatpush1.msra.mxu0 %v495
    %538 = vmatprep.subr.mxu0 0.0
    %539 = vmatpush2.msra.mxu0 0.0
    %540 = vmatprep.subr.mxu0 0.0
    %541 = vmatpush2.msra.mxu0 0.0
    %542 = vmatprep.subr.mxu0 0.0
    %543 = vmatpush2.msra.mxu0 0.0
    %544 = vmatprep.subr.mxu0 0.0
    %545 = vmatpush2.msra.mxu0 0.0
    %546 = vmatprep.subr.mxu0 0.0
    %547 = vmatpush2.msra.mxu0 0.0
    %548 = vmatprep.subr.mxu0 0.0
    %549 = vmatpush2.msra.mxu0 0.0
    %550 = vmatprep.subr.mxu0 0.0
    %551 = vmatpush2.msra.mxu0 0.0
    %552 = vmatprep.subr.mxu0 0.0
    %553 = vmatpush2.msra.mxu0 0.0
    %554 = vmatprep.subr.mxu0 0.0
    %555 = vmatpush2.msra.mxu0 0.0
    %556 = vmatprep.subr.mxu0 0.0
    %557 = vmatpush2.msra.mxu0 0.0
    %558 = vmatprep.subr.mxu0 0.0
    %559 = vmatpush2.msra.mxu0 0.0
    %560 = vmatprep.subr.mxu0 0.0
    %561 = vmatpush2.msra.mxu0 0.0
    %562 = vmatprep.subr.mxu0 0.0
    %563 = vmatpush2.msra.mxu0 0.0
    %564 = vmatprep.subr.mxu0 0.0
    %565 = vmatpush2.msra.mxu0 0.0
    %566 = vmatprep.subr.mxu0 0.0
    %567 = vmatpush2.msra.mxu0 0.0
    %568 = vmatprep.subr.mxu0 0.0
    %569 = vmatpush2.msra.mxu0 0.0
    %570 = vmatprep.mubr.f32.mxu0 0.0
    %571 = vmatmul.mubr.f32.gmra.mxu0 %v501
    %v572 = vpop.f32.mrf.mxu0
    %v573 = vadd.f32 0.0, %v572
    %v574 = vpop.f32.mrf.mxu0
    %575 = vmatprep.mubr.f32.mxu0 0.0
    %576 = vmatmul.mubr.f32.gmra.mxu0 %v504
    %v577 = vpop.f32.mrf.mxu0
    %v578 = vadd.f32 0.0, %v577
    %v579 = vpop.f32.mrf.mxu0
    %580 = vdwg.mxu0
    %v582 = vsel %vm179, %v573, 0
    %v585 = vsel %vm179, %v578, 0
    %587 = vmatprep.subr.mxu0 0.0
    %588 = vmatpush1.msra.mxu0 0.0
    %589 = vmatprep.subr.mxu0 0.0
    %590 = vmatpush1.msra.mxu0 0.0
    %591 = vmatprep.subr.mxu0 0.0
    %592 = vmatpush1.msra.mxu0 0.0
    %593 = vmatprep.subr.mxu0 0.0
    %594 = vmatpush1.msra.mxu0 0.0
    %595 = vmatprep.subr.mxu0 0.0
    %596 = vmatpush1.msra.mxu0 0.0
    %597 = vmatprep.subr.mxu0 0.0
    %598 = vmatpush1.msra.mxu0 0.0
    %599 = vmatprep.subr.mxu0 0.0
    %600 = vmatpush1.msra.mxu0 0.0
    %601 = vmatprep.subr.mxu0 0.0
    %602 = vmatpush1.msra.mxu0 0.0
    %603 = vmatprep.subr.mxu0 0.0
    %604 = vmatpush1.msra.mxu0 0.0
    %605 = vmatprep.subr.mxu0 0.0
    %606 = vmatpush1.msra.mxu0 0.0
    %607 = vmatprep.subr.mxu0 0.0
    %608 = vmatpush1.msra.mxu0 0.0
    %609 = vmatprep.subr.mxu0 0.0
    %610 = vmatpush1.msra.mxu0 0.0
    %611 = vmatprep.subr.mxu0 0.0
    %612 = vmatpush1.msra.mxu0 0.0
    %613 = vmatprep.subr.mxu0 0.0
    %614 = vmatpush1.msra.mxu0 0.0
    %615 = vmatprep.subr.mxu0 0.0
    %616 = vmatpush1.msra.mxu0 0.0
    %617 = vmatprep.subr.mxu0 0.0
    %618 = vmatpush1.msra.mxu0 %v169
    %619 = vmatprep.subr.mxu0 0.0
    %620 = vmatpush2.msra.mxu0 0.0
    %621 = vmatprep.subr.mxu0 0.0
    %622 = vmatpush2.msra.mxu0 0.0
    %623 = vmatprep.subr.mxu0 0.0
    %624 = vmatpush2.msra.mxu0 0.0
    %625 = vmatprep.subr.mxu0 0.0
    %626 = vmatpush2.msra.mxu0 0.0
    %627 = vmatprep.subr.mxu0 0.0
    %628 = vmatpush2.msra.mxu0 0.0
    %629 = vmatprep.subr.mxu0 0.0
    %630 = vmatpush2.msra.mxu0 0.0
    %631 = vmatprep.subr.mxu0 0.0
    %632 = vmatpush2.msra.mxu0 0.0
    %633 = vmatprep.subr.mxu0 0.0
    %634 = vmatpush2.msra.mxu0 0.0
    %635 = vmatprep.subr.mxu0 0.0
    %636 = vmatpush2.msra.mxu0 0.0
    %637 = vmatprep.subr.mxu0 0.0
    %638 = vmatpush2.msra.mxu0 0.0
    %639 = vmatprep.subr.mxu0 0.0
    %640 = vmatpush2.msra.mxu0 0.0
    %641 = vmatprep.subr.mxu0 0.0
    %642 = vmatpush2.msra.mxu0 0.0
    %643 = vmatprep.subr.mxu0 0.0
    %644 = vmatpush2.msra.mxu0 0.0
    %645 = vmatprep.subr.mxu0 0.0
    %646 = vmatpush2.msra.mxu0 0.0
    %647 = vmatprep.subr.mxu0 0.0
    %648 = vmatpush2.msra.mxu0 0.0
    %649 = vmatprep.subr.mxu0 0.0
    %650 = vmatpush2.msra.mxu0 0.0
    %651 = vmatprep.mubr.f32.mxu0 0.0
    %652 = vmatmul.mubr.f32.gmra.mxu0 %v582
    %v653 = vpop.f32.mrf.mxu0
    %v654 = vadd.f32 0.0, %v653
    %v655 = vpop.f32.mrf.mxu0
    %656 = vmatprep.mubr.f32.mxu0 0.0
    %657 = vmatmul.mubr.f32.gmra.mxu0 %v585
    %v658 = vpop.f32.mrf.mxu0
    %v659 = vadd.f32 0.0, %v658
    %v660 = vpop.f32.mrf.mxu0
    %661 = vdwg.mxu0
    %v663 = vsel %vm179, %v369, 0
    %v666 = vsel %vm179, %v374, 0
    %668 = vmatprep.subr.mxu0 0.0
    %669 = vmatpush1.msra.mxu0 0.0
    %670 = vmatprep.subr.mxu0 0.0
    %671 = vmatpush1.msra.mxu0 0.0
    %672 = vmatprep.subr.mxu0 0.0
    %673 = vmatpush1.msra.mxu0 0.0
    %674 = vmatprep.subr.mxu0 0.0
    %675 = vmatpush1.msra.mxu0 0.0
    %676 = vmatprep.subr.mxu0 0.0
    %677 = vmatpush1.msra.mxu0 0.0
    %678 = vmatprep.subr.mxu0 0.0
    %679 = vmatpush1.msra.mxu0 0.0
    %680 = vmatprep.subr.mxu0 0.0
    %681 = vmatpush1.msra.mxu0 0.0
    %682 = vmatprep.subr.mxu0 0.0
    %683 = vmatpush1.msra.mxu0 0.0
    %684 = vmatprep.subr.mxu0 0.0
    %685 = vmatpush1.msra.mxu0 0.0
    %686 = vmatprep.subr.mxu0 0.0
    %687 = vmatpush1.msra.mxu0 0.0
    %688 = vmatprep.subr.mxu0 0.0
    %689 = vmatpush1.msra.mxu0 0.0
    %690 = vmatprep.subr.mxu0 0.0
    %691 = vmatpush1.msra.mxu0 0.0
    %692 = vmatprep.subr.mxu0 0.0
    %693 = vmatpush1.msra.mxu0 0.0
    %694 = vmatprep.subr.mxu0 0.0
    %695 = vmatpush1.msra.mxu0 0.0
    %696 = vmatprep.subr.mxu0 0.0
    %697 = vmatpush1.msra.mxu0 0.0
    %698 = vmatprep.subr.mxu0 0.0
    %699 = vmatpush1.msra.mxu0 %v168
    %700 = vmatprep.subr.mxu0 0.0
    %701 = vmatpush2.msra.mxu0 0.0
    %702 = vmatprep.subr.mxu0 0.0
    %703 = vmatpush2.msra.mxu0 0.0
    %704 = vmatprep.subr.mxu0 0.0
    %705 = vmatpush2.msra.mxu0 0.0
    %706 = vmatprep.subr.mxu0 0.0
    %707 = vmatpush2.msra.mxu0 0.0
    %708 = vmatprep.subr.mxu0 0.0
    %709 = vmatpush2.msra.mxu0 0.0
    %710 = vmatprep.subr.mxu0 0.0
    %711 = vmatpush2.msra.mxu0 0.0
    %712 = vmatprep.subr.mxu0 0.0
    %713 = vmatpush2.msra.mxu0 0.0
    %714 = vmatprep.subr.mxu0 0.0
    %715 = vmatpush2.msra.mxu0 0.0
    %716 = vmatprep.subr.mxu0 0.0
    %717 = vmatpush2.msra.mxu0 0.0
    %718 = vmatprep.subr.mxu0 0.0
    %719 = vmatpush2.msra.mxu0 0.0
    %720 = vmatprep.subr.mxu0 0.0
    %721 = vmatpush2.msra.mxu0 0.0
    %722 = vmatprep.subr.mxu0 0.0
    %723 = vmatpush2.msra.mxu0 0.0
    %724 = vmatprep.subr.mxu0 0.0
    %725 = vmatpush2.msra.mxu0 0.0
    %726 = vmatprep.subr.mxu0 0.0
    %727 = vmatpush2.msra.mxu0 0.0
    %728 = vmatprep.subr.mxu0 0.0
    %729 = vmatpush2.msra.mxu0 0.0
    %730 = vmatprep.subr.mxu0 0.0
    %731 = vmatpush2.msra.mxu0 0.0
    %732 = vmatprep.mubr.f32.mxu0 0.0
    %733 = vmatmul.mubr.f32.gmra.mxu0 %v663
    %v734 = vpop.f32.mrf.mxu0
    %v735 = vadd.f32 %v654, %v734
    %v736 = vpop.f32.mrf.mxu0
    %737 = vmatprep.mubr.f32.mxu0 0.0
    %738 = vmatmul.mubr.f32.gmra.mxu0 %v666
    %v739 = vpop.f32.mrf.mxu0
    %v740 = vadd.f32 %v659, %v739
    %v741 = vpop.f32.mrf.mxu0
    %742 = vdwg.mxu0
    %743 = vrot.lane.b32.xlu0 %v162, 112
    %v744 = vpop.permute.xlu0 %743
    %745 = vrot.lane.b32.xlu0 %v165, 112
    %v746 = vpop.permute.xlu0 %745
    %747 = vrot.lane.b32.xlu0 %v162, 80
    %v748 = vpop.permute.xlu0 %747
    %749 = vrot.lane.b32.xlu0 %v165, 80
    %v750 = vpop.permute.xlu0 %749
    %v751 = vsel %vm179, %v744, 0
    %v753 = vsel %vm179, %v746, 0
    %v755 = vsel %vm179, %v748, 0
    %v757 = vsel %vm179, %v750, 0
    %759 = vmatprep.subr.mxu0 0.0
    %760 = vmatpush1.xpose.msra.mxu0 0.0
    %761 = vmatprep.subr.mxu0 0.0
    %762 = vmatpush1.xpose.msra.mxu0 0.0
    %763 = vmatprep.subr.mxu0 0.0
    %764 = vmatpush1.xpose.msra.mxu0 0.0
    %765 = vmatprep.subr.mxu0 0.0
    %766 = vmatpush1.xpose.msra.mxu0 0.0
    %767 = vmatprep.subr.mxu0 0.0
    %768 = vmatpush1.xpose.msra.mxu0 0.0
    %769 = vmatprep.subr.mxu0 0.0
    %770 = vmatpush1.xpose.msra.mxu0 0.0
    %771 = vmatprep.subr.mxu0 0.0
    %772 = vmatpush1.xpose.msra.mxu0 0.0
    %773 = vmatprep.subr.mxu0 0.0
    %774 = vmatpush1.xpose.msra.mxu0 0.0
    %775 = vmatprep.subr.mxu0 0.0
    %776 = vmatpush1.xpose.msra.mxu0 0.0
    %777 = vmatprep.subr.mxu0 0.0
    %778 = vmatpush1.xpose.msra.mxu0 0.0
    %779 = vmatprep.subr.mxu0 0.0
    %780 = vmatpush1.xpose.msra.mxu0 0.0
    %781 = vmatprep.subr.mxu0 0.0
    %782 = vmatpush1.xpose.msra.mxu0 0.0
    %783 = vmatprep.subr.mxu0 0.0
    %784 = vmatpush1.xpose.msra.mxu0 0.0
    %785 = vmatprep.subr.mxu0 0.0
    %786 = vmatpush1.xpose.msra.mxu0 0.0
    %787 = vmatprep.subr.mxu0 0.0
    %788 = vmatpush1.xpose.msra.mxu0 %v757
    %789 = vmatprep.subr.mxu0 0.0
    %790 = vmatpush1.xpose.msra.mxu0 %v755
    %791 = vmatprep.subr.mxu0 0.0
    %792 = vmatpush2.xpose.msra.mxu0 0.0
    %793 = vmatprep.subr.mxu0 0.0
    %794 = vmatpush2.xpose.msra.mxu0 0.0
    %795 = vmatprep.subr.mxu0 0.0
    %796 = vmatpush2.xpose.msra.mxu0 0.0
    %797 = vmatprep.subr.mxu0 0.0
    %798 = vmatpush2.xpose.msra.mxu0 0.0
    %799 = vmatprep.subr.mxu0 0.0
    %800 = vmatpush2.xpose.msra.mxu0 0.0
    %801 = vmatprep.subr.mxu0 0.0
    %802 = vmatpush2.xpose.msra.mxu0 0.0
    %803 = vmatprep.subr.mxu0 0.0
    %804 = vmatpush2.xpose.msra.mxu0 0.0
    %805 = vmatprep.subr.mxu0 0.0
    %806 = vmatpush2.xpose.msra.mxu0 0.0
    %807 = vmatprep.subr.mxu0 0.0
    %808 = vmatpush2.xpose.msra.mxu0 0.0
    %809 = vmatprep.subr.mxu0 0.0
    %810 = vmatpush2.xpose.msra.mxu0 0.0
    %811 = vmatprep.subr.mxu0 0.0
    %812 = vmatpush2.xpose.msra.mxu0 0.0
    %813 = vmatprep.subr.mxu0 0.0
    %814 = vmatpush2.xpose.msra.mxu0 0.0
    %815 = vmatprep.subr.mxu0 0.0
    %816 = vmatpush2.xpose.msra.mxu0 0.0
    %817 = vmatprep.subr.mxu0 0.0
    %818 = vmatpush2.xpose.msra.mxu0 0.0
    %819 = vmatprep.subr.mxu0 0.0
    %820 = vmatpush2.xpose.msra.mxu0 0.0
    %821 = vmatprep.subr.mxu0 0.0
    %822 = vmatpush2.xpose.msra.mxu0 0.0
    %823 = vmatprep.mubr.f32.mxu0 0.0
    %824 = vmatmul.mubr.f32.gmra.mxu0 %v751
    %v825 = vpop.f32.mrf.mxu0
    %v826 = vadd.f32 0.0, %v825
    %v827 = vpop.f32.mrf.mxu0
    %828 = vmatprep.mubr.f32.mxu0 0.0
    %829 = vmatmul.mubr.f32.gmra.mxu0 %v753
    %v830 = vpop.f32.mrf.mxu0
    %v831 = vadd.f32 0.0, %v830
    %v832 = vpop.f32.mrf.mxu0
    %833 = vdwg.mxu0
    %v834 = vmul.f32 %v826, 0.35355338
    %v835 = vmul.f32 %v831, 0.35355338
    %v836 = vadd.f32 %v834, %v97
    %v837 = vadd.f32 %v835, %v98
    %v838 = vsel %vm267, %v836, -inf
    %839 = vmax.xlane.f32.xlu0 %v838
    %v840 = vpop.xlane.xlu0 %839
    %v841 = vsel %vm267, %v837, -inf
    %842 = vmax.xlane.f32.xlu0 %v841
    %v843 = vpop.xlane.xlu0 %842
    %v844 = vsub.f32 %v836, %v840
    %v845 = vsub.f32 %v837, %v843
    %v846 = vmul.f32 %v844, 1.442695
    %v847 = vpow.pop %v846
    %v848 = vmul.f32 %v845, 1.442695
    %v849 = vpow.pop %v848
    %v850 = vsel %vm267, %v847, 0.0
    %851 = vadd.xlane.f32.xlu0 %v850
    %v852 = vpop.xlane.xlu0 %851
    %v853 = vsel %vm267, %v849, 0.0
    %854 = vadd.xlane.f32.xlu0 %v853
    %v855 = vpop.xlane.xlu0 %854
    %v856 = vrcp.pop %v852
    %v857 = vrcp.pop %v855
    %v858 = vmul.f32 %v847, %v856
    %v859 = vmul.f32 %v849, %v857
    %860 = vrot.lane.b32.xlu0 %v162, 48
    %v861 = vpop.permute.xlu0 %860
    %862 = vrot.lane.b32.xlu0 %v165, 48
    %v863 = vpop.permute.xlu0 %862
    %v867 = vsel %vm267, %v858, 0
    %v870 = vsel %vm267, %v859, 0
    %872 = vmatprep.subr.mxu0 0.0
    %873 = vmatpush1.msra.mxu0 0.0
    %874 = vmatprep.subr.mxu0 0.0
    %875 = vmatpush1.msra.mxu0 0.0
    %876 = vmatprep.subr.mxu0 0.0
    %877 = vmatpush1.msra.mxu0 0.0
    %878 = vmatprep.subr.mxu0 0.0
    %879 = vmatpush1.msra.mxu0 0.0
    %880 = vmatprep.subr.mxu0 0.0
    %881 = vmatpush1.msra.mxu0 0.0
    %882 = vmatprep.subr.mxu0 0.0
    %883 = vmatpush1.msra.mxu0 0.0
    %884 = vmatprep.subr.mxu0 0.0
    %885 = vmatpush1.msra.mxu0 0.0
    %886 = vmatprep.subr.mxu0 0.0
    %887 = vmatpush1.msra.mxu0 0.0
    %888 = vmatprep.subr.mxu0 0.0
    %889 = vmatpush1.msra.mxu0 0.0
    %890 = vmatprep.subr.mxu0 0.0
    %891 = vmatpush1.msra.mxu0 0.0
    %892 = vmatprep.subr.mxu0 0.0
    %893 = vmatpush1.msra.mxu0 0.0
    %894 = vmatprep.subr.mxu0 0.0
    %895 = vmatpush1.msra.mxu0 0.0
    %896 = vmatprep.subr.mxu0 0.0
    %897 = vmatpush1.msra.mxu0 0.0
    %898 = vmatprep.subr.mxu0 0.0
    %899 = vmatpush1.msra.mxu0 0.0
    %900 = vmatprep.subr.mxu0 0.0
    %901 = vmatpush1.msra.mxu0 %v863
    %902 = vmatprep.subr.mxu0 0.0
    %903 = vmatpush1.msra.mxu0 %v861
    %904 = vmatprep.subr.mxu0 0.0
    %905 = vmatpush2.msra.mxu0 0.0
    %906 = vmatprep.subr.mxu0 0.0
    %907 = vmatpush2.msra.mxu0 0.0
    %908 = vmatprep.subr.mxu0 0.0
    %909 = vmatpush2.msra.mxu0 0.0
    %910 = vmatprep.subr.mxu0 0.0
    %911 = vmatpush2.msra.mxu0 0.0
    %912 = vmatprep.subr.mxu0 0.0
    %913 = vmatpush2.msra.mxu0 0.0
    %914 = vmatprep.subr.mxu0 0.0
    %915 = vmatpush2.msra.mxu0 0.0
    %916 = vmatprep.subr.mxu0 0.0
    %917 = vmatpush2.msra.mxu0 0.0
    %918 = vmatprep.subr.mxu0 0.0
    %919 = vmatpush2.msra.mxu0 0.0
    %920 = vmatprep.subr.mxu0 0.0
    %921 = vmatpush2.msra.mxu0 0.0
    %922 = vmatprep.subr.mxu0 0.0
    %923 = vmatpush2.msra.mxu0 0.0
    %924 = vmatprep.subr.mxu0 0.0
    %925 = vmatpush2.msra.mxu0 0.0
    %926 = vmatprep.subr.mxu0 0.0
    %927 = vmatpush2.msra.mxu0 0.0
    %928 = vmatprep.subr.mxu0 0.0
    %929 = vmatpush2.msra.mxu0 0.0
    %930 = vmatprep.subr.mxu0 0.0
    %931 = vmatpush2.msra.mxu0 0.0
    %932 = vmatprep.subr.mxu0 0.0
    %933 = vmatpush2.msra.mxu0 0.0
    %934 = vmatprep.subr.mxu0 0.0
    %935 = vmatpush2.msra.mxu0 0.0
    %936 = vmatprep.mubr.f32.mxu0 0.0
    %937 = vmatmul.mubr.f32.gmra.mxu0 %v867
    %v938 = vpop.f32.mrf.mxu0
    %v939 = vadd.f32 0.0, %v938
    %v940 = vpop.f32.mrf.mxu0
    %941 = vmatprep.mubr.f32.mxu0 0.0
    %942 = vmatmul.mubr.f32.gmra.mxu0 %v870
    %v943 = vpop.f32.mrf.mxu0
    %v944 = vadd.f32 0.0, %v943
    %v945 = vpop.f32.mrf.mxu0
    %946 = vdwg.mxu0
    %v948 = vsel %vm179, %v939, 0
    %v951 = vsel %vm179, %v944, 0
    %953 = vmatprep.subr.mxu0 0.0
    %954 = vmatpush1.msra.mxu0 0.0
    %955 = vmatprep.subr.mxu0 0.0
    %956 = vmatpush1.msra.mxu0 0.0
    %957 = vmatprep.subr.mxu0 0.0
    %958 = vmatpush1.msra.mxu0 0.0
    %959 = vmatprep.subr.mxu0 0.0
    %960 = vmatpush1.msra.mxu0 0.0
    %961 = vmatprep.subr.mxu0 0.0
    %962 = vmatpush1.msra.mxu0 0.0
    %963 = vmatprep.subr.mxu0 0.0
    %964 = vmatpush1.msra.mxu0 0.0
    %965 = vmatprep.subr.mxu0 0.0
    %966 = vmatpush1.msra.mxu0 0.0
    %967 = vmatprep.subr.mxu0 0.0
    %968 = vmatpush1.msra.mxu0 0.0
    %969 = vmatprep.subr.mxu0 0.0
    %970 = vmatpush1.msra.mxu0 0.0
    %971 = vmatprep.subr.mxu0 0.0
    %972 = vmatpush1.msra.mxu0 0.0
    %973 = vmatprep.subr.mxu0 0.0
    %974 = vmatpush1.msra.mxu0 0.0
    %975 = vmatprep.subr.mxu0 0.0
    %976 = vmatpush1.msra.mxu0 0.0
    %977 = vmatprep.subr.mxu0 0.0
    %978 = vmatpush1.msra.mxu0 0.0
    %979 = vmatprep.subr.mxu0 0.0
    %980 = vmatpush1.msra.mxu0 0.0
    %981 = vmatprep.subr.mxu0 0.0
    %982 = vmatpush1.msra.mxu0 0.0
    %983 = vmatprep.subr.mxu0 0.0
    %984 = vmatpush1.msra.mxu0 %v170
    %985 = vmatprep.subr.mxu0 0.0
    %986 = vmatpush2.msra.mxu0 0.0
    %987 = vmatprep.subr.mxu0 0.0
    %988 = vmatpush2.msra.mxu0 0.0
    %989 = vmatprep.subr.mxu0 0.0
    %990 = vmatpush2.msra.mxu0 0.0
    %991 = vmatprep.subr.mxu0 0.0
    %992 = vmatpush2.msra.mxu0 0.0
    %993 = vmatprep.subr.mxu0 0.0
    %994 = vmatpush2.msra.mxu0 0.0
    %995 = vmatprep.subr.mxu0 0.0
    %996 = vmatpush2.msra.mxu0 0.0
    %997 = vmatprep.subr.mxu0 0.0
    %998 = vmatpush2.msra.mxu0 0.0
    %999 = vmatprep.subr.mxu0 0.0
    %1000 = vmatpush2.msra.mxu0 0.0
    %1001 = vmatprep.subr.mxu0 0.0
    %1002 = vmatpush2.msra.mxu0 0.0
    %1003 = vmatprep.subr.mxu0 0.0
    %1004 = vmatpush2.msra.mxu0 0.0
    %1005 = vmatprep.subr.mxu0 0.0
    %1006 = vmatpush2.msra.mxu0 0.0
    %1007 = vmatprep.subr.mxu0 0.0
    %1008 = vmatpush2.msra.mxu0 0.0
    %1009 = vmatprep.subr.mxu0 0.0
    %1010 = vmatpush2.msra.mxu0 0.0
    %1011 = vmatprep.subr.mxu0 0.0
    %1012 = vmatpush2.msra.mxu0 0.0
    %1013 = vmatprep.subr.mxu0 0.0
    %1014 = vmatpush2.msra.mxu0 0.0
    %1015 = vmatprep.subr.mxu0 0.0
    %1016 = vmatpush2.msra.mxu0 0.0
    %1017 = vmatprep.mubr.f32.mxu0 0.0
    %1018 = vmatmul.mubr.f32.gmra.mxu0 %v948
    %v1019 = vpop.f32.mrf.mxu0
    %v1020 = vadd.f32 0.0, %v1019
    %v1021 = vpop.f32.mrf.mxu0
    %1022 = vmatprep.mubr.f32.mxu0 0.0
    %1023 = vmatmul.mubr.f32.gmra.mxu0 %v951
    %v1024 = vpop.f32.mrf.mxu0
    %v1025 = vadd.f32 0.0, %v1024
    %v1026 = vpop.f32.mrf.mxu0
    %1027 = vdwg.mxu0
    %v1028 = vadd.f32 %v735, %v1020
    %v1029 = vadd.f32 %v740, %v1025
    %1030 = vrot.lane.b32.xlu0 %v162, 104
    %v1031 = vpop.permute.xlu0 %1030
    %1032 = vrot.lane.b32.xlu0 %v165, 104
    %v1033 = vpop.permute.xlu0 %1032
    %1034 = vrot.lane.b32.xlu0 %v162, 72
    %v1035 = vpop.permute.xlu0 %1034
    %1036 = vrot.lane.b32.xlu0 %v165, 72
    %v1037 = vpop.permute.xlu0 %1036
    %v1038 = vsel %vm179, %v1031, 0
    %v1040 = vsel %vm179, %v1033, 0
    %v1042 = vsel %vm179, %v1035, 0
    %v1044 = vsel %vm179, %v1037, 0
    %1046 = vmatprep.subr.mxu0 0.0
    %1047 = vmatpush1.xpose.msra.mxu0 0.0
    %1048 = vmatprep.subr.mxu0 0.0
    %1049 = vmatpush1.xpose.msra.mxu0 0.0
    %1050 = vmatprep.subr.mxu0 0.0
    %1051 = vmatpush1.xpose.msra.mxu0 0.0
    %1052 = vmatprep.subr.mxu0 0.0
    %1053 = vmatpush1.xpose.msra.mxu0 0.0
    %1054 = vmatprep.subr.mxu0 0.0
    %1055 = vmatpush1.xpose.msra.mxu0 0.0
    %1056 = vmatprep.subr.mxu0 0.0
    %1057 = vmatpush1.xpose.msra.mxu0 0.0
    %1058 = vmatprep.subr.mxu0 0.0
    %1059 = vmatpush1.xpose.msra.mxu0 0.0
    %1060 = vmatprep.subr.mxu0 0.0
    %1061 = vmatpush1.xpose.msra.mxu0 0.0
    %1062 = vmatprep.subr.mxu0 0.0
    %1063 = vmatpush1.xpose.msra.mxu0 0.0
    %1064 = vmatprep.subr.mxu0 0.0
    %1065 = vmatpush1.xpose.msra.mxu0 0.0
    %1066 = vmatprep.subr.mxu0 0.0
    %1067 = vmatpush1.xpose.msra.mxu0 0.0
    %1068 = vmatprep.subr.mxu0 0.0
    %1069 = vmatpush1.xpose.msra.mxu0 0.0
    %1070 = vmatprep.subr.mxu0 0.0
    %1071 = vmatpush1.xpose.msra.mxu0 0.0
    %1072 = vmatprep.subr.mxu0 0.0
    %1073 = vmatpush1.xpose.msra.mxu0 0.0
    %1074 = vmatprep.subr.mxu0 0.0
    %1075 = vmatpush1.xpose.msra.mxu0 %v1044
    %1076 = vmatprep.subr.mxu0 0.0
    %1077 = vmatpush1.xpose.msra.mxu0 %v1042
    %1078 = vmatprep.subr.mxu0 0.0
    %1079 = vmatpush2.xpose.msra.mxu0 0.0
    %1080 = vmatprep.subr.mxu0 0.0
    %1081 = vmatpush2.xpose.msra.mxu0 0.0
    %1082 = vmatprep.subr.mxu0 0.0
    %1083 = vmatpush2.xpose.msra.mxu0 0.0
    %1084 = vmatprep.subr.mxu0 0.0
    %1085 = vmatpush2.xpose.msra.mxu0 0.0
    %1086 = vmatprep.subr.mxu0 0.0
    %1087 = vmatpush2.xpose.msra.mxu0 0.0
    %1088 = vmatprep.subr.mxu0 0.0
    %1089 = vmatpush2.xpose.msra.mxu0 0.0
    %1090 = vmatprep.subr.mxu0 0.0
    %1091 = vmatpush2.xpose.msra.mxu0 0.0
    %1092 = vmatprep.subr.mxu0 0.0
    %1093 = vmatpush2.xpose.msra.mxu0 0.0
    %1094 = vmatprep.subr.mxu0 0.0
    %1095 = vmatpush2.xpose.msra.mxu0 0.0
    %1096 = vmatprep.subr.mxu0 0.0
    %1097 = vmatpush2.xpose.msra.mxu0 0.0
    %1098 = vmatprep.subr.mxu0 0.0
    %1099 = vmatpush2.xpose.msra.mxu0 0.0
    %1100 = vmatprep.subr.mxu0 0.0
    %1101 = vmatpush2.xpose.msra.mxu0 0.0
    %1102 = vmatprep.subr.mxu0 0.0
    %1103 = vmatpush2.xpose.msra.mxu0 0.0
    %1104 = vmatprep.subr.mxu0 0.0
    %1105 = vmatpush2.xpose.msra.mxu0 0.0
    %1106 = vmatprep.subr.mxu0 0.0
    %1107 = vmatpush2.xpose.msra.mxu0 0.0
    %1108 = vmatprep.subr.mxu0 0.0
    %1109 = vmatpush2.xpose.msra.mxu0 0.0
    %1110 = vmatprep.mubr.f32.mxu0 0.0
    %1111 = vmatmul.mubr.f32.gmra.mxu0 %v1038
    %v1112 = vpop.f32.mrf.mxu0
    %v1113 = vadd.f32 0.0, %v1112
    %v1114 = vpop.f32.mrf.mxu0
    %1115 = vmatprep.mubr.f32.mxu0 0.0
    %1116 = vmatmul.mubr.f32.gmra.mxu0 %v1040
    %v1117 = vpop.f32.mrf.mxu0
    %v1118 = vadd.f32 0.0, %v1117
    %v1119 = vpop.f32.mrf.mxu0
    %1120 = vdwg.mxu0
    %v1121 = vmul.f32 %v1113, 0.35355338
    %v1122 = vmul.f32 %v1118, 0.35355338
    %v1123 = vadd.f32 %v1121, %v97
    %v1124 = vadd.f32 %v1122, %v98
    %v1125 = vsel %vm267, %v1123, -inf
    %1126 = vmax.xlane.f32.xlu0 %v1125
    %v1127 = vpop.xlane.xlu0 %1126
    %v1128 = vsel %vm267, %v1124, -inf
    %1129 = vmax.xlane.f32.xlu0 %v1128
    %v1130 = vpop.xlane.xlu0 %1129
    %v1131 = vsub.f32 %v1123, %v1127
    %v1132 = vsub.f32 %v1124, %v1130
    %v1133 = vmul.f32 %v1131, 1.442695
    %v1134 = vpow.pop %v1133
    %v1135 = vmul.f32 %v1132, 1.442695
    %v1136 = vpow.pop %v1135
    %v1137 = vsel %vm267, %v1134, 0.0
    %1138 = vadd.xlane.f32.xlu0 %v1137
    %v1139 = vpop.xlane.xlu0 %1138
    %v1140 = vsel %vm267, %v1136, 0.0
    %1141 = vadd.xlane.f32.xlu0 %v1140
    %v1142 = vpop.xlane.xlu0 %1141
    %v1143 = vrcp.pop %v1139
    %v1144 = vrcp.pop %v1142
    %v1145 = vmul.f32 %v1134, %v1143
    %v1146 = vmul.f32 %v1136, %v1144
    %1147 = vrot.lane.b32.xlu0 %v162, 40
    %v1148 = vpop.permute.xlu0 %1147
    %1149 = vrot.lane.b32.xlu0 %v165, 40
    %v1150 = vpop.permute.xlu0 %1149
    %v1154 = vsel %vm267, %v1145, 0
    %v1157 = vsel %vm267, %v1146, 0
    %1159 = vmatprep.subr.mxu0 0.0
    %1160 = vmatpush1.msra.mxu0 0.0
    %1161 = vmatprep.subr.mxu0 0.0
    %1162 = vmatpush1.msra.mxu0 0.0
    %1163 = vmatprep.subr.mxu0 0.0
    %1164 = vmatpush1.msra.mxu0 0.0
    %1165 = vmatprep.subr.mxu0 0.0
    %1166 = vmatpush1.msra.mxu0 0.0
    %1167 = vmatprep.subr.mxu0 0.0
    %1168 = vmatpush1.msra.mxu0 0.0
    %1169 = vmatprep.subr.mxu0 0.0
    %1170 = vmatpush1.msra.mxu0 0.0
    %1171 = vmatprep.subr.mxu0 0.0
    %1172 = vmatpush1.msra.mxu0 0.0
    %1173 = vmatprep.subr.mxu0 0.0
    %1174 = vmatpush1.msra.mxu0 0.0
    %1175 = vmatprep.subr.mxu0 0.0
    %1176 = vmatpush1.msra.mxu0 0.0
    %1177 = vmatprep.subr.mxu0 0.0
    %1178 = vmatpush1.msra.mxu0 0.0
    %1179 = vmatprep.subr.mxu0 0.0
    %1180 = vmatpush1.msra.mxu0 0.0
    %1181 = vmatprep.subr.mxu0 0.0
    %1182 = vmatpush1.msra.mxu0 0.0
    %1183 = vmatprep.subr.mxu0 0.0
    %1184 = vmatpush1.msra.mxu0 0.0
    %1185 = vmatprep.subr.mxu0 0.0
    %1186 = vmatpush1.msra.mxu0 0.0
    %1187 = vmatprep.subr.mxu0 0.0
    %1188 = vmatpush1.msra.mxu0 %v1150
    %1189 = vmatprep.subr.mxu0 0.0
    %1190 = vmatpush1.msra.mxu0 %v1148
    %1191 = vmatprep.subr.mxu0 0.0
    %1192 = vmatpush2.msra.mxu0 0.0
    %1193 = vmatprep.subr.mxu0 0.0
    %1194 = vmatpush2.msra.mxu0 0.0
    %1195 = vmatprep.subr.mxu0 0.0
    %1196 = vmatpush2.msra.mxu0 0.0
    %1197 = vmatprep.subr.mxu0 0.0
    %1198 = vmatpush2.msra.mxu0 0.0
    %1199 = vmatprep.subr.mxu0 0.0
    %1200 = vmatpush2.msra.mxu0 0.0
    %1201 = vmatprep.subr.mxu0 0.0
    %1202 = vmatpush2.msra.mxu0 0.0
    %1203 = vmatprep.subr.mxu0 0.0
    %1204 = vmatpush2.msra.mxu0 0.0
    %1205 = vmatprep.subr.mxu0 0.0
    %1206 = vmatpush2.msra.mxu0 0.0
    %1207 = vmatprep.subr.mxu0 0.0
    %1208 = vmatpush2.msra.mxu0 0.0
    %1209 = vmatprep.subr.mxu0 0.0
    %1210 = vmatpush2.msra.mxu0 0.0
    %1211 = vmatprep.subr.mxu0 0.0
    %1212 = vmatpush2.msra.mxu0 0.0
    %1213 = vmatprep.subr.mxu0 0.0
    %1214 = vmatpush2.msra.mxu0 0.0
    %1215 = vmatprep.subr.mxu0 0.0
    %1216 = vmatpush2.msra.mxu0 0.0
    %1217 = vmatprep.subr.mxu0 0.0
    %1218 = vmatpush2.msra.mxu0 0.0
    %1219 = vmatprep.subr.mxu0 0.0
    %1220 = vmatpush2.msra.mxu0 0.0
    %1221 = vmatprep.subr.mxu0 0.0
    %1222 = vmatpush2.msra.mxu0 0.0
    %1223 = vmatprep.mubr.f32.mxu0 0.0
    %1224 = vmatmul.mubr.f32.gmra.mxu0 %v1154
    %v1225 = vpop.f32.mrf.mxu0
    %v1226 = vadd.f32 0.0, %v1225
    %v1227 = vpop.f32.mrf.mxu0
    %1228 = vmatprep.mubr.f32.mxu0 0.0
    %1229 = vmatmul.mubr.f32.gmra.mxu0 %v1157
    %v1230 = vpop.f32.mrf.mxu0
    %v1231 = vadd.f32 0.0, %v1230
    %v1232 = vpop.f32.mrf.mxu0
    %1233 = vdwg.mxu0
    %v1235 = vsel %vm179, %v1226, 0
    %v1238 = vsel %vm179, %v1231, 0
    %1240 = vmatprep.subr.mxu0 0.0
    %1241 = vmatpush1.msra.mxu0 0.0
    %1242 = vmatprep.subr.mxu0 0.0
    %1243 = vmatpush1.msra.mxu0 0.0
    %1244 = vmatprep.subr.mxu0 0.0
    %1245 = vmatpush1.msra.mxu0 0.0
    %1246 = vmatprep.subr.mxu0 0.0
    %1247 = vmatpush1.msra.mxu0 0.0
    %1248 = vmatprep.subr.mxu0 0.0
    %1249 = vmatpush1.msra.mxu0 0.0
    %1250 = vmatprep.subr.mxu0 0.0
    %1251 = vmatpush1.msra.mxu0 0.0
    %1252 = vmatprep.subr.mxu0 0.0
    %1253 = vmatpush1.msra.mxu0 0.0
    %1254 = vmatprep.subr.mxu0 0.0
    %1255 = vmatpush1.msra.mxu0 0.0
    %1256 = vmatprep.subr.mxu0 0.0
    %1257 = vmatpush1.msra.mxu0 0.0
    %1258 = vmatprep.subr.mxu0 0.0
    %1259 = vmatpush1.msra.mxu0 0.0
    %1260 = vmatprep.subr.mxu0 0.0
    %1261 = vmatpush1.msra.mxu0 0.0
    %1262 = vmatprep.subr.mxu0 0.0
    %1263 = vmatpush1.msra.mxu0 0.0
    %1264 = vmatprep.subr.mxu0 0.0
    %1265 = vmatpush1.msra.mxu0 0.0
    %1266 = vmatprep.subr.mxu0 0.0
    %1267 = vmatpush1.msra.mxu0 0.0
    %1268 = vmatprep.subr.mxu0 0.0
    %1269 = vmatpush1.msra.mxu0 0.0
    %1270 = vmatprep.subr.mxu0 0.0
    %1271 = vmatpush1.msra.mxu0 %v171
    %1272 = vmatprep.subr.mxu0 0.0
    %1273 = vmatpush2.msra.mxu0 0.0
    %1274 = vmatprep.subr.mxu0 0.0
    %1275 = vmatpush2.msra.mxu0 0.0
    %1276 = vmatprep.subr.mxu0 0.0
    %1277 = vmatpush2.msra.mxu0 0.0
    %1278 = vmatprep.subr.mxu0 0.0
    %1279 = vmatpush2.msra.mxu0 0.0
    %1280 = vmatprep.subr.mxu0 0.0
    %1281 = vmatpush2.msra.mxu0 0.0
    %1282 = vmatprep.subr.mxu0 0.0
    %1283 = vmatpush2.msra.mxu0 0.0
    %1284 = vmatprep.subr.mxu0 0.0
    %1285 = vmatpush2.msra.mxu0 0.0
    %1286 = vmatprep.subr.mxu0 0.0
    %1287 = vmatpush2.msra.mxu0 0.0
    %1288 = vmatprep.subr.mxu0 0.0
    %1289 = vmatpush2.msra.mxu0 0.0
    %1290 = vmatprep.subr.mxu0 0.0
    %1291 = vmatpush2.msra.mxu0 0.0
    %1292 = vmatprep.subr.mxu0 0.0
    %1293 = vmatpush2.msra.mxu0 0.0
    %1294 = vmatprep.subr.mxu0 0.0
    %1295 = vmatpush2.msra.mxu0 0.0
    %1296 = vmatprep.subr.mxu0 0.0
    %1297 = vmatpush2.msra.mxu0 0.0
    %1298 = vmatprep.subr.mxu0 0.0
    %1299 = vmatpush2.msra.mxu0 0.0
    %1300 = vmatprep.subr.mxu0 0.0
    %1301 = vmatpush2.msra.mxu0 0.0
    %1302 = vmatprep.subr.mxu0 0.0
    %1303 = vmatpush2.msra.mxu0 0.0
    %1304 = vmatprep.mubr.f32.mxu0 0.0
    %1305 = vmatmul.mubr.f32.gmra.mxu0 %v1235
    %v1306 = vpop.f32.mrf.mxu0
    %v1307 = vadd.f32 0.0, %v1306
    %v1308 = vpop.f32.mrf.mxu0
    %1309 = vmatprep.mubr.f32.mxu0 0.0
    %1310 = vmatmul.mubr.f32.gmra.mxu0 %v1238
    %v1311 = vpop.f32.mrf.mxu0
    %v1312 = vadd.f32 0.0, %v1311
    %v1313 = vpop.f32.mrf.mxu0
    %1314 = vdwg.mxu0
    %v1315 = vadd.f32 %v1028, %v1307
    %v1316 = vadd.f32 %v1029, %v1312
    %v1317 = vlaneseq
    %v1318 = vshrl.u32 %v1317, 7
    %v1319 = vsub.s32 0, %v1318
    %v1320 = vrot.slane %v172, %v1319
    %v1321 = vadd.f32 %v1315, %v1320
    %v1322 = vadd.f32 %v1316, %v1320
    %v1323 = vadd.f32 %v95, %v1321
    %v1324 = vadd.f32 %v96, %v1322
    %v1325 = vsel %vm123, %v1323, 0.0
    %1326 = vadd.xlane.f32.xlu0 %v1325
    %v1327 = vpop.xlane.xlu0 %1326
    %v1328 = vsel %vm123, %v1324, 0.0
    %1329 = vadd.xlane.f32.xlu0 %v1328
    %v1330 = vpop.xlane.xlu0 %1329
    %v1331 = vrcp.pop 32.0
    %v1332 = vmul.f32 %v1327, %v1331
    %v1333 = vmul.f32 %v1330, %v1331
    %v1334 = vsub.f32 %v1323, %v1332
    %v1335 = vsub.f32 %v1324, %v1333
    %v1336 = vmul.f32 %v1334, %v1334
    %v1337 = vmul.f32 %v1335, %v1335
    %v1338 = vsel %vm123, %v1336, 0.0
    %1339 = vadd.xlane.f32.xlu0 %v1338
    %v1340 = vpop.xlane.xlu0 %1339
    %v1341 = vsel %vm123, %v1337, 0.0
    %1342 = vadd.xlane.f32.xlu0 %v1341
    %v1343 = vpop.xlane.xlu0 %1342
    %v1344 = vmul.f32 %v1340, %v1331
    %v1345 = vmul.f32 %v1343, %v1331
    %v1346 = vadd.f32 %v1344, 1e-05
    %v1347 = vadd.f32 %v1345, 1e-05
    %v1348 = vrsqrt.pop %v1346
    %v1349 = vrsqrt.pop %v1347
    %v1350 = vmul.f32 %v1334, %v1348
    %v1351 = vmul.f32 %v1335, %v1349
    %v1352 = vlaneseq
    %v1353 = vshrl.u32 %v1352, 7
    %v1354 = vsub.s32 1, %v1353
    %v1355 = vrot.slane %v172, %v1354
    %v1356 = vmul.f32 %v1350, %v1355
    %v1357 = vmul.f32 %v1351, %v1355
    %v1358 = vlaneseq
    %v1359 = vshrl.u32 %v1358, 7
    %v1360 = vsub.s32 2, %v1359
    %v1361 = vrot.slane %v172, %v1360
    %v1362 = vadd.f32 %v1356, %v1361
    %v1363 = vadd.f32 %v1357, %v1361
    %v1364 = vpack.c.bf16 %v1363, %v1362
    %v1365 = vld [vmem:[#allocation7] sm:$0xf]
    %v1366 = vld [vmem:[#allocation7 + $0x4] sm:$0xf]
    %v1367 = vld [vmem:[#allocation7 + $0x8] sm:$0xf]
    %v1368 = vld [vmem:[#allocation7 + $0xc] sm:$0xf]
    %v1369 = vld [vmem:[%s6] sm:$0x1]
    %v1371 = vlaneseq
    %v1372 = vshrl.u32 %v1371, 7
    %v1373 = vsub.s32 0, %v1372
    %v1374 = vrot.slane %v1369, %v1373
    %v1380 = vunpack.c.l.b16 %v1365
    %v1381 = vunpack.c.l.b16 %v1366
    %v1382 = vunpack.c.l.b16 %v1367
    %v1383 = vunpack.c.l.b16 %v1368
    %v1384 = vpack.c.b16 %v1381, %v1380
    %v1385 = vpack.c.b16 %v1383, %v1382
    %v1389 = vsel %vm123, %v1364, 0
    %1391 = vmatprep.subr.bf16.mxu0 0
    %1392 = vmatpush1.bf16.msra.mxu0 0
    %1393 = vmatprep.subr.bf16.mxu0 0
    %1394 = vmatpush1.bf16.msra.mxu0 0
    %1395 = vmatprep.subr.bf16.mxu0 0
    %1396 = vmatpush1.bf16.msra.mxu0 0
    %1397 = vmatprep.subr.bf16.mxu0 0
    %1398 = vmatpush1.bf16.msra.mxu0 0
    %1399 = vmatprep.subr.bf16.mxu0 0
    %1400 = vmatpush1.bf16.msra.mxu0 0
    %1401 = vmatprep.subr.bf16.mxu0 0
    %1402 = vmatpush1.bf16.msra.mxu0 0
    %1403 = vmatprep.subr.bf16.mxu0 0
    %1404 = vmatpush1.bf16.msra.mxu0 %v1385
    %1405 = vmatprep.subr.bf16.mxu0 0
    %1406 = vmatpush1.bf16.msra.mxu0 %v1384
    %1407 = vmatprep.subr.bf16.mxu0 0
    %1408 = vmatpush2.bf16.msra.mxu0 0
    %1409 = vmatprep.subr.bf16.mxu0 0
    %1410 = vmatpush2.bf16.msra.mxu0 0
    %1411 = vmatprep.subr.bf16.mxu0 0
    %1412 = vmatpush2.bf16.msra.mxu0 0
    %1413 = vmatprep.subr.bf16.mxu0 0
    %1414 = vmatpush2.bf16.msra.mxu0 0
    %1415 = vmatprep.subr.bf16.mxu0 0
    %1416 = vmatpush2.bf16.msra.mxu0 0
    %1417 = vmatprep.subr.bf16.mxu0 0
    %1418 = vmatpush2.bf16.msra.mxu0 0
    %1419 = vmatprep.subr.bf16.mxu0 0
    %1420 = vmatpush2.bf16.msra.mxu0 0
    %1421 = vmatprep.subr.bf16.mxu0 0
    %1422 = vmatpush2.bf16.msra.mxu0 0
    %1423 = vmatprep.mubr.bf16.mxu0 0
    %1424 = vmatmul.mubr.bf16.gmra.mxu0 %v1389
    %v1425 = vpop.f32.mrf.mxu0
    %v1426 = vadd.f32 %v1374, %v1425
    %v1427 = vpop.f32.mrf.mxu0
    %v1428 = vpop.f32.mrf.mxu0
    %v1429 = vadd.f32 %v1374, %v1428
    %v1430 = vpop.f32.mrf.mxu0
    %1431 = vdwg.mxu0
    %v1432 = vmul.f32 %v1426, %v1426
    %v1433 = vmul.f32 %v1429, %v1429
    %v1434 = vmul.f32 %v1426, %v1432
    %v1435 = vmul.f32 %v1429, %v1433
    %v1436 = vmul.f32 %v1434, 0.044715
    %v1437 = vmul.f32 %v1435, 0.044715
    %v1438 = vadd.f32 %v1426, %v1436
    %v1439 = vadd.f32 %v1429, %v1437
    %v1440 = vmul.f32 %v1438, 0.7978846
    %v1441 = vmul.f32 %v1439, 0.7978846
    %v1442 = vtanh.pop %v1440
    %v1443 = vtanh.pop %v1441
    %v1444 = vadd.f32 %v1442, 1.0
    %v1445 = vadd.f32 %v1443, 1.0
    %v1446 = vmul.f32 %v1444, 0.5
    %v1447 = vmul.f32 %v1445, 0.5
    %v1448 = vmul.f32 %v1426, %v1446
    %v1449 = vmul.f32 %v1429, %v1447
    %v1450 = vpack.c.bf16 %v1449, %v1448
    %v1451 = vld [vmem:[%s8] sm:$0xf]
    %v1452 = vld [vmem:[%s8 + $0x4] sm:$0xf]
    %v1453 = vld [vmem:[%s8 + $0x8] sm:$0xf]
    %v1454 = vld [vmem:[%s8 + $0xc] sm:$0xf]
    %v1455 = vld [vmem:[%s8 + $0x10] sm:$0xf]
    %v1456 = vld [vmem:[%s8 + $0x14] sm:$0xf]
    %v1457 = vld [vmem:[%s8 + $0x18] sm:$0xf]
    %v1458 = vld [vmem:[%s8 + $0x1c] sm:$0xf]
    %v1459 = vlaneseq
    %v1460 = vshrl.u32 %v1459, 7
    %v1461 = vsub.s32 3, %v1460
    %v1462 = vrot.slane %v172, %v1461
    %v1471 = vunpack.c.l.b16 %v1451
    %v1472 = vunpack.c.l.b16 %v1452
    %v1473 = vunpack.c.l.b16 %v1453
    %v1474 = vunpack.c.l.b16 %v1454
    %v1475 = vunpack.c.l.b16 %v1455
    %v1476 = vunpack.c.l.b16 %v1456
    %v1477 = vunpack.c.l.b16 %v1457
    %v1478 = vunpack.c.l.b16 %v1458
    %v1479 = vpack.c.b16 %v1472, %v1471
    %v1480 = vpack.c.b16 %v1474, %v1473
    %v1481 = vpack.c.b16 %v1476, %v1475
    %v1482 = vpack.c.b16 %v1478, %v1477
    %vm1487 = vcmask 523264
    %v1489 = vsel %vm1487, %v1450, 0
    %1491 = vmatprep.subr.bf16.mxu0 0
    %1492 = vmatpush1.bf16.msra.mxu0 0
    %1493 = vmatprep.subr.bf16.mxu0 0
    %1494 = vmatpush1.bf16.msra.mxu0 0
    %1495 = vmatprep.subr.bf16.mxu0 0
    %1496 = vmatpush1.bf16.msra.mxu0 0
    %1497 = vmatprep.subr.bf16.mxu0 0
    %1498 = vmatpush1.bf16.msra.mxu0 0
    %1499 = vmatprep.subr.bf16.mxu0 0
    %1500 = vmatpush1.bf16.msra.mxu0 %v1482
    %1501 = vmatprep.subr.bf16.mxu0 0
    %1502 = vmatpush1.bf16.msra.mxu0 %v1481
    %1503 = vmatprep.subr.bf16.mxu0 0
    %1504 = vmatpush1.bf16.msra.mxu0 %v1480
    %1505 = vmatprep.subr.bf16.mxu0 0
    %1506 = vmatpush1.bf16.msra.mxu0 %v1479
    %1507 = vmatprep.subr.bf16.mxu0 0
    %1508 = vmatpush2.bf16.msra.mxu0 0
    %1509 = vmatprep.subr.bf16.mxu0 0
    %1510 = vmatpush2.bf16.msra.mxu0 0
    %1511 = vmatprep.subr.bf16.mxu0 0
    %1512 = vmatpush2.bf16.msra.mxu0 0
    %1513 = vmatprep.subr.bf16.mxu0 0
    %1514 = vmatpush2.bf16.msra.mxu0 0
    %1515 = vmatprep.subr.bf16.mxu0 0
    %1516 = vmatpush2.bf16.msra.mxu0 0
    %1517 = vmatprep.subr.bf16.mxu0 0
    %1518 = vmatpush2.bf16.msra.mxu0 0
    %1519 = vmatprep.subr.bf16.mxu0 0
    %1520 = vmatpush2.bf16.msra.mxu0 0
    %1521 = vmatprep.subr.bf16.mxu0 0
    %1522 = vmatpush2.bf16.msra.mxu0 0
    %1523 = vmatprep.mubr.bf16.mxu0 0
    %1524 = vmatmul.mubr.bf16.gmra.mxu0 %v1489
    %v1525 = vpop.f32.mrf.mxu0
    %v1526 = vadd.f32 %v1462, %v1525
    %v1527 = vpop.f32.mrf.mxu0
    %v1528 = vpop.f32.mrf.mxu0
    %v1529 = vadd.f32 %v1462, %v1528
    %v1530 = vpop.f32.mrf.mxu0
    %1531 = vdwg.mxu0
    %v1532 = vadd.f32 %v1362, %v1526
    %v1533 = vadd.f32 %v1363, %v1529
    %v1534 = vsel %vm123, %v1532, 0.0
    %1535 = vadd.xlane.f32.xlu0 %v1534
    %v1536 = vpop.xlane.xlu0 %1535
    %v1537 = vsel %vm123, %v1533, 0.0
    %1538 = vadd.xlane.f32.xlu0 %v1537
    %v1539 = vpop.xlane.xlu0 %1538
    %v1540 = vmul.f32 %v1536, %v1331
    %v1541 = vmul.f32 %v1539, %v1331
    %v1542 = vsub.f32 %v1532, %v1540
    %v1543 = vsub.f32 %v1533, %v1541
    %v1544 = vmul.f32 %v1542, %v1542
    %v1545 = vmul.f32 %v1543, %v1543
    %v1546 = vsel %vm123, %v1544, 0.0
    %1547 = vadd.xlane.f32.xlu0 %v1546
    %v1548 = vpop.xlane.xlu0 %1547
    %v1549 = vsel %vm123, %v1545, 0.0
    %1550 = vadd.xlane.f32.xlu0 %v1549
    %v1551 = vpop.xlane.xlu0 %1550
    %v1552 = vmul.f32 %v1548, %v1331
    %v1553 = vmul.f32 %v1551, %v1331
    %v1554 = vadd.f32 %v1552, 1e-05
    %v1555 = vadd.f32 %v1553, 1e-05
    %v1556 = vrsqrt.pop %v1554
    %v1557 = vrsqrt.pop %v1555
    %v1558 = vmul.f32 %v1542, %v1556
    %v1559 = vmul.f32 %v1543, %v1557
    %v1560 = vlaneseq
    %v1561 = vshrl.u32 %v1560, 7
    %v1562 = vsub.s32 4, %v1561
    %v1563 = vrot.slane %v172, %v1562
    %v1564 = vmul.f32 %v1558, %v1563
    %v1565 = vmul.f32 %v1559, %v1563
    %v1566 = vlaneseq
    %v1567 = vshrl.u32 %v1566, 7
    %v1568 = vsub.s32 5, %v1567
    %v1569 = vrot.slane %v172, %v1568
    %v1570 = vadd.f32 %v1564, %v1569
    %v1571 = vadd.f32 %v1565, %v1569
    %v1572 = vpack.c.bf16 %v1571, %v1570
    %s1573 = scalar_lea.vmem %s2, 16
    %v1574 = vld [vmem:[%s1573] sm:$0xf]
    %v1575 = vld [vmem:[%s1573 + $0x4] sm:$0xf]
    %v1576 = vld [vmem:[%s1573 + $0x8] sm:$0xf]
    %v1577 = vld [vmem:[%s1573 + $0xc] sm:$0xf]
    %s1578 = scalar_lea.vmem %s3, 1
    %v1579 = vld [vmem:[%s1578] sm:$0x1]
    %v1581 = vlaneseq
    %v1582 = vshrl.u32 %v1581, 7
    %v1583 = vsub.s32 0, %v1582
    %v1584 = vrot.slane %v1579, %v1583
    %v1590 = vunpack.c.l.b16 %v1574
    %v1591 = vunpack.c.l.b16 %v1575
    %v1592 = vunpack.c.l.b16 %v1576
    %v1593 = vunpack.c.l.b16 %v1577
    %v1594 = vpack.c.b16 %v1591, %v1590
    %v1595 = vpack.c.b16 %v1593, %v1592
    %v1599 = vsel %vm123, %v1572, 0
    %1601 = vmatprep.subr.bf16.mxu0 0
    %1602 = vmatpush1.bf16.msra.mxu0 0
    %1603 = vmatprep.subr.bf16.mxu0 0
    %1604 = vmatpush1.bf16.msra.mxu0 0
    %1605 = vmatprep.subr.bf16.mxu0 0
    %1606 = vmatpush1.bf16.msra.mxu0 0
    %1607 = vmatprep.subr.bf16.mxu0 0
    %1608 = vmatpush1.bf16.msra.mxu0 0
    %1609 = vmatprep.subr.bf16.mxu0 0
    %1610 = vmatpush1.bf16.msra.mxu0 0
    %1611 = vmatprep.subr.bf16.mxu0 0
    %1612 = vmatpush1.bf16.msra.mxu0 0
    %1613 = vmatprep.subr.bf16.mxu0 0
    %1614 = vmatpush1.bf16.msra.mxu0 %v1595
    %1615 = vmatprep.subr.bf16.mxu0 0
    %1616 = vmatpush1.bf16.msra.mxu0 %v1594
    %1617 = vmatprep.subr.bf16.mxu0 0
    %1618 = vmatpush2.bf16.msra.mxu0 0
    %1619 = vmatprep.subr.bf16.mxu0 0
    %1620 = vmatpush2.bf16.msra.mxu0 0
    %1621 = vmatprep.subr.bf16.mxu0 0
    %1622 = vmatpush2.bf16.msra.mxu0 0
    %1623 = vmatprep.subr.bf16.mxu0 0
    %1624 = vmatpush2.bf16.msra.mxu0 0
    %1625 = vmatprep.subr.bf16.mxu0 0
    %1626 = vmatpush2.bf16.msra.mxu0 0
    %1627 = vmatprep.subr.bf16.mxu0 0
    %1628 = vmatpush2.bf16.msra.mxu0 0
    %1629 = vmatprep.subr.bf16.mxu0 0
    %1630 = vmatpush2.bf16.msra.mxu0 0
    %1631 = vmatprep.subr.bf16.mxu0 0
    %1632 = vmatpush2.bf16.msra.mxu0 0
    %1633 = vmatprep.mubr.bf16.mxu0 0
    %1634 = vmatmul.mubr.bf16.gmra.mxu0 %v1599
    %v1635 = vpop.f32.mrf.mxu0
    %v1636 = vadd.f32 %v1584, %v1635
    %v1637 = vpop.f32.mrf.mxu0
    %v1638 = vpop.f32.mrf.mxu0
    %v1639 = vadd.f32 %v1584, %v1638
    %v1640 = vpop.f32.mrf.mxu0
    %1641 = vdwg.mxu0
    %s1642 = scalar_lea.vmem %s4, 32
    %v1643 = vld [vmem:[%s1642] sm:$0xff]
    %v1644 = vld [vmem:[%s1642 + $0x8] sm:$0xff]
    %v1645 = vld [vmem:[%s1642 + $0x10] sm:$0xff]
    %v1646 = vld [vmem:[%s1642 + $0x18] sm:$0xff]
    %s1647 = scalar_lea.vmem %s5, 8
    %v1648 = vld [vmem:[%s1647] sm:$0x3f]
    %1651 = vrot.lane.b32.xlu0 %v1636, 96
    %v1652 = vpop.permute.xlu0 %1651
    %1653 = vrot.lane.b32.xlu0 %v1639, 96
    %v1654 = vpop.permute.xlu0 %1653
    %v1655 = vsel %vm179, %v1636, 0
    %v1657 = vsel %vm179, %v1639, 0
    %v1659 = vsel %vm179, %v1652, 0
    %v1661 = vsel %vm179, %v1654, 0
    %1663 = vmatprep.subr.mxu0 0.0
    %1664 = vmatpush1.xpose.msra.mxu0 0.0
    %1665 = vmatprep.subr.mxu0 0.0
    %1666 = vmatpush1.xpose.msra.mxu0 0.0
    %1667 = vmatprep.subr.mxu0 0.0
    %1668 = vmatpush1.xpose.msra.mxu0 0.0
    %1669 = vmatprep.subr.mxu0 0.0
    %1670 = vmatpush1.xpose.msra.mxu0 0.0
    %1671 = vmatprep.subr.mxu0 0.0
    %1672 = vmatpush1.xpose.msra.mxu0 0.0
    %1673 = vmatprep.subr.mxu0 0.0
    %1674 = vmatpush1.xpose.msra.mxu0 0.0
    %1675 = vmatprep.subr.mxu0 0.0
    %1676 = vmatpush1.xpose.msra.mxu0 0.0
    %1677 = vmatprep.subr.mxu0 0.0
    %1678 = vmatpush1.xpose.msra.mxu0 0.0
    %1679 = vmatprep.subr.mxu0 0.0
    %1680 = vmatpush1.xpose.msra.mxu0 0.0
    %1681 = vmatprep.subr.mxu0 0.0
    %1682 = vmatpush1.xpose.msra.mxu0 0.0
    %1683 = vmatprep.subr.mxu0 0.0
    %1684 = vmatpush1.xpose.msra.mxu0 0.0
    %1685 = vmatprep.subr.mxu0 0.0
    %1686 = vmatpush1.xpose.msra.mxu0 0.0
    %1687 = vmatprep.subr.mxu0 0.0
    %1688 = vmatpush1.xpose.msra.mxu0 0.0
    %1689 = vmatprep.subr.mxu0 0.0
    %1690 = vmatpush1.xpose.msra.mxu0 0.0
    %1691 = vmatprep.subr.mxu0 0.0
    %1692 = vmatpush1.xpose.msra.mxu0 %v1661
    %1693 = vmatprep.subr.mxu0 0.0
    %1694 = vmatpush1.xpose.msra.mxu0 %v1659
    %1695 = vmatprep.subr.mxu0 0.0
    %1696 = vmatpush2.xpose.msra.mxu0 0.0
    %1697 = vmatprep.subr.mxu0 0.0
    %1698 = vmatpush2.xpose.msra.mxu0 0.0
    %1699 = vmatprep.subr.mxu0 0.0
    %1700 = vmatpush2.xpose.msra.mxu0 0.0
    %1701 = vmatprep.subr.mxu0 0.0
    %1702 = vmatpush2.xpose.msra.mxu0 0.0
    %1703 = vmatprep.subr.mxu0 0.0
    %1704 = vmatpush2.xpose.msra.mxu0 0.0
    %1705 = vmatprep.subr.mxu0 0.0
    %1706 = vmatpush2.xpose.msra.mxu0 0.0
    %1707 = vmatprep.subr.mxu0 0.0
    %1708 = vmatpush2.xpose.msra.mxu0 0.0
    %1709 = vmatprep.subr.mxu0 0.0
    %1710 = vmatpush2.xpose.msra.mxu0 0.0
    %1711 = vmatprep.subr.mxu0 0.0
    %1712 = vmatpush2.xpose.msra.mxu0 0.0
    %1713 = vmatprep.subr.mxu0 0.0
    %1714 = vmatpush2.xpose.msra.mxu0 0.0
    %1715 = vmatprep.subr.mxu0 0.0
    %1716 = vmatpush2.xpose.msra.mxu0 0.0
    %1717 = vmatprep.subr.mxu0 0.0
    %1718 = vmatpush2.xpose.msra.mxu0 0.0
    %1719 = vmatprep.subr.mxu0 0.0
    %1720 = vmatpush2.xpose.msra.mxu0 0.0
    %1721 = vmatprep.subr.mxu0 0.0
    %1722 = vmatpush2.xpose.msra.mxu0 0.0
    %1723 = vmatprep.subr.mxu0 0.0
    %1724 = vmatpush2.xpose.msra.mxu0 0.0
    %1725 = vmatprep.subr.mxu0 0.0
    %1726 = vmatpush2.xpose.msra.mxu0 0.0
    %1727 = vmatprep.mubr.f32.mxu0 0.0
    %1728 = vmatmul.mubr.f32.gmra.mxu0 %v1655
    %v1729 = vpop.f32.mrf.mxu0
    %v1730 = vadd.f32 0.0, %v1729
    %v1731 = vpop.f32.mrf.mxu0
    %1732 = vmatprep.mubr.f32.mxu0 0.0
    %1733 = vmatmul.mubr.f32.gmra.mxu0 %v1657
    %v1734 = vpop.f32.mrf.mxu0
    %v1735 = vadd.f32 0.0, %v1734
    %v1736 = vpop.f32.mrf.mxu0
    %1737 = vdwg.mxu0
    %v1738 = vmul.f32 %v1730, 0.35355338
    %v1739 = vmul.f32 %v1735, 0.35355338
    %v1740 = vadd.f32 %v1738, %v97
    %v1741 = vadd.f32 %v1739, %v98
    %v1742 = vsel %vm267, %v1740, -inf
    %1743 = vmax.xlane.f32.xlu0 %v1742
    %v1744 = vpop.xlane.xlu0 %1743
    %v1745 = vsel %vm267, %v1741, -inf
    %1746 = vmax.xlane.f32.xlu0 %v1745
    %v1747 = vpop.xlane.xlu0 %1746
    %v1748 = vsub.f32 %v1740, %v1744
    %v1749 = vsub.f32 %v1741, %v1747
    %v1750 = vmul.f32 %v1748, 1.442695
    %v1751 = vpow.pop %v1750
    %v1752 = vmul.f32 %v1749, 1.442695
    %v1753 = vpow.pop %v1752
    %v1754 = vsel %vm267, %v1751, 0.0
    %1755 = vadd.xlane.f32.xlu0 %v1754
    %v1756 = vpop.xlane.xlu0 %1755
    %v1757 = vsel %vm267, %v1753, 0.0
    %1758 = vadd.xlane.f32.xlu0 %v1757
    %v1759 = vpop.xlane.xlu0 %1758
    %v1760 = vrcp.pop %v1756
    %v1761 = vrcp.pop %v1759
    %v1762 = vmul.f32 %v1751, %v1760
    %v1763 = vmul.f32 %v1753, %v1761
    %1764 = vrot.lane.b32.xlu0 %v1636, 64
    %v1765 = vpop.permute.xlu0 %1764
    %1766 = vrot.lane.b32.xlu0 %v1639, 64
    %v1767 = vpop.permute.xlu0 %1766
    %v1771 = vsel %vm267, %v1762, 0
    %v1774 = vsel %vm267, %v1763, 0
    %1776 = vmatprep.subr.mxu0 0.0
    %1777 = vmatpush1.msra.mxu0 0.0
    %1778 = vmatprep.subr.mxu0 0.0
    %1779 = vmatpush1.msra.mxu0 0.0
    %1780 = vmatprep.subr.mxu0 0.0
    %1781 = vmatpush1.msra.mxu0 0.0
    %1782 = vmatprep.subr.mxu0 0.0
    %1783 = vmatpush1.msra.mxu0 0.0
    %1784 = vmatprep.subr.mxu0 0.0
    %1785 = vmatpush1.msra.mxu0 0.0
    %1786 = vmatprep.subr.mxu0 0.0
    %1787 = vmatpush1.msra.mxu0 0.0
    %1788 = vmatprep.subr.mxu0 0.0
    %1789 = vmatpush1.msra.mxu0 0.0
    %1790 = vmatprep.subr.mxu0 0.0
    %1791 = vmatpush1.msra.mxu0 0.0
    %1792 = vmatprep.subr.mxu0 0.0
    %1793 = vmatpush1.msra.mxu0 0.0
    %1794 = vmatprep.subr.mxu0 0.0
    %1795 = vmatpush1.msra.mxu0 0.0
    %1796 = vmatprep.subr.mxu0 0.0
    %1797 = vmatpush1.msra.mxu0 0.0
    %1798 = vmatprep.subr.mxu0 0.0
    %1799 = vmatpush1.msra.mxu0 0.0
    %1800 = vmatprep.subr.mxu0 0.0
    %1801 = vmatpush1.msra.mxu0 0.0
    %1802 = vmatprep.subr.mxu0 0.0
    %1803 = vmatpush1.msra.mxu0 0.0
    %1804 = vmatprep.subr.mxu0 0.0
    %1805 = vmatpush1.msra.mxu0 %v1767
    %1806 = vmatprep.subr.mxu0 0.0
    %1807 = vmatpush1.msra.mxu0 %v1765
    %1808 = vmatprep.subr.mxu0 0.0
    %1809 = vmatpush2.msra.mxu0 0.0
    %1810 = vmatprep.subr.mxu0 0.0
    %1811 = vmatpush2.msra.mxu0 0.0
    %1812 = vmatprep.subr.mxu0 0.0
    %1813 = vmatpush2.msra.mxu0 0.0
    %1814 = vmatprep.subr.mxu0 0.0
    %1815 = vmatpush2.msra.mxu0 0.0
    %1816 = vmatprep.subr.mxu0 0.0
    %1817 = vmatpush2.msra.mxu0 0.0
    %1818 = vmatprep.subr.mxu0 0.0
    %1819 = vmatpush2.msra.mxu0 0.0
    %1820 = vmatprep.subr.mxu0 0.0
    %1821 = vmatpush2.msra.mxu0 0.0
    %1822 = vmatprep.subr.mxu0 0.0
    %1823 = vmatpush2.msra.mxu0 0.0
    %1824 = vmatprep.subr.mxu0 0.0
    %1825 = vmatpush2.msra.mxu0 0.0
    %1826 = vmatprep.subr.mxu0 0.0
    %1827 = vmatpush2.msra.mxu0 0.0
    %1828 = vmatprep.subr.mxu0 0.0
    %1829 = vmatpush2.msra.mxu0 0.0
    %1830 = vmatprep.subr.mxu0 0.0
    %1831 = vmatpush2.msra.mxu0 0.0
    %1832 = vmatprep.subr.mxu0 0.0
    %1833 = vmatpush2.msra.mxu0 0.0
    %1834 = vmatprep.subr.mxu0 0.0
    %1835 = vmatpush2.msra.mxu0 0.0
    %1836 = vmatprep.subr.mxu0 0.0
    %1837 = vmatpush2.msra.mxu0 0.0
    %1838 = vmatprep.subr.mxu0 0.0
    %1839 = vmatpush2.msra.mxu0 0.0
    %1840 = vmatprep.mubr.f32.mxu0 0.0
    %1841 = vmatmul.mubr.f32.gmra.mxu0 %v1771
    %v1842 = vpop.f32.mrf.mxu0
    %v1843 = vadd.f32 0.0, %v1842
    %v1844 = vpop.f32.mrf.mxu0
    %1845 = vmatprep.mubr.f32.mxu0 0.0
    %1846 = vmatmul.mubr.f32.gmra.mxu0 %v1774
    %v1847 = vpop.f32.mrf.mxu0
    %v1848 = vadd.f32 0.0, %v1847
    %v1849 = vpop.f32.mrf.mxu0
    %1850 = vdwg.mxu0
    %1851 = vrot.lane.b32.xlu0 %v1636, 120
    %v1852 = vpop.permute.xlu0 %1851
    %1853 = vrot.lane.b32.xlu0 %v1639, 120
    %v1854 = vpop.permute.xlu0 %1853
    %1855 = vrot.lane.b32.xlu0 %v1636, 88
    %v1856 = vpop.permute.xlu0 %1855
    %1857 = vrot.lane.b32.xlu0 %v1639, 88
    %v1858 = vpop.permute.xlu0 %1857
    %v1859 = vsel %vm179, %v1852, 0
    %v1861 = vsel %vm179, %v1854, 0
    %v1863 = vsel %vm179, %v1856, 0
    %v1865 = vsel %vm179, %v1858, 0
    %1867 = vmatprep.subr.mxu0 0.0
    %1868 = vmatpush1.xpose.msra.mxu0 0.0
    %1869 = vmatprep.subr.mxu0 0.0
    %1870 = vmatpush1.xpose.msra.mxu0 0.0
    %1871 = vmatprep.subr.mxu0 0.0
    %1872 = vmatpush1.xpose.msra.mxu0 0.0
    %1873 = vmatprep.subr.mxu0 0.0
    %1874 = vmatpush1.xpose.msra.mxu0 0.0
    %1875 = vmatprep.subr.mxu0 0.0
    %1876 = vmatpush1.xpose.msra.mxu0 0.0
    %1877 = vmatprep.subr.mxu0 0.0
    %1878 = vmatpush1.xpose.msra.mxu0 0.0
    %1879 = vmatprep.subr.mxu0 0.0
    %1880 = vmatpush1.xpose.msra.mxu0 0.0
    %1881 = vmatprep.subr.mxu0 0.0
    %1882 = vmatpush1.xpose.msra.mxu0 0.0
    %1883 = vmatprep.subr.mxu0 0.0
    %1884 = vmatpush1.xpose.msra.mxu0 0.0
    %1885 = vmatprep.subr.mxu0 0.0
    %1886 = vmatpush1.xpose.msra.mxu0 0.0
    %1887 = vmatprep.subr.mxu0 0.0
    %1888 = vmatpush1.xpose.msra.mxu0 0.0
    %1889 = vmatprep.subr.mxu0 0.0
    %1890 = vmatpush1.xpose.msra.mxu0 0.0
    %1891 = vmatprep.subr.mxu0 0.0
    %1892 = vmatpush1.xpose.msra.mxu0 0.0
    %1893 = vmatprep.subr.mxu0 0.0
    %1894 = vmatpush1.xpose.msra.mxu0 0.0
    %1895 = vmatprep.subr.mxu0 0.0
    %1896 = vmatpush1.xpose.msra.mxu0 %v1865
    %1897 = vmatprep.subr.mxu0 0.0
    %1898 = vmatpush1.xpose.msra.mxu0 %v1863
    %1899 = vmatprep.subr.mxu0 0.0
    %1900 = vmatpush2.xpose.msra.mxu0 0.0
    %1901 = vmatprep.subr.mxu0 0.0
    %1902 = vmatpush2.xpose.msra.mxu0 0.0
    %1903 = vmatprep.subr.mxu0 0.0
    %1904 = vmatpush2.xpose.msra.mxu0 0.0
    %1905 = vmatprep.subr.mxu0 0.0
    %1906 = vmatpush2.xpose.msra.mxu0 0.0
    %1907 = vmatprep.subr.mxu0 0.0
    %1908 = vmatpush2.xpose.msra.mxu0 0.0
    %1909 = vmatprep.subr.mxu0 0.0
    %1910 = vmatpush2.xpose.msra.mxu0 0.0
    %1911 = vmatprep.subr.mxu0 0.0
    %1912 = vmatpush2.xpose.msra.mxu0 0.0
    %1913 = vmatprep.subr.mxu0 0.0
    %1914 = vmatpush2.xpose.msra.mxu0 0.0
    %1915 = vmatprep.subr.mxu0 0.0
    %1916 = vmatpush2.xpose.msra.mxu0 0.0
    %1917 = vmatprep.subr.mxu0 0.0
    %1918 = vmatpush2.xpose.msra.mxu0 0.0
    %1919 = vmatprep.subr.mxu0 0.0
    %1920 = vmatpush2.xpose.msra.mxu0 0.0
    %1921 = vmatprep.subr.mxu0 0.0
    %1922 = vmatpush2.xpose.msra.mxu0 0.0
    %1923 = vmatprep.subr.mxu0 0.0
    %1924 = vmatpush2.xpose.msra.mxu0 0.0
    %1925 = vmatprep.subr.mxu0 0.0
    %1926 = vmatpush2.xpose.msra.mxu0 0.0
    %1927 = vmatprep.subr.mxu0 0.0
    %1928 = vmatpush2.xpose.msra.mxu0 0.0
    %1929 = vmatprep.subr.mxu0 0.0
    %1930 = vmatpush2.xpose.msra.mxu0 0.0
    %1931 = vmatprep.mubr.f32.mxu0 0.0
    %1932 = vmatmul.mubr.f32.gmra.mxu0 %v1859
    %v1933 = vpop.f32.mrf.mxu0
    %v1934 = vadd.f32 0.0, %v1933
    %v1935 = vpop.f32.mrf.mxu0
    %1936 = vmatprep.mubr.f32.mxu0 0.0
    %1937 = vmatmul.mubr.f32.gmra.mxu0 %v1861
    %v1938 = vpop.f32.mrf.mxu0
    %v1939 = vadd.f32 0.0, %v1938
    %v1940 = vpop.f32.mrf.mxu0
    %1941 = vdwg.mxu0
    %v1942 = vmul.f32 %v1934, 0.35355338
    %v1943 = vmul.f32 %v1939, 0.35355338
    %v1944 = vadd.f32 %v1942, %v97
    %v1945 = vadd.f32 %v1943, %v98
    %v1946 = vsel %vm267, %v1944, -inf
    %1947 = vmax.xlane.f32.xlu0 %v1946
    %v1948 = vpop.xlane.xlu0 %1947
    %v1949 = vsel %vm267, %v1945, -inf
    %1950 = vmax.xlane.f32.xlu0 %v1949
    %v1951 = vpop.xlane.xlu0 %1950
    %v1952 = vsub.f32 %v1944, %v1948
    %v1953 = vsub.f32 %v1945, %v1951
    %v1954 = vmul.f32 %v1952, 1.442695
    %v1955 = vpow.pop %v1954
    %v1956 = vmul.f32 %v1953, 1.442695
    %v1957 = vpow.pop %v1956
    %v1958 = vsel %vm267, %v1955, 0.0
    %1959 = vadd.xlane.f32.xlu0 %v1958
    %v1960 = vpop.xlane.xlu0 %1959
    %v1961 = vsel %vm267, %v1957, 0.0
    %1962 = vadd.xlane.f32.xlu0 %v1961
    %v1963 = vpop.xlane.xlu0 %1962
    %v1964 = vrcp.pop %v1960
    %v1965 = vrcp.pop %v1963
    %v1966 = vmul.f32 %v1955, %v1964
    %v1967 = vmul.f32 %v1957, %v1965
    %1968 = vrot.lane.b32.xlu0 %v1636, 56
    %v1969 = vpop.permute.xlu0 %1968
    %1970 = vrot.lane.b32.xlu0 %v1639, 56
    %v1971 = vpop.permute.xlu0 %1970
    %v1975 = vsel %vm267, %v1966, 0
    %v1978 = vsel %vm267, %v1967, 0
    %1980 = vmatprep.subr.mxu0 0.0
    %1981 = vmatpush1.msra.mxu0 0.0
    %1982 = vmatprep.subr.mxu0 0.0
    %1983 = vmatpush1.msra.mxu0 0.0
    %1984 = vmatprep.subr.mxu0 0.0
    %1985 = vmatpush1.msra.mxu0 0.0
    %1986 = vmatprep.subr.mxu0 0.0
    %1987 = vmatpush1.msra.mxu0 0.0
    %1988 = vmatprep.subr.mxu0 0.0
    %1989 = vmatpush1.msra.mxu0 0.0
    %1990 = vmatprep.subr.mxu0 0.0
    %1991 = vmatpush1.msra.mxu0 0.0
    %1992 = vmatprep.subr.mxu0 0.0
    %1993 = vmatpush1.msra.mxu0 0.0
    %1994 = vmatprep.subr.mxu0 0.0
    %1995 = vmatpush1.msra.mxu0 0.0
    %1996 = vmatprep.subr.mxu0 0.0
    %1997 = vmatpush1.msra.mxu0 0.0
    %1998 = vmatprep.subr.mxu0 0.0
    %1999 = vmatpush1.msra.mxu0 0.0
    %2000 = vmatprep.subr.mxu0 0.0
    %2001 = vmatpush1.msra.mxu0 0.0
    %2002 = vmatprep.subr.mxu0 0.0
    %2003 = vmatpush1.msra.mxu0 0.0
    %2004 = vmatprep.subr.mxu0 0.0
    %2005 = vmatpush1.msra.mxu0 0.0
    %2006 = vmatprep.subr.mxu0 0.0
    %2007 = vmatpush1.msra.mxu0 0.0
    %2008 = vmatprep.subr.mxu0 0.0
    %2009 = vmatpush1.msra.mxu0 %v1971
    %2010 = vmatprep.subr.mxu0 0.0
    %2011 = vmatpush1.msra.mxu0 %v1969
    %2012 = vmatprep.subr.mxu0 0.0
    %2013 = vmatpush2.msra.mxu0 0.0
    %2014 = vmatprep.subr.mxu0 0.0
    %2015 = vmatpush2.msra.mxu0 0.0
    %2016 = vmatprep.subr.mxu0 0.0
    %2017 = vmatpush2.msra.mxu0 0.0
    %2018 = vmatprep.subr.mxu0 0.0
    %2019 = vmatpush2.msra.mxu0 0.0
    %2020 = vmatprep.subr.mxu0 0.0
    %2021 = vmatpush2.msra.mxu0 0.0
    %2022 = vmatprep.subr.mxu0 0.0
    %2023 = vmatpush2.msra.mxu0 0.0
    %2024 = vmatprep.subr.mxu0 0.0
    %2025 = vmatpush2.msra.mxu0 0.0
    %2026 = vmatprep.subr.mxu0 0.0
    %2027 = vmatpush2.msra.mxu0 0.0
    %2028 = vmatprep.subr.mxu0 0.0
    %2029 = vmatpush2.msra.mxu0 0.0
    %2030 = vmatprep.subr.mxu0 0.0
    %2031 = vmatpush2.msra.mxu0 0.0
    %2032 = vmatprep.subr.mxu0 0.0
    %2033 = vmatpush2.msra.mxu0 0.0
    %2034 = vmatprep.subr.mxu0 0.0
    %2035 = vmatpush2.msra.mxu0 0.0
    %2036 = vmatprep.subr.mxu0 0.0
    %2037 = vmatpush2.msra.mxu0 0.0
    %2038 = vmatprep.subr.mxu0 0.0
    %2039 = vmatpush2.msra.mxu0 0.0
    %2040 = vmatprep.subr.mxu0 0.0
    %2041 = vmatpush2.msra.mxu0 0.0
    %2042 = vmatprep.subr.mxu0 0.0
    %2043 = vmatpush2.msra.mxu0 0.0
    %2044 = vmatprep.mubr.f32.mxu0 0.0
    %2045 = vmatmul.mubr.f32.gmra.mxu0 %v1975
    %v2046 = vpop.f32.mrf.mxu0
    %v2047 = vadd.f32 0.0, %v2046
    %v2048 = vpop.f32.mrf.mxu0
    %2049 = vmatprep.mubr.f32.mxu0 0.0
    %2050 = vmatmul.mubr.f32.gmra.mxu0 %v1978
    %v2051 = vpop.f32.mrf.mxu0
    %v2052 = vadd.f32 0.0, %v2051
    %v2053 = vpop.f32.mrf.mxu0
    %2054 = vdwg.mxu0
    %v2056 = vsel %vm179, %v2047, 0
    %v2059 = vsel %vm179, %v2052, 0
    %2061 = vmatprep.subr.mxu0 0.0
    %2062 = vmatpush1.msra.mxu0 0.0
    %2063 = vmatprep.subr.mxu0 0.0
    %2064 = vmatpush1.msra.mxu0 0.0
    %2065 = vmatprep.subr.mxu0 0.0
    %2066 = vmatpush1.msra.mxu0 0.0
    %2067 = vmatprep.subr.mxu0 0.0
    %2068 = vmatpush1.msra.mxu0 0.0
    %2069 = vmatprep.subr.mxu0 0.0
    %2070 = vmatpush1.msra.mxu0 0.0
    %2071 = vmatprep.subr.mxu0 0.0
    %2072 = vmatpush1.msra.mxu0 0.0
    %2073 = vmatprep.subr.mxu0 0.0
    %2074 = vmatpush1.msra.mxu0 0.0
    %2075 = vmatprep.subr.mxu0 0.0
    %2076 = vmatpush1.msra.mxu0 0.0
    %2077 = vmatprep.subr.mxu0 0.0
    %2078 = vmatpush1.msra.mxu0 0.0
    %2079 = vmatprep.subr.mxu0 0.0
    %2080 = vmatpush1.msra.mxu0 0.0
    %2081 = vmatprep.subr.mxu0 0.0
    %2082 = vmatpush1.msra.mxu0 0.0
    %2083 = vmatprep.subr.mxu0 0.0
    %2084 = vmatpush1.msra.mxu0 0.0
    %2085 = vmatprep.subr.mxu0 0.0
    %2086 = vmatpush1.msra.mxu0 0.0
    %2087 = vmatprep.subr.mxu0 0.0
    %2088 = vmatpush1.msra.mxu0 0.0
    %2089 = vmatprep.subr.mxu0 0.0
    %2090 = vmatpush1.msra.mxu0 0.0
    %2091 = vmatprep.subr.mxu0 0.0
    %2092 = vmatpush1.msra.mxu0 %v1644
    %2093 = vmatprep.subr.mxu0 0.0
    %2094 = vmatpush2.msra.mxu0 0.0
    %2095 = vmatprep.subr.mxu0 0.0
    %2096 = vmatpush2.msra.mxu0 0.0
    %2097 = vmatprep.subr.mxu0 0.0
    %2098 = vmatpush2.msra.mxu0 0.0
    %2099 = vmatprep.subr.mxu0 0.0
    %2100 = vmatpush2.msra.mxu0 0.0
    %2101 = vmatprep.subr.mxu0 0.0
    %2102 = vmatpush2.msra.mxu0 0.0
    %2103 = vmatprep.subr.mxu0 0.0
    %2104 = vmatpush2.msra.mxu0 0.0
    %2105 = vmatprep.subr.mxu0 0.0
    %2106 = vmatpush2.msra.mxu0 0.0
    %2107 = vmatprep.subr.mxu0 0.0
    %2108 = vmatpush2.msra.mxu0 0.0
    %2109 = vmatprep.subr.mxu0 0.0
    %2110 = vmatpush2.msra.mxu0 0.0
    %2111 = vmatprep.subr.mxu0 0.0
    %2112 = vmatpush2.msra.mxu0 0.0
    %2113 = vmatprep.subr.mxu0 0.0
    %2114 = vmatpush2.msra.mxu0 0.0
    %2115 = vmatprep.subr.mxu0 0.0
    %2116 = vmatpush2.msra.mxu0 0.0
    %2117 = vmatprep.subr.mxu0 0.0
    %2118 = vmatpush2.msra.mxu0 0.0
    %2119 = vmatprep.subr.mxu0 0.0
    %2120 = vmatpush2.msra.mxu0 0.0
    %2121 = vmatprep.subr.mxu0 0.0
    %2122 = vmatpush2.msra.mxu0 0.0
    %2123 = vmatprep.subr.mxu0 0.0
    %2124 = vmatpush2.msra.mxu0 0.0
    %2125 = vmatprep.mubr.f32.mxu0 0.0
    %2126 = vmatmul.mubr.f32.gmra.mxu0 %v2056
    %v2127 = vpop.f32.mrf.mxu0
    %v2128 = vadd.f32 0.0, %v2127
    %v2129 = vpop.f32.mrf.mxu0
    %2130 = vmatprep.mubr.f32.mxu0 0.0
    %2131 = vmatmul.mubr.f32.gmra.mxu0 %v2059
    %v2132 = vpop.f32.mrf.mxu0
    %v2133 = vadd.f32 0.0, %v2132
    %v2134 = vpop.f32.mrf.mxu0
    %2135 = vdwg.mxu0
    %v2137 = vsel %vm179, %v1843, 0
    %v2140 = vsel %vm179, %v1848, 0
    %2142 = vmatprep.subr.mxu0 0.0
    %2143 = vmatpush1.msra.mxu0 0.0
    %2144 = vmatprep.subr.mxu0 0.0
    %2145 = vmatpush1.msra.mxu0 0.0
    %2146 = vmatprep.subr.mxu0 0.0
    %2147 = vmatpush1.msra.mxu0 0.0
    %2148 = vmatprep.subr.mxu0 0.0
    %2149 = vmatpush1.msra.mxu0 0.0
    %2150 = vmatprep.subr.mxu0 0.0
    %2151 = vmatpush1.msra.mxu0 0.0
    %2152 = vmatprep.subr.mxu0 0.0
    %2153 = vmatpush1.msra.mxu0 0.0
    %2154 = vmatprep.subr.mxu0 0.0
    %2155 = vmatpush1.msra.mxu0 0.0
    %2156 = vmatprep.subr.mxu0 0.0
    %2157 = vmatpush1.msra.mxu0 0.0
    %2158 = vmatprep.subr.mxu0 0.0
    %2159 = vmatpush1.msra.mxu0 0.0
    %2160 = vmatprep.subr.mxu0 0.0
    %2161 = vmatpush1.msra.mxu0 0.0
    %2162 = vmatprep.subr.mxu0 0.0
    %2163 = vmatpush1.msra.mxu0 0.0
    %2164 = vmatprep.subr.mxu0 0.0
    %2165 = vmatpush1.msra.mxu0 0.0
    %2166 = vmatprep.subr.mxu0 0.0
    %2167 = vmatpush1.msra.mxu0 0.0
    %2168 = vmatprep.subr.mxu0 0.0
    %2169 = vmatpush1.msra.mxu0 0.0
    %2170 = vmatprep.subr.mxu0 0.0
    %2171 = vmatpush1.msra.mxu0 0.0
    %2172 = vmatprep.subr.mxu0 0.0
    %2173 = vmatpush1.msra.mxu0 %v1643
    %2174 = vmatprep.subr.mxu0 0.0
    %2175 = vmatpush2.msra.mxu0 0.0
    %2176 = vmatprep.subr.mxu0 0.0
    %2177 = vmatpush2.msra.mxu0 0.0
    %2178 = vmatprep.subr.mxu0 0.0
    %2179 = vmatpush2.msra.mxu0 0.0
    %2180 = vmatprep.subr.mxu0 0.0
    %2181 = vmatpush2.msra.mxu0 0.0
    %2182 = vmatprep.subr.mxu0 0.0
    %2183 = vmatpush2.msra.mxu0 0.0
    %2184 = vmatprep.subr.mxu0 0.0
    %2185 = vmatpush2.msra.mxu0 0.0
    %2186 = vmatprep.subr.mxu0 0.0
    %2187 = vmatpush2.msra.mxu0 0.0
    %2188 = vmatprep.subr.mxu0 0.0
    %2189 = vmatpush2.msra.mxu0 0.0
    %2190 = vmatprep.subr.mxu0 0.0
    %2191 = vmatpush2.msra.mxu0 0.0
    %2192 = vmatprep.subr.mxu0 0.0
    %2193 = vmatpush2.msra.mxu0 0.0
    %2194 = vmatprep.subr.mxu0 0.0
    %2195 = vmatpush2.msra.mxu0 0.0
    %2196 = vmatprep.subr.mxu0 0.0
    %2197 = vmatpush2.msra.mxu0 0.0
    %2198 = vmatprep.subr.mxu0 0.0
    %2199 = vmatpush2.msra.mxu0 0.0
    %2200 = vmatprep.subr.mxu0 0.0
    %2201 = vmatpush2.msra.mxu0 0.0
    %2202 = vmatprep.subr.mxu0 0.0
    %2203 = vmatpush2.msra.mxu0 0.0
    %2204 = vmatprep.subr.mxu0 0.0
    %2205 = vmatpush2.msra.mxu0 0.0
    %2206 = vmatprep.mubr.f32.mxu0 0.0
    %2207 = vmatmul.mubr.f32.gmra.mxu0 %v2137
    %v2208 = vpop.f32.mrf.mxu0
    %v2209 = vadd.f32 %v2128, %v2208
    %v2210 = vpop.f32.mrf.mxu0
    %2211 = vmatprep.mubr.f32.mxu0 0.0
    %2212 = vmatmul.mubr.f32.gmra.mxu0 %v2140
    %v2213 = vpop.f32.mrf.mxu0
    %v2214 = vadd.f32 %v2133, %v2213
    %v2215 = vpop.f32.mrf.mxu0
    %2216 = vdwg.mxu0
    %2217 = vrot.lane.b32.xlu0 %v1636, 112
    %v2218 = vpop.permute.xlu0 %2217
    %2219 = vrot.lane.b32.xlu0 %v1639, 112
    %v2220 = vpop.permute.xlu0 %2219
    %2221 = vrot.lane.b32.xlu0 %v1636, 80
    %v2222 = vpop.permute.xlu0 %2221
    %2223 = vrot.lane.b32.xlu0 %v1639, 80
    %v2224 = vpop.permute.xlu0 %2223
    %v2225 = vsel %vm179, %v2218, 0
    %v2227 = vsel %vm179, %v2220, 0
    %v2229 = vsel %vm179, %v2222, 0
    %v2231 = vsel %vm179, %v2224, 0
    %2233 = vmatprep.subr.mxu0 0.0
    %2234 = vmatpush1.xpose.msra.mxu0 0.0
    %2235 = vmatprep.subr.mxu0 0.0
    %2236 = vmatpush1.xpose.msra.mxu0 0.0
    %2237 = vmatprep.subr.mxu0 0.0
    %2238 = vmatpush1.xpose.msra.mxu0 0.0
    %2239 = vmatprep.subr.mxu0 0.0
    %2240 = vmatpush1.xpose.msra.mxu0 0.0
    %2241 = vmatprep.subr.mxu0 0.0
    %2242 = vmatpush1.xpose.msra.mxu0 0.0
    %2243 = vmatprep.subr.mxu0 0.0
    %2244 = vmatpush1.xpose.msra.mxu0 0.0
    %2245 = vmatprep.subr.mxu0 0.0
    %2246 = vmatpush1.xpose.msra.mxu0 0.0
    %2247 = vmatprep.subr.mxu0 0.0
    %2248 = vmatpush1.xpose.msra.mxu0 0.0
    %2249 = vmatprep.subr.mxu0 0.0
    %2250 = vmatpush1.xpose.msra.mxu0 0.0
    %2251 = vmatprep.subr.mxu0 0.0
    %2252 = vmatpush1.xpose.msra.mxu0 0.0
    %2253 = vmatprep.subr.mxu0 0.0
    %2254 = vmatpush1.xpose.msra.mxu0 0.0
    %2255 = vmatprep.subr.mxu0 0.0
    %2256 = vmatpush1.xpose.msra.mxu0 0.0
    %2257 = vmatprep.subr.mxu0 0.0
    %2258 = vmatpush1.xpose.msra.mxu0 0.0
    %2259 = vmatprep.subr.mxu0 0.0
    %2260 = vmatpush1.xpose.msra.mxu0 0.0
    %2261 = vmatprep.subr.mxu0 0.0
    %2262 = vmatpush1.xpose.msra.mxu0 %v2231
    %2263 = vmatprep.subr.mxu0 0.0
    %2264 = vmatpush1.xpose.msra.mxu0 %v2229
    %2265 = vmatprep.subr.mxu0 0.0
    %2266 = vmatpush2.xpose.msra.mxu0 0.0
    %2267 = vmatprep.subr.mxu0 0.0
    %2268 = vmatpush2.xpose.msra.mxu0 0.0
    %2269 = vmatprep.subr.mxu0 0.0
    %2270 = vmatpush2.xpose.msra.mxu0 0.0
    %2271 = vmatprep.subr.mxu0 0.0
    %2272 = vmatpush2.xpose.msra.mxu0 0.0
    %2273 = vmatprep.subr.mxu0 0.0
    %2274 = vmatpush2.xpose.msra.mxu0 0.0
    %2275 = vmatprep.subr.mxu0 0.0
    %2276 = vmatpush2.xpose.msra.mxu0 0.0
    %2277 = vmatprep.subr.mxu0 0.0
    %2278 = vmatpush2.xpose.msra.mxu0 0.0
    %2279 = vmatprep.subr.mxu0 0.0
    %2280 = vmatpush2.xpose.msra.mxu0 0.0
    %2281 = vmatprep.subr.mxu0 0.0
    %2282 = vmatpush2.xpose.msra.mxu0 0.0
    %2283 = vmatprep.subr.mxu0 0.0
    %2284 = vmatpush2.xpose.msra.mxu0 0.0
    %2285 = vmatprep.subr.mxu0 0.0
    %2286 = vmatpush2.xpose.msra.mxu0 0.0
    %2287 = vmatprep.subr.mxu0 0.0
    %2288 = vmatpush2.xpose.msra.mxu0 0.0
    %2289 = vmatprep.subr.mxu0 0.0
    %2290 = vmatpush2.xpose.msra.mxu0 0.0
    %2291 = vmatprep.subr.mxu0 0.0
    %2292 = vmatpush2.xpose.msra.mxu0 0.0
    %2293 = vmatprep.subr.mxu0 0.0
    %2294 = vmatpush2.xpose.msra.mxu0 0.0
    %2295 = vmatprep.subr.mxu0 0.0
    %2296 = vmatpush2.xpose.msra.mxu0 0.0
    %2297 = vmatprep.mubr.f32.mxu0 0.0
    %2298 = vmatmul.mubr.f32.gmra.mxu0 %v2225
    %v2299 = vpop.f32.mrf.mxu0
    %v2300 = vadd.f32 0.0, %v2299
    %v2301 = vpop.f32.mrf.mxu0
    %2302 = vmatprep.mubr.f32.mxu0 0.0
    %2303 = vmatmul.mubr.f32.gmra.mxu0 %v2227
    %v2304 = vpop.f32.mrf.mxu0
    %v2305 = vadd.f32 0.0, %v2304
    %v2306 = vpop.f32.mrf.mxu0
    %2307 = vdwg.mxu0
    %v2308 = vmul.f32 %v2300, 0.35355338
    %v2309 = vmul.f32 %v2305, 0.35355338
    %v2310 = vadd.f32 %v2308, %v97
    %v2311 = vadd.f32 %v2309, %v98
    %v2312 = vsel %vm267, %v2310, -inf
    %2313 = vmax.xlane.f32.xlu0 %v2312
    %v2314 = vpop.xlane.xlu0 %2313
    %v2315 = vsel %vm267, %v2311, -inf
    %2316 = vmax.xlane.f32.xlu0 %v2315
    %v2317 = vpop.xlane.xlu0 %2316
    %v2318 = vsub.f32 %v2310, %v2314
    %v2319 = vsub.f32 %v2311, %v2317
    %v2320 = vmul.f32 %v2318, 1.442695
    %v2321 = vpow.pop %v2320
    %v2322 = vmul.f32 %v2319, 1.442695
    %v2323 = vpow.pop %v2322
    %v2324 = vsel %vm267, %v2321, 0.0
    %2325 = vadd.xlane.f32.xlu0 %v2324
    %v2326 = vpop.xlane.xlu0 %2325
    %v2327 = vsel %vm267, %v2323, 0.0
    %2328 = vadd.xlane.f32.xlu0 %v2327
    %v2329 = vpop.xlane.xlu0 %2328
    %v2330 = vrcp.pop %v2326
    %v2331 = vrcp.pop %v2329
    %v2332 = vmul.f32 %v2321, %v2330
    %v2333 = vmul.f32 %v2323, %v2331
    %2334 = vrot.lane.b32.xlu0 %v1636, 48
    %v2335 = vpop.permute.xlu0 %2334
    %2336 = vrot.lane.b32.xlu0 %v1639, 48
    %v2337 = vpop.permute.xlu0 %2336
    %v2341 = vsel %vm267, %v2332, 0
    %v2344 = vsel %vm267, %v2333, 0
    %2346 = vmatprep.subr.mxu0 0.0
    %2347 = vmatpush1.msra.mxu0 0.0
    %2348 = vmatprep.subr.mxu0 0.0
    %2349 = vmatpush1.msra.mxu0 0.0
    %2350 = vmatprep.subr.mxu0 0.0
    %2351 = vmatpush1.msra.mxu0 0.0
    %2352 = vmatprep.subr.mxu0 0.0
    %2353 = vmatpush1.msra.mxu0 0.0
    %2354 = vmatprep.subr.mxu0 0.0
    %2355 = vmatpush1.msra.mxu0 0.0
    %2356 = vmatprep.subr.mxu0 0.0
    %2357 = vmatpush1.msra.mxu0 0.0
    %2358 = vmatprep.subr.mxu0 0.0
    %2359 = vmatpush1.msra.mxu0 0.0
    %2360 = vmatprep.subr.mxu0 0.0
    %2361 = vmatpush1.msra.mxu0 0.0
    %2362 = vmatprep.subr.mxu0 0.0
    %2363 = vmatpush1.msra.mxu0 0.0
    %2364 = vmatprep.subr.mxu0 0.0
    %2365 = vmatpush1.msra.mxu0 0.0
    %2366 = vmatprep.subr.mxu0 0.0
    %2367 = vmatpush1.msra.mxu0 0.0
    %2368 = vmatprep.subr.mxu0 0.0
    %2369 = vmatpush1.msra.mxu0 0.0
    %2370 = vmatprep.subr.mxu0 0.0
    %2371 = vmatpush1.msra.mxu0 0.0
    %2372 = vmatprep.subr.mxu0 0.0
    %2373 = vmatpush1.msra.mxu0 0.0
    %2374 = vmatprep.subr.mxu0 0.0
    %2375 = vmatpush1.msra.mxu0 %v2337
    %2376 = vmatprep.subr.mxu0 0.0
    %2377 = vmatpush1.msra.mxu0 %v2335
    %2378 = vmatprep.subr.mxu0 0.0
    %2379 = vmatpush2.msra.mxu0 0.0
    %2380 = vmatprep.subr.mxu0 0.0
    %2381 = vmatpush2.msra.mxu0 0.0
    %2382 = vmatprep.subr.mxu0 0.0
    %2383 = vmatpush2.msra.mxu0 0.0
    %2384 = vmatprep.subr.mxu0 0.0
    %2385 = vmatpush2.msra.mxu0 0.0
    %2386 = vmatprep.subr.mxu0 0.0
    %2387 = vmatpush2.msra.mxu0 0.0
    %2388 = vmatprep.subr.mxu0 0.0
    %2389 = vmatpush2.msra.mxu0 0.0
    %2390 = vmatprep.subr.mxu0 0.0
    %2391 = vmatpush2.msra.mxu0 0.0
    %2392 = vmatprep.subr.mxu0 0.0
    %2393 = vmatpush2.msra.mxu0 0.0
    %2394 = vmatprep.subr.mxu0 0.0
    %2395 = vmatpush2.msra.mxu0 0.0
    %2396 = vmatprep.subr.mxu0 0.0
    %2397 = vmatpush2.msra.mxu0 0.0
    %2398 = vmatprep.subr.mxu0 0.0
    %2399 = vmatpush2.msra.mxu0 0.0
    %2400 = vmatprep.subr.mxu0 0.0
    %2401 = vmatpush2.msra.mxu0 0.0
    %2402 = vmatprep.subr.mxu0 0.0
    %2403 = vmatpush2.msra.mxu0 0.0
    %2404 = vmatprep.subr.mxu0 0.0
    %2405 = vmatpush2.msra.mxu0 0.0
    %2406 = vmatprep.subr.mxu0 0.0
    %2407 = vmatpush2.msra.mxu0 0.0
    %2408 = vmatprep.subr.mxu0 0.0
    %2409 = vmatpush2.msra.mxu0 0.0
    %2410 = vmatprep.mubr.f32.mxu0 0.0
    %2411 = vmatmul.mubr.f32.gmra.mxu0 %v2341
    %v2412 = vpop.f32.mrf.mxu0
    %v2413 = vadd.f32 0.0, %v2412
    %v2414 = vpop.f32.mrf.mxu0
    %2415 = vmatprep.mubr.f32.mxu0 0.0
    %2416 = vmatmul.mubr.f32.gmra.mxu0 %v2344
    %v2417 = vpop.f32.mrf.mxu0
    %v2418 = vadd.f32 0.0, %v2417
    %v2419 = vpop.f32.mrf.mxu0
    %2420 = vdwg.mxu0
    %v2422 = vsel %vm179, %v2413, 0
    %v2425 = vsel %vm179, %v2418, 0
    %2427 = vmatprep.subr.mxu0 0.0
    %2428 = vmatpush1.msra.mxu0 0.0
    %2429 = vmatprep.subr.mxu0 0.0
    %2430 = vmatpush1.msra.mxu0 0.0
    %2431 = vmatprep.subr.mxu0 0.0
    %2432 = vmatpush1.msra.mxu0 0.0
    %2433 = vmatprep.subr.mxu0 0.0
    %2434 = vmatpush1.msra.mxu0 0.0
    %2435 = vmatprep.subr.mxu0 0.0
    %2436 = vmatpush1.msra.mxu0 0.0
    %2437 = vmatprep.subr.mxu0 0.0
    %2438 = vmatpush1.msra.mxu0 0.0
    %2439 = vmatprep.subr.mxu0 0.0
    %2440 = vmatpush1.msra.mxu0 0.0
    %2441 = vmatprep.subr.mxu0 0.0
    %2442 = vmatpush1.msra.mxu0 0.0
    %2443 = vmatprep.subr.mxu0 0.0
    %2444 = vmatpush1.msra.mxu0 0.0
    %2445 = vmatprep.subr.mxu0 0.0
    %2446 = vmatpush1.msra.mxu0 0.0
    %2447 = vmatprep.subr.mxu0 0.0
    %2448 = vmatpush1.msra.mxu0 0.0
    %2449 = vmatprep.subr.mxu0 0.0
    %2450 = vmatpush1.msra.mxu0 0.0
    %2451 = vmatprep.subr.mxu0 0.0
    %2452 = vmatpush1.msra.mxu0 0.0
    %2453 = vmatprep.subr.mxu0 0.0
    %2454 = vmatpush1.msra.mxu0 0.0
    %2455 = vmatprep.subr.mxu0 0.0
    %2456 = vmatpush1.msra.mxu0 0.0
    %2457 = vmatprep.subr.mxu0 0.0
    %2458 = vmatpush1.msra.mxu0 %v1645
    %2459 = vmatprep.subr.mxu0 0.0
    %2460 = vmatpush2.msra.mxu0 0.0
    %2461 = vmatprep.subr.mxu0 0.0
    %2462 = vmatpush2.msra.mxu0 0.0
    %2463 = vmatprep.subr.mxu0 0.0
    %2464 = vmatpush2.msra.mxu0 0.0
    %2465 = vmatprep.subr.mxu0 0.0
    %2466 = vmatpush2.msra.mxu0 0.0
    %2467 = vmatprep.subr.mxu0 0.0
    %2468 = vmatpush2.msra.mxu0 0.0
    %2469 = vmatprep.subr.mxu0 0.0
    %2470 = vmatpush2.msra.mxu0 0.0
    %2471 = vmatprep.subr.mxu0 0.0
    %2472 = vmatpush2.msra.mxu0 0.0
    %2473 = vmatprep.subr.mxu0 0.0
    %2474 = vmatpush2.msra.mxu0 0.0
    %2475 = vmatprep.subr.mxu0 0.0
    %2476 = vmatpush2.msra.mxu0 0.0
    %2477 = vmatprep.subr.mxu0 0.0
    %2478 = vmatpush2.msra.mxu0 0.0
    %2479 = vmatprep.subr.mxu0 0.0
    %2480 = vmatpush2.msra.mxu0 0.0
    %2481 = vmatprep.subr.mxu0 0.0
    %2482 = vmatpush2.msra.mxu0 0.0
    %2483 = vmatprep.subr.mxu0 0.0
    %2484 = vmatpush2.msra.mxu0 0.0
    %2485 = vmatprep.subr.mxu0 0.0
    %2486 = vmatpush2.msra.mxu0 0.0
    %2487 = vmatprep.subr.mxu0 0.0
    %2488 = vmatpush2.msra.mxu0 0.0
    %2489 = vmatprep.subr.mxu0 0.0
    %2490 = vmatpush2.msra.mxu0 0.0
    %2491 = vmatprep.mubr.f32.mxu0 0.0
    %2492 = vmatmul.mubr.f32.gmra.mxu0 %v2422
    %v2493 = vpop.f32.mrf.mxu0
    %v2494 = vadd.f32 0.0, %v2493
    %v2495 = vpop.f32.mrf.mxu0
    %2496 = vmatprep.mubr.f32.mxu0 0.0
    %2497 = vmatmul.mubr.f32.gmra.mxu0 %v2425
    %v2498 = vpop.f32.mrf.mxu0
    %v2499 = vadd.f32 0.0, %v2498
    %v2500 = vpop.f32.mrf.mxu0
    %2501 = vdwg.mxu0
    %v2502 = vadd.f32 %v2209, %v2494
    %v2503 = vadd.f32 %v2214, %v2499
    %2504 = vrot.lane.b32.xlu0 %v1636, 104
    %v2505 = vpop.permute.xlu0 %2504
    %2506 = vrot.lane.b32.xlu0 %v1639, 104
    %v2507 = vpop.permute.xlu0 %2506
    %2508 = vrot.lane.b32.xlu0 %v1636, 72
    %v2509 = vpop.permute.xlu0 %2508
    %2510 = vrot.lane.b32.xlu0 %v1639, 72
    %v2511 = vpop.permute.xlu0 %2510
    %v2512 = vsel %vm179, %v2505, 0
    %v2514 = vsel %vm179, %v2507, 0
    %v2516 = vsel %vm179, %v2509, 0
    %v2518 = vsel %vm179, %v2511, 0
    %2520 = vmatprep.subr.mxu0 0.0
    %2521 = vmatpush1.xpose.msra.mxu0 0.0
    %2522 = vmatprep.subr.mxu0 0.0
    %2523 = vmatpush1.xpose.msra.mxu0 0.0
    %2524 = vmatprep.subr.mxu0 0.0
    %2525 = vmatpush1.xpose.msra.mxu0 0.0
    %2526 = vmatprep.subr.mxu0 0.0
    %2527 = vmatpush1.xpose.msra.mxu0 0.0
    %2528 = vmatprep.subr.mxu0 0.0
    %2529 = vmatpush1.xpose.msra.mxu0 0.0
    %2530 = vmatprep.subr.mxu0 0.0
    %2531 = vmatpush1.xpose.msra.mxu0 0.0
    %2532 = vmatprep.subr.mxu0 0.0
    %2533 = vmatpush1.xpose.msra.mxu0 0.0
    %2534 = vmatprep.subr.mxu0 0.0
    %2535 = vmatpush1.xpose.msra.mxu0 0.0
    %2536 = vmatprep.subr.mxu0 0.0
    %2537 = vmatpush1.xpose.msra.mxu0 0.0
    %2538 = vmatprep.subr.mxu0 0.0
    %2539 = vmatpush1.xpose.msra.mxu0 0.0
    %2540 = vmatprep.subr.mxu0 0.0
    %2541 = vmatpush1.xpose.msra.mxu0 0.0
    %2542 = vmatprep.subr.mxu0 0.0
    %2543 = vmatpush1.xpose.msra.mxu0 0.0
    %2544 = vmatprep.subr.mxu0 0.0
    %2545 = vmatpush1.xpose.msra.mxu0 0.0
    %2546 = vmatprep.subr.mxu0 0.0
    %2547 = vmatpush1.xpose.msra.mxu0 0.0
    %2548 = vmatprep.subr.mxu0 0.0
    %2549 = vmatpush1.xpose.msra.mxu0 %v2518
    %2550 = vmatprep.subr.mxu0 0.0
    %2551 = vmatpush1.xpose.msra.mxu0 %v2516
    %2552 = vmatprep.subr.mxu0 0.0
    %2553 = vmatpush2.xpose.msra.mxu0 0.0
    %2554 = vmatprep.subr.mxu0 0.0
    %2555 = vmatpush2.xpose.msra.mxu0 0.0
    %2556 = vmatprep.subr.mxu0 0.0
    %2557 = vmatpush2.xpose.msra.mxu0 0.0
    %2558 = vmatprep.subr.mxu0 0.0
    %2559 = vmatpush2.xpose.msra.mxu0 0.0
    %2560 = vmatprep.subr.mxu0 0.0
    %2561 = vmatpush2.xpose.msra.mxu0 0.0
    %2562 = vmatprep.subr.mxu0 0.0
    %2563 = vmatpush2.xpose.msra.mxu0 0.0
    %2564 = vmatprep.subr.mxu0 0.0
    %2565 = vmatpush2.xpose.msra.mxu0 0.0
    %2566 = vmatprep.subr.mxu0 0.0
    %2567 = vmatpush2.xpose.msra.mxu0 0.0
    %2568 = vmatprep.subr.mxu0 0.0
    %2569 = vmatpush2.xpose.msra.mxu0 0.0
    %2570 = vmatprep.subr.mxu0 0.0
    %2571 = vmatpush2.xpose.msra.mxu0 0.0
    %2572 = vmatprep.subr.mxu0 0.0
    %2573 = vmatpush2.xpose.msra.mxu0 0.0
    %2574 = vmatprep.subr.mxu0 0.0
    %2575 = vmatpush2.xpose.msra.mxu0 0.0
    %2576 = vmatprep.subr.mxu0 0.0
    %2577 = vmatpush2.xpose.msra.mxu0 0.0
    %2578 = vmatprep.subr.mxu0 0.0
    %2579 = vmatpush2.xpose.msra.mxu0 0.0
    %2580 = vmatprep.subr.mxu0 0.0
    %2581 = vmatpush2.xpose.msra.mxu0 0.0
    %2582 = vmatprep.subr.mxu0 0.0
    %2583 = vmatpush2.xpose.msra.mxu0 0.0
    %2584 = vmatprep.mubr.f32.mxu0 0.0
    %2585 = vmatmul.mubr.f32.gmra.mxu0 %v2512
    %v2586 = vpop.f32.mrf.mxu0
    %v2587 = vadd.f32 0.0, %v2586
    %v2588 = vpop.f32.mrf.mxu0
    %2589 = vmatprep.mubr.f32.mxu0 0.0
    %2590 = vmatmul.mubr.f32.gmra.mxu0 %v2514
    %v2591 = vpop.f32.mrf.mxu0
    %v2592 = vadd.f32 0.0, %v2591
    %v2593 = vpop.f32.mrf.mxu0
    %2594 = vdwg.mxu0
    %v2595 = vmul.f32 %v2587, 0.35355338
    %v2596 = vmul.f32 %v2592, 0.35355338
    %v2597 = vadd.f32 %v2595, %v97
    %v2598 = vadd.f32 %v2596, %v98
    %v2599 = vsel %vm267, %v2597, -inf
    %2600 = vmax.xlane.f32.xlu0 %v2599
    %v2601 = vpop.xlane.xlu0 %2600
    %v2602 = vsel %vm267, %v2598, -inf
    %2603 = vmax.xlane.f32.xlu0 %v2602
    %v2604 = vpop.xlane.xlu0 %2603
    %v2605 = vsub.f32 %v2597, %v2601
    %v2606 = vsub.f32 %v2598, %v2604
    %v2607 = vmul.f32 %v2605, 1.442695
    %v2608 = vpow.pop %v2607
    %v2609 = vmul.f32 %v2606, 1.442695
    %v2610 = vpow.pop %v2609
    %v2611 = vsel %vm267, %v2608, 0.0
    %2612 = vadd.xlane.f32.xlu0 %v2611
    %v2613 = vpop.xlane.xlu0 %2612
    %v2614 = vsel %vm267, %v2610, 0.0
    %2615 = vadd.xlane.f32.xlu0 %v2614
    %v2616 = vpop.xlane.xlu0 %2615
    %v2617 = vrcp.pop %v2613
    %v2618 = vrcp.pop %v2616
    %v2619 = vmul.f32 %v2608, %v2617
    %v2620 = vmul.f32 %v2610, %v2618
    %2621 = vrot.lane.b32.xlu0 %v1636, 40
    %v2622 = vpop.permute.xlu0 %2621
    %2623 = vrot.lane.b32.xlu0 %v1639, 40
    %v2624 = vpop.permute.xlu0 %2623
    %v2628 = vsel %vm267, %v2619, 0
    %v2631 = vsel %vm267, %v2620, 0
    %2633 = vmatprep.subr.mxu0 0.0
    %2634 = vmatpush1.msra.mxu0 0.0
    %2635 = vmatprep.subr.mxu0 0.0
    %2636 = vmatpush1.msra.mxu0 0.0
    %2637 = vmatprep.subr.mxu0 0.0
    %2638 = vmatpush1.msra.mxu0 0.0
    %2639 = vmatprep.subr.mxu0 0.0
    %2640 = vmatpush1.msra.mxu0 0.0
    %2641 = vmatprep.subr.mxu0 0.0
    %2642 = vmatpush1.msra.mxu0 0.0
    %2643 = vmatprep.subr.mxu0 0.0
    %2644 = vmatpush1.msra.mxu0 0.0
    %2645 = vmatprep.subr.mxu0 0.0
    %2646 = vmatpush1.msra.mxu0 0.0
    %2647 = vmatprep.subr.mxu0 0.0
    %2648 = vmatpush1.msra.mxu0 0.0
    %2649 = vmatprep.subr.mxu0 0.0
    %2650 = vmatpush1.msra.mxu0 0.0
    %2651 = vmatprep.subr.mxu0 0.0
    %2652 = vmatpush1.msra.mxu0 0.0
    %2653 = vmatprep.subr.mxu0 0.0
    %2654 = vmatpush1.msra.mxu0 0.0
    %2655 = vmatprep.subr.mxu0 0.0
    %2656 = vmatpush1.msra.mxu0 0.0
    %2657 = vmatprep.subr.mxu0 0.0
    %2658 = vmatpush1.msra.mxu0 0.0
    %2659 = vmatprep.subr.mxu0 0.0
    %2660 = vmatpush1.msra.mxu0 0.0
    %2661 = vmatprep.subr.mxu0 0.0
    %2662 = vmatpush1.msra.mxu0 %v2624
    %2663 = vmatprep.subr.mxu0 0.0
    %2664 = vmatpush1.msra.mxu0 %v2622
    %2665 = vmatprep.subr.mxu0 0.0
    %2666 = vmatpush2.msra.mxu0 0.0
    %2667 = vmatprep.subr.mxu0 0.0
    %2668 = vmatpush2.msra.mxu0 0.0
    %2669 = vmatprep.subr.mxu0 0.0
    %2670 = vmatpush2.msra.mxu0 0.0
    %2671 = vmatprep.subr.mxu0 0.0
    %2672 = vmatpush2.msra.mxu0 0.0
    %2673 = vmatprep.subr.mxu0 0.0
    %2674 = vmatpush2.msra.mxu0 0.0
    %2675 = vmatprep.subr.mxu0 0.0
    %2676 = vmatpush2.msra.mxu0 0.0
    %2677 = vmatprep.subr.mxu0 0.0
    %2678 = vmatpush2.msra.mxu0 0.0
    %2679 = vmatprep.subr.mxu0 0.0
    %2680 = vmatpush2.msra.mxu0 0.0
    %2681 = vmatprep.subr.mxu0 0.0
    %2682 = vmatpush2.msra.mxu0 0.0
    %2683 = vmatprep.subr.mxu0 0.0
    %2684 = vmatpush2.msra.mxu0 0.0
    %2685 = vmatprep.subr.mxu0 0.0
    %2686 = vmatpush2.msra.mxu0 0.0
    %2687 = vmatprep.subr.mxu0 0.0
    %2688 = vmatpush2.msra.mxu0 0.0
    %2689 = vmatprep.subr.mxu0 0.0
    %2690 = vmatpush2.msra.mxu0 0.0
    %2691 = vmatprep.subr.mxu0 0.0
    %2692 = vmatpush2.msra.mxu0 0.0
    %2693 = vmatprep.subr.mxu0 0.0
    %2694 = vmatpush2.msra.mxu0 0.0
    %2695 = vmatprep.subr.mxu0 0.0
    %2696 = vmatpush2.msra.mxu0 0.0
    %2697 = vmatprep.mubr.f32.mxu0 0.0
    %2698 = vmatmul.mubr.f32.gmra.mxu0 %v2628
    %v2699 = vpop.f32.mrf.mxu0
    %v2700 = vadd.f32 0.0, %v2699
    %v2701 = vpop.f32.mrf.mxu0
    %2702 = vmatprep.mubr.f32.mxu0 0.0
    %2703 = vmatmul.mubr.f32.gmra.mxu0 %v2631
    %v2704 = vpop.f32.mrf.mxu0
    %v2705 = vadd.f32 0.0, %v2704
    %v2706 = vpop.f32.mrf.mxu0
    %2707 = vdwg.mxu0
    %v2709 = vsel %vm179, %v2700, 0
    %v2712 = vsel %vm179, %v2705, 0
    %2714 = vmatprep.subr.mxu0 0.0
    %2715 = vmatpush1.msra.mxu0 0.0
    %2716 = vmatprep.subr.mxu0 0.0
    %2717 = vmatpush1.msra.mxu0 0.0
    %2718 = vmatprep.subr.mxu0 0.0
    %2719 = vmatpush1.msra.mxu0 0.0
    %2720 = vmatprep.subr.mxu0 0.0
    %2721 = vmatpush1.msra.mxu0 0.0
    %2722 = vmatprep.subr.mxu0 0.0
    %2723 = vmatpush1.msra.mxu0 0.0
    %2724 = vmatprep.subr.mxu0 0.0
    %2725 = vmatpush1.msra.mxu0 0.0
    %2726 = vmatprep.subr.mxu0 0.0
    %2727 = vmatpush1.msra.mxu0 0.0
    %2728 = vmatprep.subr.mxu0 0.0
    %2729 = vmatpush1.msra.mxu0 0.0
    %2730 = vmatprep.subr.mxu0 0.0
    %2731 = vmatpush1.msra.mxu0 0.0
    %2732 = vmatprep.subr.mxu0 0.0
    %2733 = vmatpush1.msra.mxu0 0.0
    %2734 = vmatprep.subr.mxu0 0.0
    %2735 = vmatpush1.msra.mxu0 0.0
    %2736 = vmatprep.subr.mxu0 0.0
    %2737 = vmatpush1.msra.mxu0 0.0
    %2738 = vmatprep.subr.mxu0 0.0
    %2739 = vmatpush1.msra.mxu0 0.0
    %2740 = vmatprep.subr.mxu0 0.0
    %2741 = vmatpush1.msra.mxu0 0.0
    %2742 = vmatprep.subr.mxu0 0.0
    %2743 = vmatpush1.msra.mxu0 0.0
    %2744 = vmatprep.subr.mxu0 0.0
    %2745 = vmatpush1.msra.mxu0 %v1646
    %2746 = vmatprep.subr.mxu0 0.0
    %2747 = vmatpush2.msra.mxu0 0.0
    %2748 = vmatprep.subr.mxu0 0.0
    %2749 = vmatpush2.msra.mxu0 0.0
    %2750 = vmatprep.subr.mxu0 0.0
    %2751 = vmatpush2.msra.mxu0 0.0
    %2752 = vmatprep.subr.mxu0 0.0
    %2753 = vmatpush2.msra.mxu0 0.0
    %2754 = vmatprep.subr.mxu0 0.0
    %2755 = vmatpush2.msra.mxu0 0.0
    %2756 = vmatprep.subr.mxu0 0.0
    %2757 = vmatpush2.msra.mxu0 0.0
    %2758 = vmatprep.subr.mxu0 0.0
    %2759 = vmatpush2.msra.mxu0 0.0
    %2760 = vmatprep.subr.mxu0 0.0
    %2761 = vmatpush2.msra.mxu0 0.0
    %2762 = vmatprep.subr.mxu0 0.0
    %2763 = vmatpush2.msra.mxu0 0.0
    %2764 = vmatprep.subr.mxu0 0.0
    %2765 = vmatpush2.msra.mxu0 0.0
    %2766 = vmatprep.subr.mxu0 0.0
    %2767 = vmatpush2.msra.mxu0 0.0
    %2768 = vmatprep.subr.mxu0 0.0
    %2769 = vmatpush2.msra.mxu0 0.0
    %2770 = vmatprep.subr.mxu0 0.0
    %2771 = vmatpush2.msra.mxu0 0.0
    %2772 = vmatprep.subr.mxu0 0.0
    %2773 = vmatpush2.msra.mxu0 0.0
    %2774 = vmatprep.subr.mxu0 0.0
    %2775 = vmatpush2.msra.mxu0 0.0
    %2776 = vmatprep.subr.mxu0 0.0
    %2777 = vmatpush2.msra.mxu0 0.0
    %2778 = vmatprep.mubr.f32.mxu0 0.0
    %2779 = vmatmul.mubr.f32.gmra.mxu0 %v2709
    %v2780 = vpop.f32.mrf.mxu0
    %v2781 = vadd.f32 0.0, %v2780
    %v2782 = vpop.f32.mrf.mxu0
    %2783 = vmatprep.mubr.f32.mxu0 0.0
    %2784 = vmatmul.mubr.f32.gmra.mxu0 %v2712
    %v2785 = vpop.f32.mrf.mxu0
    %v2786 = vadd.f32 0.0, %v2785
    %v2787 = vpop.f32.mrf.mxu0
    %2788 = vdwg.mxu0
    %v2789 = vadd.f32 %v2502, %v2781
    %v2790 = vadd.f32 %v2503, %v2786
    %v2791 = vlaneseq
    %v2792 = vshrl.u32 %v2791, 7
    %v2793 = vsub.s32 0, %v2792
    %v2794 = vrot.slane %v1648, %v2793
    %v2795 = vadd.f32 %v2789, %v2794
    %v2796 = vadd.f32 %v2790, %v2794
    %v2797 = vadd.f32 %v1570, %v2795
    %v2798 = vadd.f32 %v1571, %v2796
    %v2799 = vsel %vm123, %v2797, 0.0
    %2800 = vadd.xlane.f32.xlu0 %v2799
    %v2801 = vpop.xlane.xlu0 %2800
    %v2802 = vsel %vm123, %v2798, 0.0
    %2803 = vadd.xlane.f32.xlu0 %v2802
    %v2804 = vpop.xlane.xlu0 %2803
    %v2805 = vmul.f32 %v2801, %v1331
    %v2806 = vmul.f32 %v2804, %v1331
    %v2807 = vsub.f32 %v2797, %v2805
    %v2808 = vsub.f32 %v2798, %v2806
    %v2809 = vmul.f32 %v2807, %v2807
    %v2810 = vmul.f32 %v2808, %v2808
    %v2811 = vsel %vm123, %v2809, 0.0
    %2812 = vadd.xlane.f32.xlu0 %v2811
    %v2813 = vpop.xlane.xlu0 %2812
    %v2814 = vsel %vm123, %v2810, 0.0
    %2815 = vadd.xlane.f32.xlu0 %v2814
    %v2816 = vpop.xlane.xlu0 %2815
    %v2817 = vmul.f32 %v2813, %v1331
    %v2818 = vmul.f32 %v2816, %v1331
    %v2819 = vadd.f32 %v2817, 1e-05
    %v2820 = vadd.f32 %v2818, 1e-05
    %v2821 = vrsqrt.pop %v2819
    %v2822 = vrsqrt.pop %v2820
    %v2823 = vmul.f32 %v2807, %v2821
    %v2824 = vmul.f32 %v2808, %v2822
    %v2825 = vlaneseq
    %v2826 = vshrl.u32 %v2825, 7
    %v2827 = vsub.s32 1, %v2826
    %v2828 = vrot.slane %v1648, %v2827
    %v2829 = vmul.f32 %v2823, %v2828
    %v2830 = vmul.f32 %v2824, %v2828
    %v2831 = vlaneseq
    %v2832 = vshrl.u32 %v2831, 7
    %v2833 = vsub.s32 2, %v2832
    %v2834 = vrot.slane %v1648, %v2833
    %v2835 = vadd.f32 %v2829, %v2834
    %v2836 = vadd.f32 %v2830, %v2834
    %v2837 = vpack.c.bf16 %v2836, %v2835
    %s2838 = scalar_lea.vmem [#allocation7], 16
    %v2839 = vld [vmem:[%s2838] sm:$0xf]
    %v2840 = vld [vmem:[%s2838 + $0x4] sm:$0xf]
    %v2841 = vld [vmem:[%s2838 + $0x8] sm:$0xf]
    %v2842 = vld [vmem:[%s2838 + $0xc] sm:$0xf]
    %s2843 = scalar_lea.vmem %s6, 1
    %v2844 = vld [vmem:[%s2843] sm:$0x1]
    %v2846 = vlaneseq
    %v2847 = vshrl.u32 %v2846, 7
    %v2848 = vsub.s32 0, %v2847
    %v2849 = vrot.slane %v2844, %v2848
    %v2855 = vunpack.c.l.b16 %v2839
    %v2856 = vunpack.c.l.b16 %v2840
    %v2857 = vunpack.c.l.b16 %v2841
    %v2858 = vunpack.c.l.b16 %v2842
    %v2859 = vpack.c.b16 %v2856, %v2855
    %v2860 = vpack.c.b16 %v2858, %v2857
    %v2864 = vsel %vm123, %v2837, 0
    %2866 = vmatprep.subr.bf16.mxu0 0
    %2867 = vmatpush1.bf16.msra.mxu0 0
    %2868 = vmatprep.subr.bf16.mxu0 0
    %2869 = vmatpush1.bf16.msra.mxu0 0
    %2870 = vmatprep.subr.bf16.mxu0 0
    %2871 = vmatpush1.bf16.msra.mxu0 0
    %2872 = vmatprep.subr.bf16.mxu0 0
    %2873 = vmatpush1.bf16.msra.mxu0 0
    %2874 = vmatprep.subr.bf16.mxu0 0
    %2875 = vmatpush1.bf16.msra.mxu0 0
    %2876 = vmatprep.subr.bf16.mxu0 0
    %2877 = vmatpush1.bf16.msra.mxu0 0
    %2878 = vmatprep.subr.bf16.mxu0 0
    %2879 = vmatpush1.bf16.msra.mxu0 %v2860
    %2880 = vmatprep.subr.bf16.mxu0 0
    %2881 = vmatpush1.bf16.msra.mxu0 %v2859
    %2882 = vmatprep.subr.bf16.mxu0 0
    %2883 = vmatpush2.bf16.msra.mxu0 0
    %2884 = vmatprep.subr.bf16.mxu0 0
    %2885 = vmatpush2.bf16.msra.mxu0 0
    %2886 = vmatprep.subr.bf16.mxu0 0
    %2887 = vmatpush2.bf16.msra.mxu0 0
    %2888 = vmatprep.subr.bf16.mxu0 0
    %2889 = vmatpush2.bf16.msra.mxu0 0
    %2890 = vmatprep.subr.bf16.mxu0 0
    %2891 = vmatpush2.bf16.msra.mxu0 0
    %2892 = vmatprep.subr.bf16.mxu0 0
    %2893 = vmatpush2.bf16.msra.mxu0 0
    %2894 = vmatprep.subr.bf16.mxu0 0
    %2895 = vmatpush2.bf16.msra.mxu0 0
    %2896 = vmatprep.subr.bf16.mxu0 0
    %2897 = vmatpush2.bf16.msra.mxu0 0
    %2898 = vmatprep.mubr.bf16.mxu0 0
    %2899 = vmatmul.mubr.bf16.gmra.mxu0 %v2864
    %v2900 = vpop.f32.mrf.mxu0
    %v2901 = vadd.f32 %v2849, %v2900
    %v2902 = vpop.f32.mrf.mxu0
    %v2903 = vpop.f32.mrf.mxu0
    %v2904 = vadd.f32 %v2849, %v2903
    %v2905 = vpop.f32.mrf.mxu0
    %2906 = vdwg.mxu0
    %v2907 = vmul.f32 %v2901, %v2901
    %v2908 = vmul.f32 %v2904, %v2904
    %v2909 = vmul.f32 %v2901, %v2907
    %v2910 = vmul.f32 %v2904, %v2908
    %v2911 = vmul.f32 %v2909, 0.044715
    %v2912 = vmul.f32 %v2910, 0.044715
    %v2913 = vadd.f32 %v2901, %v2911
    %v2914 = vadd.f32 %v2904, %v2912
    %v2915 = vmul.f32 %v2913, 0.7978846
    %v2916 = vmul.f32 %v2914, 0.7978846
    %v2917 = vtanh.pop %v2915
    %v2918 = vtanh.pop %v2916
    %v2919 = vadd.f32 %v2917, 1.0
    %v2920 = vadd.f32 %v2918, 1.0
    %v2921 = vmul.f32 %v2919, 0.5
    %v2922 = vmul.f32 %v2920, 0.5
    %v2923 = vmul.f32 %v2901, %v2921
    %v2924 = vmul.f32 %v2904, %v2922
    %v2925 = vpack.c.bf16 %v2924, %v2923
    %s2926 = scalar_lea.vmem %s8, 32
    %v2927 = vld [vmem:[%s2926] sm:$0xf]
    %v2928 = vld [vmem:[%s2926 + $0x4] sm:$0xf]
    %v2929 = vld [vmem:[%s2926 + $0x8] sm:$0xf]
    %v2930 = vld [vmem:[%s2926 + $0xc] sm:$0xf]
    %v2931 = vld [vmem:[%s2926 + $0x10] sm:$0xf]
    %v2932 = vld [vmem:[%s2926 + $0x14] sm:$0xf]
    %v2933 = vld [vmem:[%s2926 + $0x18] sm:$0xf]
    %v2934 = vld [vmem:[%s2926 + $0x1c] sm:$0xf]
    %v2935 = vlaneseq
    %v2936 = vshrl.u32 %v2935, 7
    %v2937 = vsub.s32 3, %v2936
    %v2938 = vrot.slane %v1648, %v2937
    %v2947 = vunpack.c.l.b16 %v2927
    %v2948 = vunpack.c.l.b16 %v2928
    %v2949 = vunpack.c.l.b16 %v2929
    %v2950 = vunpack.c.l.b16 %v2930
    %v2951 = vunpack.c.l.b16 %v2931
    %v2952 = vunpack.c.l.b16 %v2932
    %v2953 = vunpack.c.l.b16 %v2933
    %v2954 = vunpack.c.l.b16 %v2934
    %v2955 = vpack.c.b16 %v2948, %v2947
    %v2956 = vpack.c.b16 %v2950, %v2949
    %v2957 = vpack.c.b16 %v2952, %v2951
    %v2958 = vpack.c.b16 %v2954, %v2953
    %v2964 = vsel %vm1487, %v2925, 0
    %2966 = vmatprep.subr.bf16.mxu0 0
    %2967 = vmatpush1.bf16.msra.mxu0 0
    %2968 = vmatprep.subr.bf16.mxu0 0
    %2969 = vmatpush1.bf16.msra.mxu0 0
    %2970 = vmatprep.subr.bf16.mxu0 0
    %2971 = vmatpush1.bf16.msra.mxu0 0
    %2972 = vmatprep.subr.bf16.mxu0 0
    %2973 = vmatpush1.bf16.msra.mxu0 0
    %2974 = vmatprep.subr.bf16.mxu0 0
    %2975 = vmatpush1.bf16.msra.mxu0 %v2958
    %2976 = vmatprep.subr.bf16.mxu0 0
    %2977 = vmatpush1.bf16.msra.mxu0 %v2957
    %2978 = vmatprep.subr.bf16.mxu0 0
    %2979 = vmatpush1.bf16.msra.mxu0 %v2956
    %2980 = vmatprep.subr.bf16.mxu0 0
    %2981 = vmatpush1.bf16.msra.mxu0 %v2955
    %2982 = vmatprep.subr.bf16.mxu0 0
    %2983 = vmatpush2.bf16.msra.mxu0 0
    %2984 = vmatprep.subr.bf16.mxu0 0
    %2985 = vmatpush2.bf16.msra.mxu0 0
    %2986 = vmatprep.subr.bf16.mxu0 0
    %2987 = vmatpush2.bf16.msra.mxu0 0
    %2988 = vmatprep.subr.bf16.mxu0 0
    %2989 = vmatpush2.bf16.msra.mxu0 0
    %2990 = vmatprep.subr.bf16.mxu0 0
    %2991 = vmatpush2.bf16.msra.mxu0 0
    %2992 = vmatprep.subr.bf16.mxu0 0
    %2993 = vmatpush2.bf16.msra.mxu0 0
    %2994 = vmatprep.subr.bf16.mxu0 0
    %2995 = vmatpush2.bf16.msra.mxu0 0
    %2996 = vmatprep.subr.bf16.mxu0 0
    %2997 = vmatpush2.bf16.msra.mxu0 0
    %2998 = vmatprep.mubr.bf16.mxu0 0
    %2999 = vmatmul.mubr.bf16.gmra.mxu0 %v2964
    %v3000 = vpop.f32.mrf.mxu0
    %v3001 = vadd.f32 %v2938, %v3000
    %v3002 = vpop.f32.mrf.mxu0
    %v3003 = vpop.f32.mrf.mxu0
    %v3004 = vadd.f32 %v2938, %v3003
    %v3005 = vpop.f32.mrf.mxu0
    %3006 = vdwg.mxu0
    %v3007 = vadd.f32 %v2835, %v3001
    %v3008 = vadd.f32 %v2836, %v3004
    %v3009 = vsel %vm123, %v3007, 0.0
    %3010 = vadd.xlane.f32.xlu0 %v3009
    %v3011 = vpop.xlane.xlu0 %3010
    %v3012 = vsel %vm123, %v3008, 0.0
    %3013 = vadd.xlane.f32.xlu0 %v3012
    %v3014 = vpop.xlane.xlu0 %3013
    %v3015 = vmul.f32 %v3011, %v1331
    %v3016 = vmul.f32 %v3014, %v1331
    %v3017 = vsub.f32 %v3007, %v3015
    %v3018 = vsub.f32 %v3008, %v3016
    %v3019 = vmul.f32 %v3017, %v3017
    %v3020 = vmul.f32 %v3018, %v3018
    %v3021 = vsel %vm123, %v3019, 0.0
    %3022 = vadd.xlane.f32.xlu0 %v3021
    %v3023 = vpop.xlane.xlu0 %3022
    %v3024 = vsel %vm123, %v3020, 0.0
    %3025 = vadd.xlane.f32.xlu0 %v3024
    %v3026 = vpop.xlane.xlu0 %3025
    %v3027 = vmul.f32 %v3023, %v1331
    %v3028 = vmul.f32 %v3026, %v1331
    %v3029 = vadd.f32 %v3027, 1e-05
    %v3030 = vadd.f32 %v3028, 1e-05
    %v3031 = vrsqrt.pop %v3029
    %v3032 = vrsqrt.pop %v3030
    %v3033 = vmul.f32 %v3017, %v3031
    %v3034 = vmul.f32 %v3018, %v3032
    %v3035 = vlaneseq
    %v3036 = vshrl.u32 %v3035, 7
    %v3037 = vsub.s32 4, %v3036
    %v3038 = vrot.slane %v1648, %v3037
    %v3039 = vmul.f32 %v3033, %v3038
    %v3040 = vmul.f32 %v3034, %v3038
    %v3041 = vlaneseq
    %v3042 = vshrl.u32 %v3041, 7
    %v3043 = vsub.s32 5, %v3042
    %v3044 = vrot.slane %v1648, %v3043
    %v3045 = vadd.f32 %v3039, %v3044
    %v3046 = vadd.f32 %v3040, %v3044
    %v3047 = vld [vmem:[%s10] sm:$0x7]
    %v3048 = vpack.c.bf16 %v3046, %v3045
    %v3049 = vld [vmem:[#allocation8] sm:$0xf]
    %v3050 = vld [vmem:[#allocation8 + $0x4] sm:$0xf]
    %v3051 = vld [vmem:[#allocation8 + $0x8] sm:$0xf]
    %v3052 = vld [vmem:[#allocation8 + $0xc] sm:$0xf]
    %v3053 = vlaneseq
    %v3054 = vshrl.u32 %v3053, 7
    %v3055 = vsub.s32 0, %v3054
    %v3056 = vrot.slane %v3047, %v3055
    %v3061 = vunpack.c.l.b16 %v3049
    %v3062 = vunpack.c.l.b16 %v3050
    %v3063 = vunpack.c.l.b16 %v3051
    %v3064 = vunpack.c.l.b16 %v3052
    %v3065 = vpack.c.b16 %v3062, %v3061
    %v3066 = vpack.c.b16 %v3064, %v3063
    %v3070 = vsel %vm123, %v3048, 0
    %3072 = vmatprep.subr.bf16.mxu0 0
    %3073 = vmatpush1.bf16.msra.mxu0 0
    %3074 = vmatprep.subr.bf16.mxu0 0
    %3075 = vmatpush1.bf16.msra.mxu0 0
    %3076 = vmatprep.subr.bf16.mxu0 0
    %3077 = vmatpush1.bf16.msra.mxu0 0
    %3078 = vmatprep.subr.bf16.mxu0 0
    %3079 = vmatpush1.bf16.msra.mxu0 0
    %3080 = vmatprep.subr.bf16.mxu0 0
    %3081 = vmatpush1.bf16.msra.mxu0 0
    %3082 = vmatprep.subr.bf16.mxu0 0
    %3083 = vmatpush1.bf16.msra.mxu0 0
    %3084 = vmatprep.subr.bf16.mxu0 0
    %3085 = vmatpush1.bf16.msra.mxu0 %v3066
    %3086 = vmatprep.subr.bf16.mxu0 0
    %3087 = vmatpush1.bf16.msra.mxu0 %v3065
    %3088 = vmatprep.subr.bf16.mxu0 0
    %3089 = vmatpush2.bf16.msra.mxu0 0
    %3090 = vmatprep.subr.bf16.mxu0 0
    %3091 = vmatpush2.bf16.msra.mxu0 0
    %3092 = vmatprep.subr.bf16.mxu0 0
    %3093 = vmatpush2.bf16.msra.mxu0 0
    %3094 = vmatprep.subr.bf16.mxu0 0
    %3095 = vmatpush2.bf16.msra.mxu0 0
    %3096 = vmatprep.subr.bf16.mxu0 0
    %3097 = vmatpush2.bf16.msra.mxu0 0
    %3098 = vmatprep.subr.bf16.mxu0 0
    %3099 = vmatpush2.bf16.msra.mxu0 0
    %3100 = vmatprep.subr.bf16.mxu0 0
    %3101 = vmatpush2.bf16.msra.mxu0 0
    %3102 = vmatprep.subr.bf16.mxu0 0
    %3103 = vmatpush2.bf16.msra.mxu0 0
    %3104 = vmatprep.mubr.bf16.mxu0 0
    %3105 = vmatmul.mubr.bf16.gmra.mxu0 %v3070
    %v3106 = vpop.f32.mrf.mxu0
    %v3107 = vadd.f32 %v3056, %v3106
    %v3108 = vpop.f32.mrf.mxu0
    %v3109 = vpop.f32.mrf.mxu0
    %v3110 = vadd.f32 %v3056, %v3109
    %v3111 = vpop.f32.mrf.mxu0
    %3112 = vdwg.mxu0
    %v3113 = vmul.f32 %v3107, %v3107
    %v3114 = vmul.f32 %v3110, %v3110
    %v3115 = vmul.f32 %v3107, %v3113
    %v3116 = vmul.f32 %v3110, %v3114
    %v3117 = vmul.f32 %v3115, 0.044715
    %v3118 = vmul.f32 %v3116, 0.044715
    %v3119 = vadd.f32 %v3107, %v3117
    %v3120 = vadd.f32 %v3110, %v3118
    %v3121 = vmul.f32 %v3119, 0.7978846
    %v3122 = vmul.f32 %v3120, 0.7978846
    %v3123 = vtanh.pop %v3121
    %v3124 = vtanh.pop %v3122
    %v3125 = vadd.f32 %v3123, 1.0
    %v3126 = vadd.f32 %v3124, 1.0
    %v3127 = vmul.f32 %v3125, 0.5
    %v3128 = vmul.f32 %v3126, 0.5
    %v3129 = vmul.f32 %v3107, %v3127
    %v3130 = vmul.f32 %v3110, %v3128
    %v3131 = vsel %vm123, %v3129, 0.0
    %3132 = vadd.xlane.f32.xlu0 %v3131
    %v3133 = vpop.xlane.xlu0 %3132
    %v3134 = vsel %vm123, %v3130, 0.0
    %3135 = vadd.xlane.f32.xlu0 %v3134
    %v3136 = vpop.xlane.xlu0 %3135
    %v3137 = vmul.f32 %v3133, %v1331
    %v3138 = vmul.f32 %v3136, %v1331
    %v3139 = vsub.f32 %v3129, %v3137
    %v3140 = vsub.f32 %v3130, %v3138
    %v3141 = vmul.f32 %v3139, %v3139
    %v3142 = vmul.f32 %v3140, %v3140
    %v3143 = vsel %vm123, %v3141, 0.0
    %3144 = vadd.xlane.f32.xlu0 %v3143
    %v3145 = vpop.xlane.xlu0 %3144
    %v3146 = vsel %vm123, %v3142, 0.0
    %3147 = vadd.xlane.f32.xlu0 %v3146
    %v3148 = vpop.xlane.xlu0 %3147
    %v3149 = vmul.f32 %v3145, %v1331
    %v3150 = vmul.f32 %v3148, %v1331
    %v3151 = vadd.f32 %v3149, 1e-05
    %v3152 = vadd.f32 %v3150, 1e-05
    %v3153 = vrsqrt.pop %v3151
    %v3154 = vrsqrt.pop %v3152
    %v3155 = vmul.f32 %v3139, %v3153
    %v3156 = vmul.f32 %v3140, %v3154
    %v3157 = vlaneseq
    %v3158 = vshrl.u32 %v3157, 7
    %v3159 = vsub.s32 1, %v3158
    %v3160 = vrot.slane %v3047, %v3159
    %v3161 = vmul.f32 %v3155, %v3160
    %v3162 = vmul.f32 %v3156, %v3160
    %v3163 = vlaneseq
    %v3164 = vshrl.u32 %v3163, 7
    %v3165 = vsub.s32 2, %v3164
    %v3166 = vrot.slane %v3047, %v3165
    %v3167 = vadd.f32 %v3161, %v3166
    %v3168 = vadd.f32 %v3162, %v3166
    %3169 = vst.msk [vmem:[#allocation10] sm:$0xff] %vm123, %v3167
    %3170 = vst.msk [vmem:[#allocation10 + $0x8] sm:$0xff] %vm123, %v3168
    // Predicated region
    $region62: #{tpu_custom_call.1} parent=1 // pred_check
      _
    $region63: #{tpu_custom_call.1} parent=1 // pred_check_branch
      %3172 = sbr.rel (0) target = $region65
    $region64: #{tpu_custom_call.1} parent=1 // pred_region
      %s3174 = ssub.s32 256, 256
      %3175 = vsyncadd [#allocation4], %s3174
      %s3176 = sshll.u32 [#allocation10], 4
      %s3177 = int_to_ptr.vmem [resolvable:$true] %s3176
      %3182 = dma.vmem_to_hbm [thread:$0]  %s3177, 256, %s11, [#allocation4], 128, 128, 8
    $region65: #{tpu_custom_call.1} parent=1 // pred_fallthru
      _
    // Predicated region
    $region66: #{tpu_custom_call.1} parent=1 // pred_check
      _
    $region67: #{tpu_custom_call.1} parent=1 // pred_check_branch
      %3184 = sbr.rel (0) target = $region69
    $region68: #{tpu_custom_call.1} parent=1 // pred_region
      %3185 = dma.done [#allocation4], 256
    $region69: #{tpu_custom_call.1} parent=1 // pred_fallthru
      _
    %3186 = vsyncpa [#allocation3], 1
    %3187 = vsyncpa [#allocation6], 1
    %3188 = vsyncpa [#allocation9], 1
    %3189 = vsyncpa [#allocation4], 1

</llo_original>
